<compile_context>
chip_gen: v7x
topology: tpu7x:2x2x1
jax: 0.10.0
libtpu: 0.0.40
codegen_flags: <defaults>
</compile_context>

<pallas_src>
import functools

import jax
import jax.numpy as jnp
import numpy as np
from jax import lax
from jax.experimental import pallas as pl
from jax.experimental.pallas import tpu as pltpu


def _round_up(x, m):
    return (x + m - 1) // m * m


def _pad_gate_blocks(w, h, hp):
    """(..., 4*h) with gate blocks [i|f|g|o] of width h -> (..., 4*hp).

    Each gate block is zero-padded to width hp so gate g occupies lanes
    [g*hp, g*hp + h) and the in-kernel gate slices stay lane-aligned.
    """
    if hp == h:
        return w
    parts = jnp.split(w, 4, axis=-1)
    pad = [(0, 0)] * (w.ndim - 1) + [(0, hp - h)]
    return jnp.concatenate([jnp.pad(p, pad) for p in parts], axis=-1)


def _sigmoid_approx(x):
    # exp + EUP approximate reciprocal: keeps the divide off the VPU.
    return pl.reciprocal(1.0 + jnp.exp(-x), approx=True)


def _sigmoid_exact(x):
    # Exact divide -- used only for the once-per-block final probabilities.
    return 1.0 / (1.0 + jnp.exp(-x))


def _lstm_kernel(x_ref, wx_ref, wh_ref, b_ref, wfc_ref, bfc_ref,
                 out_ref, h_scr, c_scr, xg_scr, *,
                 hidden_dim, chunk, seq_len, unroll):
    """One grid step = `chunk` LSTM timesteps for one batch block."""
    tt = pl.program_id(1)
    n_t = pl.num_programs(1)
    hp = hidden_dim
    tc = chunk
    bsz = h_scr.shape[0]          # batch rows in this block
    ep = x_ref.shape[-1]          # padded embedding dim

    @pl.when(tt == 0)
    def _():
        h_scr[...] = jnp.zeros_like(h_scr)
        c_scr[...] = jnp.zeros_like(c_scr)

    # Hoisted (non-recurrent) input projection for the whole chunk:
    #   (tc*bsz, ep) @ (ep, 4*hp)  -- a single MXU call per chunk.
    # x arrives in bf16 (halves the streaming DMA); the (tc,bsz,ep)->(tc*bsz,ep)
    # collapse is layout-trivial because bsz is a multiple of 16.
    x_all = x_ref[...].reshape(tc * bsz, ep)
    xg_scr[...] = (
        jnp.dot(x_all, wx_ref[...], preferred_element_type=jnp.float32)
        + b_ref[...])

    wh = wh_ref[...]              # bf16 (hp, 4*hp), loaded once per chunk
    t0 = tt * tc                  # global timestep of the first step in chunk

    def step(i, carry):
        h, c = carry              # f32 (bsz, hp)
        row = pl.multiple_of(i * bsz, bsz)
        gates = (xg_scr[pl.ds(row, bsz), :]
                 + jnp.dot(h.astype(wh.dtype), wh,
                           preferred_element_type=jnp.float32))
        # Lane-aligned static gate slices (hp is a multiple of 128).  Each gate
        # is folded into c/h as soon as it is activated to bound live vregs.
        i_g = _sigmoid_approx(gates[:, 0 * hp:1 * hp])
        g_g = jnp.tanh(gates[:, 2 * hp:3 * hp])
        c_new = _sigmoid_approx(gates[:, 1 * hp:2 * hp]) * c + i_g * g_g
        h_new = _sigmoid_approx(gates[:, 3 * hp:4 * hp]) * jnp.tanh(c_new)
        # Tail mask: timesteps past the true sequence length keep h/c unchanged
        # (T need not be a multiple of the chunk size).
        valid = (t0 + i) < seq_len
        h = jnp.where(valid, h_new, h)
        c = jnp.where(valid, c_new, c)
        return h, c

    h, c = lax.fori_loop(0, tc, step, (h_scr[...], c_scr[...]), unroll=unroll)
    h_scr[...] = h
    c_scr[...] = c

    @pl.when(tt == n_t - 1)
    def _():
        logits = (jnp.dot(h.astype(wfc_ref.dtype), wfc_ref[...],
                          preferred_element_type=jnp.float32)
                  + bfc_ref[...])
        out_ref[...] = _sigmoid_exact(logits)


def _detect_tpu():
    """Best-effort (generation, physical-VMEM) detection with safe fallbacks."""
    kind = ""
    try:
        kind = jax.devices()[0].device_kind.lower()
    except Exception:
        pass
    is_v7 = "v7" in kind
    vmem = None
    try:
        vmem = int(pltpu.get_tpu_info().vmem_capacity_bytes)
    except Exception:
        pass
    if not vmem or vmem <= 0:
        vmem = (64 << 20) if is_v7 else (128 << 20)
    return is_v7, vmem


def _const_weight_spec(shape, single_buffer):
    """Loop-invariant block (constant index map).  Single-buffered when the
    installed JAX supports pipeline_mode=pl.Buffered(1)."""
    idx = lambda bb, tt: (0,) * len(shape)
    if single_buffer:
        try:
            return pl.BlockSpec(shape, idx, pipeline_mode=pl.Buffered(1))
        except Exception:
            pass
    return pl.BlockSpec(shape, idx)


def candle_lstm_forward(tokens, params):
    """tokens: int32 (B, T).  Returns float32 (B, output_dim)."""
    emb = params["embedding"]            # (V, E)
    w_ih = params["w_ih"]                # (E, 4H)  (pre-transposed), gates i,f,g,o
    w_hh = params["w_hh"]                # (H, 4H)
    b = params["b"]                      # (1, 4H)  = b_ih + b_hh
    w_fc = params["w_fc"]                # (H, O)
    b_fc = params["b_fc"]                # (1, O)

    B, T = tokens.shape
    E = emb.shape[1]
    H = w_hh.shape[0]
    O = w_fc.shape[1]

    is_v7, phys_vmem = _detect_tpu()

    # TPU-friendly padded sizes.  Batch -> multiple of 16 so the bf16 x chunk
    # collapses without relayout; E/H/O -> lane multiples (128) so gate slices
    # are aligned and the output store is lane-dense.
    Bp = _round_up(B, 16)
    Ep = _round_up(E, 128)
    Hp = _round_up(H, 128)
    Op = _round_up(O, 128)
    G = 4 * Hp

    f32, bf16 = jnp.float32, jnp.bfloat16
    emb_p = jnp.pad(emb, ((0, 0), (0, Ep - E))).astype(f32)
    wx_p = jnp.pad(_pad_gate_blocks(w_ih, H, Hp), ((0, Ep - E), (0, 0))).astype(bf16)
    wh_p = jnp.pad(_pad_gate_blocks(w_hh, H, Hp), ((0, Hp - H), (0, 0))).astype(bf16)
    b_p = _pad_gate_blocks(b, H, Hp).astype(f32)
    wfc_p = jnp.pad(w_fc, ((0, Hp - H), (0, Op - O))).astype(bf16)
    bfc_p = jnp.pad(b_fc, ((0, 0), (0, Op - O))).astype(f32)

    # Batch split only on megacore parts (v7x, 2 TC/chip).  On 1-TC v5e/v6e a
    # split just doubles serial grid steps and halves MXU row occupancy.
    B_blk = Bp // 2 if (is_v7 and Bp % 32 == 0) else Bp
    n_b = Bp // B_blk

    # Generation-aware VMEM ceiling: leave headroom on v7x (64 MiB physical),
    # go well above the scoped default on v5e/v6e (128 MiB physical).
    vmem_cap = (48 << 20) if is_v7 else (100 << 20)
    vmem_cap = min(vmem_cap, max(phys_vmem - (16 << 20), 32 << 20))

    w_bytes_1 = (Ep + Hp) * G * 2 + Hp * Op * 2 + (G + Op) * 4  # 1-buffered weights

    def footprint(tc, w_mult=1):
        x_bytes = 2 * tc * B_blk * Ep * 2        # bf16 x stream, double-buffered
        o_bytes = 2 * B_blk * Op * 4
        scr = (2 * B_blk * Hp + tc * B_blk * G) * 4
        return w_mult * w_bytes_1 + x_bytes + o_bytes + scr + (4 << 20)

    # Timesteps per grid iteration.  Decoupled from T divisibility (tail chunk
    # is masked in-kernel); largest candidate that fits the VMEM ceiling wins.
    t_cap = max(8, _round_up(T, 8))
    Tc = 1
    for cand in (32, 16, 8, 4, 2, 1):
        if cand <= t_cap and footprint(cand) <= vmem_cap:
            Tc = cand
            break
    n_t = pl.cdiv(T, Tc)
    Tp = n_t * Tc

    # Time-major embedding gather (transpose the small int32 token matrix, not
    # the activations); stream x in bf16.  Zero-pad the time axis to Tp.
    # TODO(synk): fuse the gather into the kernel (scalar-prefetch token ids)
    # to avoid materializing x_emb in HBM for long T / large E.
    tok_p = jnp.pad(tokens, ((0, Bp - B), (0, 0)))
    x_emb = jnp.take(emb_p, tok_p.T, axis=0).astype(bf16)        # (T, Bp, Ep)
    x_emb = jnp.pad(x_emb, ((0, Tp - T), (0, 0), (0, 0)))

    # Full unroll keeps the LLO scheduler happy at small H; at large H limit
    # unroll so the live gate set does not spill the 64-vreg file.
    unroll = True if Hp <= 256 else 2

    kernel = functools.partial(_lstm_kernel, hidden_dim=Hp, chunk=Tc,
                               seq_len=T, unroll=unroll)

    def _run(single_buffer):
        w_mult = 1 if single_buffer else 2
        vmem_limit = int(min(max(footprint(Tc, w_mult), 32 << 20), vmem_cap))
        return pl.pallas_call(
            kernel,
            out_shape=jax.ShapeDtypeStruct((Bp, Op), jnp.float32),
            grid_spec=pltpu.PrefetchScalarGridSpec(
                num_scalar_prefetch=0,
                grid=(n_b, n_t),
                in_specs=[
                    pl.BlockSpec((Tc, B_blk, Ep),
                                 lambda bb, tt: (tt, bb, 0)),          # x chunk (bf16)
                    _const_weight_spec((Ep, G), single_buffer),        # W_ih (bf16)
                    _const_weight_spec((Hp, G), single_buffer),        # W_hh (bf16)
                    _const_weight_spec((1, G), single_buffer),         # bias (f32)
                    _const_weight_spec((Hp, Op), single_buffer),       # W_fc (bf16)
                    _const_weight_spec((1, Op), single_buffer),        # b_fc (f32)
                ],
                out_specs=pl.BlockSpec((B_blk, Op), lambda bb, tt: (bb, 0)),
                scratch_shapes=[
                    pltpu.VMEM((B_blk, Hp), jnp.float32),       # h state
                    pltpu.VMEM((B_blk, Hp), jnp.float32),       # c state
                    pltpu.VMEM((Tc * B_blk, G), jnp.float32),   # hoisted x-projection
                ],
            ),
            compiler_params=pltpu.CompilerParams(
                dimension_semantics=("parallel", "arbitrary"),
                vmem_limit_bytes=vmem_limit),
        )(x_emb, wx_p, wh_p, b_p, wfc_p, bfc_p)

    try:
        out = _run(single_buffer=True)
    except Exception:
        # Fallback for environments where pipeline_mode=Buffered(1) is not
        # supported by the installed Pallas: default double-buffered weights.
        out = _run(single_buffer=False)

    return out[:B, :O]


def init_params(key, vocab_size, embedding_dim, hidden_dim, output_dim):
    ks = jax.random.split(key, 7)
    s = 0.1
    return {
        "embedding": jax.random.normal(ks[0], (vocab_size, embedding_dim),
                                       jnp.float32) * s,
        # Stored pre-transposed: (E, 4H) / (H, 4H), gate order i,f,g,o.
        "w_ih": jax.random.normal(ks[1], (embedding_dim, 4 * hidden_dim),
                                  jnp.float32) * s,
        "w_hh": jax.random.normal(ks[2], (hidden_dim, 4 * hidden_dim),
                                  jnp.float32) * s,
        "b": (jax.random.normal(ks[3], (1, 4 * hidden_dim), jnp.float32) * s
              + jax.random.normal(ks[4], (1, 4 * hidden_dim), jnp.float32) * s),
        "w_fc": jax.random.normal(ks[5], (hidden_dim, output_dim),
                                  jnp.float32) * s,
        "b_fc": jax.random.normal(ks[6], (1, output_dim), jnp.float32) * s,
    }


def reference_forward(tokens, params):
    """Pure-JAX f32 reference (same math as PyTorch CandleLSTM.forward)."""
    x = jnp.take(params["embedding"], tokens, axis=0)      # (B, T, E)
    B, T, E = x.shape
    H = params["w_hh"].shape[0]
    h = jnp.zeros((B, H), jnp.float32)
    c = jnp.zeros((B, H), jnp.float32)

    def step(carry, x_t):
        h, c = carry
        gates = x_t @ params["w_ih"] + h @ params["w_hh"] + params["b"]
        i = jax.nn.sigmoid(gates[:, 0 * H:1 * H])
        f = jax.nn.sigmoid(gates[:, 1 * H:2 * H])
        g = jnp.tanh(gates[:, 2 * H:3 * H])
        o = jax.nn.sigmoid(gates[:, 3 * H:4 * H])
        c = f * c + i * g
        h = o * jnp.tanh(c)
        return (h, c), None

    (h, c), _ = lax.scan(step, (h, c), jnp.transpose(x, (1, 0, 2)))
    return jax.nn.sigmoid(h @ params["w_fc"] + params["b_fc"])


if __name__ == "__main__":
    vocab_size, embedding_dim, hidden_dim, output_dim = 16, 32, 32, 4
    B, T = 2, 8

    key = jax.random.PRNGKey(0)
    k_tok, k_par = jax.random.split(key)
    tokens = jax.random.randint(k_tok, (B, T), 0, vocab_size, dtype=jnp.int32)
    params = init_params(k_par, vocab_size, embedding_dim, hidden_dim,
                         output_dim)

    out = candle_lstm_forward(tokens, params)
    out = jax.block_until_ready(out)

    ref = jax.block_until_ready(reference_forward(tokens, params))
    # Tolerance accounts for bf16 MXU operands + approximate-reciprocal gate
    # sigmoids (the final output sigmoid is exact).
    np.testing.assert_allclose(np.asarray(out), np.asarray(ref),
                               rtol=2e-2, atol=2e-2)

    print("KERNEL_OK")
</pallas_src>

<mosaic_0001>
module attributes {stable_mosaic.version = 11 : i64} {
  func.func @_lstm_kernel(%arg0: i32, %arg1: i32, %arg2: memref<8x16x128xbf16, #tpu.memory_space<vmem>>, %arg3: memref<128x512xbf16, #tpu.memory_space<vmem>>, %arg4: memref<128x512xbf16, #tpu.memory_space<vmem>>, %arg5: memref<1x512xf32, #tpu.memory_space<vmem>>, %arg6: memref<128x128xbf16, #tpu.memory_space<vmem>>, %arg7: memref<1x128xf32, #tpu.memory_space<vmem>>, %arg8: memref<16x128xf32, #tpu.memory_space<vmem>>, %arg9: memref<16x128xf32, #tpu.memory_space<vmem>>, %arg10: memref<16x128xf32, #tpu.memory_space<vmem>>, %arg11: memref<128x512xf32, #tpu.memory_space<vmem>>) attributes {dimension_semantics = [#tpu.dimension_semantics<parallel>, #tpu.dimension_semantics<arbitrary>], iteration_bounds = array<i64: 1, 1>, scalar_prefetch = 0 : i64, scratch_operands = 3 : i64, tpu.core_type = #tpu.core_type<tc>, window_params = [{transform_indices = @transform_0, window_bounds = array<i64: 8, 16, 128>}, {pipeline_mode = #tpu.pipeline_mode<synchronous>, transform_indices = @transform_1, window_bounds = array<i64: 128, 512>}, {pipeline_mode = #tpu.pipeline_mode<synchronous>, transform_indices = @transform_2, window_bounds = array<i64: 128, 512>}, {pipeline_mode = #tpu.pipeline_mode<synchronous>, transform_indices = @transform_3, window_bounds = array<i64: 1, 512>}, {pipeline_mode = #tpu.pipeline_mode<synchronous>, transform_indices = @transform_4, window_bounds = array<i64: 128, 128>}, {pipeline_mode = #tpu.pipeline_mode<synchronous>, transform_indices = @transform_5, window_bounds = array<i64: 1, 128>}, {transform_indices = @transform_6, window_bounds = array<i64: 16, 128>}]} {
    %c0_i32 = arith.constant 0 : i32
    %0 = arith.cmpi eq, %arg1, %c0_i32 : i32
    %1 = arith.extui %0 : i1 to i32
    %c0_i32_0 = arith.constant 0 : i32
    %2 = arith.cmpi ne, %1, %c0_i32_0 : i32
    scf.if %2 {
      %cst_102 = arith.constant 0.000000e+00 : f32
      %332 = vector.broadcast %cst_102 : f32 to vector<16x128xf32>
      %c0_103 = arith.constant 0 : index
      %c0_104 = arith.constant 0 : index
      %333 = vector.load %arg9[%c0_103, %c0_104] : memref<16x128xf32, #tpu.memory_space<vmem>>, vector<16x128xf32>
      tpu.vector_store %arg9[%c0_103, %c0_104], %332 {strides = array<i32>} : memref<16x128xf32, #tpu.memory_space<vmem>>, vector<16x128xf32>,
      %cst_105 = arith.constant 0.000000e+00 : f32
      %334 = vector.broadcast %cst_105 : f32 to vector<16x128xf32>
      %c0_106 = arith.constant 0 : index
      %c0_107 = arith.constant 0 : index
      %335 = vector.load %arg10[%c0_106, %c0_107] : memref<16x128xf32, #tpu.memory_space<vmem>>, vector<16x128xf32>
      tpu.vector_store %arg10[%c0_106, %c0_107], %334 {strides = array<i32>} : memref<16x128xf32, #tpu.memory_space<vmem>>, vector<16x128xf32>,
    } else {
    }
    %c0 = arith.constant 0 : index
    %c0_1 = arith.constant 0 : index
    %c0_2 = arith.constant 0 : index
    %3 = vector.load %arg2[%c0, %c0_1, %c0_2] : memref<8x16x128xbf16, #tpu.memory_space<vmem>>, vector<8x16x128xbf16>
    %4 = vector.shape_cast %3 : vector<8x16x128xbf16> to vector<128x128xbf16>
    %c0_3 = arith.constant 0 : index
    %c0_4 = arith.constant 0 : index
    %5 = vector.load %arg3[%c0_3, %c0_4] : memref<128x512xbf16, #tpu.memory_space<vmem>>, vector<128x512xbf16>
    %cst = arith.constant dense<0.000000e+00> : vector<128x512xf32>
    %6 = tpu.matmul %4, %5, %cst {dimension_numbers = #tpu.dot_dimension_numbers<[1], [0], [0], [1], [0, 0, 1, 1], [], []>} : vector<128x128xbf16>, vector<128x512xbf16>, vector<128x512xf32> -> vector<128x512xf32>
    %c0_5 = arith.constant 0 : index
    %c0_6 = arith.constant 0 : index
    %7 = vector.load %arg5[%c0_5, %c0_6] : memref<1x512xf32, #tpu.memory_space<vmem>>, vector<1x512xf32>
    %8 = vector.broadcast %7 : vector<1x512xf32> to vector<128x512xf32>
    %9 = arith.addf %6, %8 : vector<128x512xf32>
    %c0_7 = arith.constant 0 : index
    %c0_8 = arith.constant 0 : index
    %10 = vector.load %arg11[%c0_7, %c0_8] : memref<128x512xf32, #tpu.memory_space<vmem>>, vector<128x512xf32>
    tpu.vector_store %arg11[%c0_7, %c0_8], %9 {strides = array<i32>} : memref<128x512xf32, #tpu.memory_space<vmem>>, vector<128x512xf32>,
    %c0_9 = arith.constant 0 : index
    %c0_10 = arith.constant 0 : index
    %11 = vector.load %arg4[%c0_9, %c0_10] : memref<128x512xbf16, #tpu.memory_space<vmem>>, vector<128x512xbf16>
    %c8_i32 = arith.constant 8 : i32
    %12 = arith.muli %arg1, %c8_i32 : i32
    %c0_11 = arith.constant 0 : index
    %c0_12 = arith.constant 0 : index
    %13 = vector.load %arg9[%c0_11, %c0_12] : memref<16x128xf32, #tpu.memory_space<vmem>>, vector<16x128xf32>
    %c0_13 = arith.constant 0 : index
    %c0_14 = arith.constant 0 : index
    %14 = vector.load %arg10[%c0_13, %c0_14] : memref<16x128xf32, #tpu.memory_space<vmem>>, vector<16x128xf32>
    %c0_i32_15 = arith.constant 0 : i32
    %c16_i32 = arith.constant 16 : i32
    %15 = arith.muli %c0_i32_15, %c16_i32 : i32
    %16 = tpu.assume_multiple %15, 16 : i32
    %17 = arith.index_cast %16 : i32 to index
    %c0_16 = arith.constant 0 : index
    %18 = vector.load %arg11[%17, %c0_16] : memref<128x512xf32, #tpu.memory_space<vmem>>, vector<16x512xf32>
    %19 = arith.truncf %13 : vector<16x128xf32> to vector<16x128xbf16>
    %cst_17 = arith.constant dense<0.000000e+00> : vector<16x512xf32>
    %20 = tpu.matmul %19, %11, %cst_17 {dimension_numbers = #tpu.dot_dimension_numbers<[1], [0], [0], [1], [0, 0, 1, 1], [], []>} : vector<16x128xbf16>, vector<128x512xbf16>, vector<16x512xf32> -> vector<16x512xf32>
    %21 = arith.addf %18, %20 : vector<16x512xf32>
    %22 = vector.extract_strided_slice %21 {offsets = [0, 0], sizes = [16, 128], strides = [1, 1]} : vector<16x512xf32> to vector<16x128xf32>
    %cst_18 = arith.constant 0.000000e+00 : f32
    %23 = vector.broadcast %cst_18 : f32 to vector<16x128xf32>
    %24 = arith.subf %23, %22 : vector<16x128xf32>
    %25 = math.exp %24 : vector<16x128xf32>
    %cst_19 = arith.constant 1.000000e+00 : f32
    %26 = vector.broadcast %cst_19 : f32 to vector<16x128xf32>
    %27 = arith.addf %26, %25 : vector<16x128xf32>
    %28 = tpu.reciprocal %27 {approx = true} : vector<16x128xf32> -> vector<16x128xf32>
    %29 = vector.extract_strided_slice %21 {offsets = [0, 256], sizes = [16, 128], strides = [1, 1]} : vector<16x512xf32> to vector<16x128xf32>
    %30 = math.tanh %29 : vector<16x128xf32>
    %31 = vector.extract_strided_slice %21 {offsets = [0, 128], sizes = [16, 128], strides = [1, 1]} : vector<16x512xf32> to vector<16x128xf32>
    %cst_20 = arith.constant 0.000000e+00 : f32
    %32 = vector.broadcast %cst_20 : f32 to vector<16x128xf32>
    %33 = arith.subf %32, %31 : vector<16x128xf32>
    %34 = math.exp %33 : vector<16x128xf32>
    %cst_21 = arith.constant 1.000000e+00 : f32
    %35 = vector.broadcast %cst_21 : f32 to vector<16x128xf32>
    %36 = arith.addf %35, %34 : vector<16x128xf32>
    %37 = tpu.reciprocal %36 {approx = true} : vector<16x128xf32> -> vector<16x128xf32>
    %38 = arith.mulf %37, %14 : vector<16x128xf32>
    %39 = arith.mulf %28, %30 : vector<16x128xf32>
    %40 = arith.addf %38, %39 : vector<16x128xf32>
    %41 = vector.extract_strided_slice %21 {offsets = [0, 384], sizes = [16, 128], strides = [1, 1]} : vector<16x512xf32> to vector<16x128xf32>
    %cst_22 = arith.constant 0.000000e+00 : f32
    %42 = vector.broadcast %cst_22 : f32 to vector<16x128xf32>
    %43 = arith.subf %42, %41 : vector<16x128xf32>
    %44 = math.exp %43 : vector<16x128xf32>
    %cst_23 = arith.constant 1.000000e+00 : f32
    %45 = vector.broadcast %cst_23 : f32 to vector<16x128xf32>
    %46 = arith.addf %45, %44 : vector<16x128xf32>
    %47 = tpu.reciprocal %46 {approx = true} : vector<16x128xf32> -> vector<16x128xf32>
    %48 = math.tanh %40 : vector<16x128xf32>
    %49 = arith.mulf %47, %48 : vector<16x128xf32>
    %50 = arith.addi %12, %c0_i32_15 : i32
    %c8_i32_24 = arith.constant 8 : i32
    %51 = arith.cmpi slt, %50, %c8_i32_24 : i32
    %52 = arith.select %51, %49, %13 : vector<16x128xf32>
    %53 = arith.select %51, %40, %14 : vector<16x128xf32>
    %c1_i32 = arith.constant 1 : i32
    %c16_i32_25 = arith.constant 16 : i32
    %54 = arith.muli %c1_i32, %c16_i32_25 : i32
    %55 = tpu.assume_multiple %54, 16 : i32
    %56 = arith.index_cast %55 : i32 to index
    %c0_26 = arith.constant 0 : index
    %57 = vector.load %arg11[%56, %c0_26] : memref<128x512xf32, #tpu.memory_space<vmem>>, vector<16x512xf32>
    %58 = arith.truncf %52 : vector<16x128xf32> to vector<16x128xbf16>
    %cst_27 = arith.constant dense<0.000000e+00> : vector<16x512xf32>
    %59 = tpu.matmul %58, %11, %cst_27 {dimension_numbers = #tpu.dot_dimension_numbers<[1], [0], [0], [1], [0, 0, 1, 1], [], []>} : vector<16x128xbf16>, vector<128x512xbf16>, vector<16x512xf32> -> vector<16x512xf32>
    %60 = arith.addf %57, %59 : vector<16x512xf32>
    %61 = vector.extract_strided_slice %60 {offsets = [0, 0], sizes = [16, 128], strides = [1, 1]} : vector<16x512xf32> to vector<16x128xf32>
    %cst_28 = arith.constant 0.000000e+00 : f32
    %62 = vector.broadcast %cst_28 : f32 to vector<16x128xf32>
    %63 = arith.subf %62, %61 : vector<16x128xf32>
    %64 = math.exp %63 : vector<16x128xf32>
    %cst_29 = arith.constant 1.000000e+00 : f32
    %65 = vector.broadcast %cst_29 : f32 to vector<16x128xf32>
    %66 = arith.addf %65, %64 : vector<16x128xf32>
    %67 = tpu.reciprocal %66 {approx = true} : vector<16x128xf32> -> vector<16x128xf32>
    %68 = vector.extract_strided_slice %60 {offsets = [0, 256], sizes = [16, 128], strides = [1, 1]} : vector<16x512xf32> to vector<16x128xf32>
    %69 = math.tanh %68 : vector<16x128xf32>
    %70 = vector.extract_strided_slice %60 {offsets = [0, 128], sizes = [16, 128], strides = [1, 1]} : vector<16x512xf32> to vector<16x128xf32>
    %cst_30 = arith.constant 0.000000e+00 : f32
    %71 = vector.broadcast %cst_30 : f32 to vector<16x128xf32>
    %72 = arith.subf %71, %70 : vector<16x128xf32>
    %73 = math.exp %72 : vector<16x128xf32>
    %cst_31 = arith.constant 1.000000e+00 : f32
    %74 = vector.broadcast %cst_31 : f32 to vector<16x128xf32>
    %75 = arith.addf %74, %73 : vector<16x128xf32>
    %76 = tpu.reciprocal %75 {approx = true} : vector<16x128xf32> -> vector<16x128xf32>
    %77 = arith.mulf %76, %53 : vector<16x128xf32>
    %78 = arith.mulf %67, %69 : vector<16x128xf32>
    %79 = arith.addf %77, %78 : vector<16x128xf32>
    %80 = vector.extract_strided_slice %60 {offsets = [0, 384], sizes = [16, 128], strides = [1, 1]} : vector<16x512xf32> to vector<16x128xf32>
    %cst_32 = arith.constant 0.000000e+00 : f32
    %81 = vector.broadcast %cst_32 : f32 to vector<16x128xf32>
    %82 = arith.subf %81, %80 : vector<16x128xf32>
    %83 = math.exp %82 : vector<16x128xf32>
    %cst_33 = arith.constant 1.000000e+00 : f32
    %84 = vector.broadcast %cst_33 : f32 to vector<16x128xf32>
    %85 = arith.addf %84, %83 : vector<16x128xf32>
    %86 = tpu.reciprocal %85 {approx = true} : vector<16x128xf32> -> vector<16x128xf32>
    %87 = math.tanh %79 : vector<16x128xf32>
    %88 = arith.mulf %86, %87 : vector<16x128xf32>
    %89 = arith.addi %12, %c1_i32 : i32
    %c8_i32_34 = arith.constant 8 : i32
    %90 = arith.cmpi slt, %89, %c8_i32_34 : i32
    %91 = arith.select %90, %88, %52 : vector<16x128xf32>
    %92 = arith.select %90, %79, %53 : vector<16x128xf32>
    %c2_i32 = arith.constant 2 : i32
    %c16_i32_35 = arith.constant 16 : i32
    %93 = arith.muli %c2_i32, %c16_i32_35 : i32
    %94 = tpu.assume_multiple %93, 16 : i32
    %95 = arith.index_cast %94 : i32 to index
    %c0_36 = arith.constant 0 : index
    %96 = vector.load %arg11[%95, %c0_36] : memref<128x512xf32, #tpu.memory_space<vmem>>, vector<16x512xf32>
    %97 = arith.truncf %91 : vector<16x128xf32> to vector<16x128xbf16>
    %cst_37 = arith.constant dense<0.000000e+00> : vector<16x512xf32>
    %98 = tpu.matmul %97, %11, %cst_37 {dimension_numbers = #tpu.dot_dimension_numbers<[1], [0], [0], [1], [0, 0, 1, 1], [], []>} : vector<16x128xbf16>, vector<128x512xbf16>, vector<16x512xf32> -> vector<16x512xf32>
    %99 = arith.addf %96, %98 : vector<16x512xf32>
    %100 = vector.extract_strided_slice %99 {offsets = [0, 0], sizes = [16, 128], strides = [1, 1]} : vector<16x512xf32> to vector<16x128xf32>
    %cst_38 = arith.constant 0.000000e+00 : f32
    %101 = vector.broadcast %cst_38 : f32 to vector<16x128xf32>
    %102 = arith.subf %101, %100 : vector<16x128xf32>
    %103 = math.exp %102 : vector<16x128xf32>
    %cst_39 = arith.constant 1.000000e+00 : f32
    %104 = vector.broadcast %cst_39 : f32 to vector<16x128xf32>
    %105 = arith.addf %104, %103 : vector<16x128xf32>
    %106 = tpu.reciprocal %105 {approx = true} : vector<16x128xf32> -> vector<16x128xf32>
    %107 = vector.extract_strided_slice %99 {offsets = [0, 256], sizes = [16, 128], strides = [1, 1]} : vector<16x512xf32> to vector<16x128xf32>
    %108 = math.tanh %107 : vector<16x128xf32>
    %109 = vector.extract_strided_slice %99 {offsets = [0, 128], sizes = [16, 128], strides = [1, 1]} : vector<16x512xf32> to vector<16x128xf32>
    %cst_40 = arith.constant 0.000000e+00 : f32
    %110 = vector.broadcast %cst_40 : f32 to vector<16x128xf32>
    %111 = arith.subf %110, %109 : vector<16x128xf32>
    %112 = math.exp %111 : vector<16x128xf32>
    %cst_41 = arith.constant 1.000000e+00 : f32
    %113 = vector.broadcast %cst_41 : f32 to vector<16x128xf32>
    %114 = arith.addf %113, %112 : vector<16x128xf32>
    %115 = tpu.reciprocal %114 {approx = true} : vector<16x128xf32> -> vector<16x128xf32>
    %116 = arith.mulf %115, %92 : vector<16x128xf32>
    %117 = arith.mulf %106, %108 : vector<16x128xf32>
    %118 = arith.addf %116, %117 : vector<16x128xf32>
    %119 = vector.extract_strided_slice %99 {offsets = [0, 384], sizes = [16, 128], strides = [1, 1]} : vector<16x512xf32> to vector<16x128xf32>
    %cst_42 = arith.constant 0.000000e+00 : f32
    %120 = vector.broadcast %cst_42 : f32 to vector<16x128xf32>
    %121 = arith.subf %120, %119 : vector<16x128xf32>
    %122 = math.exp %121 : vector<16x128xf32>
    %cst_43 = arith.constant 1.000000e+00 : f32
    %123 = vector.broadcast %cst_43 : f32 to vector<16x128xf32>
    %124 = arith.addf %123, %122 : vector<16x128xf32>
    %125 = tpu.reciprocal %124 {approx = true} : vector<16x128xf32> -> vector<16x128xf32>
    %126 = math.tanh %118 : vector<16x128xf32>
    %127 = arith.mulf %125, %126 : vector<16x128xf32>
    %128 = arith.addi %12, %c2_i32 : i32
    %c8_i32_44 = arith.constant 8 : i32
    %129 = arith.cmpi slt, %128, %c8_i32_44 : i32
    %130 = arith.select %129, %127, %91 : vector<16x128xf32>
    %131 = arith.select %129, %118, %92 : vector<16x128xf32>
    %c3_i32 = arith.constant 3 : i32
    %c16_i32_45 = arith.constant 16 : i32
    %132 = arith.muli %c3_i32, %c16_i32_45 : i32
    %133 = tpu.assume_multiple %132, 16 : i32
    %134 = arith.index_cast %133 : i32 to index
    %c0_46 = arith.constant 0 : index
    %135 = vector.load %arg11[%134, %c0_46] : memref<128x512xf32, #tpu.memory_space<vmem>>, vector<16x512xf32>
    %136 = arith.truncf %130 : vector<16x128xf32> to vector<16x128xbf16>
    %cst_47 = arith.constant dense<0.000000e+00> : vector<16x512xf32>
    %137 = tpu.matmul %136, %11, %cst_47 {dimension_numbers = #tpu.dot_dimension_numbers<[1], [0], [0], [1], [0, 0, 1, 1], [], []>} : vector<16x128xbf16>, vector<128x512xbf16>, vector<16x512xf32> -> vector<16x512xf32>
    %138 = arith.addf %135, %137 : vector<16x512xf32>
    %139 = vector.extract_strided_slice %138 {offsets = [0, 0], sizes = [16, 128], strides = [1, 1]} : vector<16x512xf32> to vector<16x128xf32>
    %cst_48 = arith.constant 0.000000e+00 : f32
    %140 = vector.broadcast %cst_48 : f32 to vector<16x128xf32>
    %141 = arith.subf %140, %139 : vector<16x128xf32>
    %142 = math.exp %141 : vector<16x128xf32>
    %cst_49 = arith.constant 1.000000e+00 : f32
    %143 = vector.broadcast %cst_49 : f32 to vector<16x128xf32>
    %144 = arith.addf %143, %142 : vector<16x128xf32>
    %145 = tpu.reciprocal %144 {approx = true} : vector<16x128xf32> -> vector<16x128xf32>
    %146 = vector.extract_strided_slice %138 {offsets = [0, 256], sizes = [16, 128], strides = [1, 1]} : vector<16x512xf32> to vector<16x128xf32>
    %147 = math.tanh %146 : vector<16x128xf32>
    %148 = vector.extract_strided_slice %138 {offsets = [0, 128], sizes = [16, 128], strides = [1, 1]} : vector<16x512xf32> to vector<16x128xf32>
    %cst_50 = arith.constant 0.000000e+00 : f32
    %149 = vector.broadcast %cst_50 : f32 to vector<16x128xf32>
    %150 = arith.subf %149, %148 : vector<16x128xf32>
    %151 = math.exp %150 : vector<16x128xf32>
    %cst_51 = arith.constant 1.000000e+00 : f32
    %152 = vector.broadcast %cst_51 : f32 to vector<16x128xf32>
    %153 = arith.addf %152, %151 : vector<16x128xf32>
    %154 = tpu.reciprocal %153 {approx = true} : vector<16x128xf32> -> vector<16x128xf32>
    %155 = arith.mulf %154, %131 : vector<16x128xf32>
    %156 = arith.mulf %145, %147 : vector<16x128xf32>
    %157 = arith.addf %155, %156 : vector<16x128xf32>
    %158 = vector.extract_strided_slice %138 {offsets = [0, 384], sizes = [16, 128], strides = [1, 1]} : vector<16x512xf32> to vector<16x128xf32>
    %cst_52 = arith.constant 0.000000e+00 : f32
    %159 = vector.broadcast %cst_52 : f32 to vector<16x128xf32>
    %160 = arith.subf %159, %158 : vector<16x128xf32>
    %161 = math.exp %160 : vector<16x128xf32>
    %cst_53 = arith.constant 1.000000e+00 : f32
    %162 = vector.broadcast %cst_53 : f32 to vector<16x128xf32>
    %163 = arith.addf %162, %161 : vector<16x128xf32>
    %164 = tpu.reciprocal %163 {approx = true} : vector<16x128xf32> -> vector<16x128xf32>
    %165 = math.tanh %157 : vector<16x128xf32>
    %166 = arith.mulf %164, %165 : vector<16x128xf32>
    %167 = arith.addi %12, %c3_i32 : i32
    %c8_i32_54 = arith.constant 8 : i32
    %168 = arith.cmpi slt, %167, %c8_i32_54 : i32
    %169 = arith.select %168, %166, %130 : vector<16x128xf32>
    %170 = arith.select %168, %157, %131 : vector<16x128xf32>
    %c4_i32 = arith.constant 4 : i32
    %c16_i32_55 = arith.constant 16 : i32
    %171 = arith.muli %c4_i32, %c16_i32_55 : i32
    %172 = tpu.assume_multiple %171, 16 : i32
    %173 = arith.index_cast %172 : i32 to index
    %c0_56 = arith.constant 0 : index
    %174 = vector.load %arg11[%173, %c0_56] : memref<128x512xf32, #tpu.memory_space<vmem>>, vector<16x512xf32>
    %175 = arith.truncf %169 : vector<16x128xf32> to vector<16x128xbf16>
    %cst_57 = arith.constant dense<0.000000e+00> : vector<16x512xf32>
    %176 = tpu.matmul %175, %11, %cst_57 {dimension_numbers = #tpu.dot_dimension_numbers<[1], [0], [0], [1], [0, 0, 1, 1], [], []>} : vector<16x128xbf16>, vector<128x512xbf16>, vector<16x512xf32> -> vector<16x512xf32>
    %177 = arith.addf %174, %176 : vector<16x512xf32>
    %178 = vector.extract_strided_slice %177 {offsets = [0, 0], sizes = [16, 128], strides = [1, 1]} : vector<16x512xf32> to vector<16x128xf32>
    %cst_58 = arith.constant 0.000000e+00 : f32
    %179 = vector.broadcast %cst_58 : f32 to vector<16x128xf32>
    %180 = arith.subf %179, %178 : vector<16x128xf32>
    %181 = math.exp %180 : vector<16x128xf32>
    %cst_59 = arith.constant 1.000000e+00 : f32
    %182 = vector.broadcast %cst_59 : f32 to vector<16x128xf32>
    %183 = arith.addf %182, %181 : vector<16x128xf32>
    %184 = tpu.reciprocal %183 {approx = true} : vector<16x128xf32> -> vector<16x128xf32>
    %185 = vector.extract_strided_slice %177 {offsets = [0, 256], sizes = [16, 128], strides = [1, 1]} : vector<16x512xf32> to vector<16x128xf32>
    %186 = math.tanh %185 : vector<16x128xf32>
    %187 = vector.extract_strided_slice %177 {offsets = [0, 128], sizes = [16, 128], strides = [1, 1]} : vector<16x512xf32> to vector<16x128xf32>
    %cst_60 = arith.constant 0.000000e+00 : f32
    %188 = vector.broadcast %cst_60 : f32 to vector<16x128xf32>
    %189 = arith.subf %188, %187 : vector<16x128xf32>
    %190 = math.exp %189 : vector<16x128xf32>
    %cst_61 = arith.constant 1.000000e+00 : f32
    %191 = vector.broadcast %cst_61 : f32 to vector<16x128xf32>
    %192 = arith.addf %191, %190 : vector<16x128xf32>
    %193 = tpu.reciprocal %192 {approx = true} : vector<16x128xf32> -> vector<16x128xf32>
    %194 = arith.mulf %193, %170 : vector<16x128xf32>
    %195 = arith.mulf %184, %186 : vector<16x128xf32>
    %196 = arith.addf %194, %195 : vector<16x128xf32>
    %197 = vector.extract_strided_slice %177 {offsets = [0, 384], sizes = [16, 128], strides = [1, 1]} : vector<16x512xf32> to vector<16x128xf32>
    %cst_62 = arith.constant 0.000000e+00 : f32
    %198 = vector.broadcast %cst_62 : f32 to vector<16x128xf32>
    %199 = arith.subf %198, %197 : vector<16x128xf32>
    %200 = math.exp %199 : vector<16x128xf32>
    %cst_63 = arith.constant 1.000000e+00 : f32
    %201 = vector.broadcast %cst_63 : f32 to vector<16x128xf32>
    %202 = arith.addf %201, %200 : vector<16x128xf32>
    %203 = tpu.reciprocal %202 {approx = true} : vector<16x128xf32> -> vector<16x128xf32>
    %204 = math.tanh %196 : vector<16x128xf32>
    %205 = arith.mulf %203, %204 : vector<16x128xf32>
    %206 = arith.addi %12, %c4_i32 : i32
    %c8_i32_64 = arith.constant 8 : i32
    %207 = arith.cmpi slt, %206, %c8_i32_64 : i32
    %208 = arith.select %207, %205, %169 : vector<16x128xf32>
    %209 = arith.select %207, %196, %170 : vector<16x128xf32>
    %c5_i32 = arith.constant 5 : i32
    %c16_i32_65 = arith.constant 16 : i32
    %210 = arith.muli %c5_i32, %c16_i32_65 : i32
    %211 = tpu.assume_multiple %210, 16 : i32
    %212 = arith.index_cast %211 : i32 to index
    %c0_66 = arith.constant 0 : index
    %213 = vector.load %arg11[%212, %c0_66] : memref<128x512xf32, #tpu.memory_space<vmem>>, vector<16x512xf32>
    %214 = arith.truncf %208 : vector<16x128xf32> to vector<16x128xbf16>
    %cst_67 = arith.constant dense<0.000000e+00> : vector<16x512xf32>
    %215 = tpu.matmul %214, %11, %cst_67 {dimension_numbers = #tpu.dot_dimension_numbers<[1], [0], [0], [1], [0, 0, 1, 1], [], []>} : vector<16x128xbf16>, vector<128x512xbf16>, vector<16x512xf32> -> vector<16x512xf32>
    %216 = arith.addf %213, %215 : vector<16x512xf32>
    %217 = vector.extract_strided_slice %216 {offsets = [0, 0], sizes = [16, 128], strides = [1, 1]} : vector<16x512xf32> to vector<16x128xf32>
    %cst_68 = arith.constant 0.000000e+00 : f32
    %218 = vector.broadcast %cst_68 : f32 to vector<16x128xf32>
    %219 = arith.subf %218, %217 : vector<16x128xf32>
    %220 = math.exp %219 : vector<16x128xf32>
    %cst_69 = arith.constant 1.000000e+00 : f32
    %221 = vector.broadcast %cst_69 : f32 to vector<16x128xf32>
    %222 = arith.addf %221, %220 : vector<16x128xf32>
    %223 = tpu.reciprocal %222 {approx = true} : vector<16x128xf32> -> vector<16x128xf32>
    %224 = vector.extract_strided_slice %216 {offsets = [0, 256], sizes = [16, 128], strides = [1, 1]} : vector<16x512xf32> to vector<16x128xf32>
    %225 = math.tanh %224 : vector<16x128xf32>
    %226 = vector.extract_strided_slice %216 {offsets = [0, 128], sizes = [16, 128], strides = [1, 1]} : vector<16x512xf32> to vector<16x128xf32>
    %cst_70 = arith.constant 0.000000e+00 : f32
    %227 = vector.broadcast %cst_70 : f32 to vector<16x128xf32>
    %228 = arith.subf %227, %226 : vector<16x128xf32>
    %229 = math.exp %228 : vector<16x128xf32>
    %cst_71 = arith.constant 1.000000e+00 : f32
    %230 = vector.broadcast %cst_71 : f32 to vector<16x128xf32>
    %231 = arith.addf %230, %229 : vector<16x128xf32>
    %232 = tpu.reciprocal %231 {approx = true} : vector<16x128xf32> -> vector<16x128xf32>
    %233 = arith.mulf %232, %209 : vector<16x128xf32>
    %234 = arith.mulf %223, %225 : vector<16x128xf32>
    %235 = arith.addf %233, %234 : vector<16x128xf32>
    %236 = vector.extract_strided_slice %216 {offsets = [0, 384], sizes = [16, 128], strides = [1, 1]} : vector<16x512xf32> to vector<16x128xf32>
    %cst_72 = arith.constant 0.000000e+00 : f32
    %237 = vector.broadcast %cst_72 : f32 to vector<16x128xf32>
    %238 = arith.subf %237, %236 : vector<16x128xf32>
    %239 = math.exp %238 : vector<16x128xf32>
    %cst_73 = arith.constant 1.000000e+00 : f32
    %240 = vector.broadcast %cst_73 : f32 to vector<16x128xf32>
    %241 = arith.addf %240, %239 : vector<16x128xf32>
    %242 = tpu.reciprocal %241 {approx = true} : vector<16x128xf32> -> vector<16x128xf32>
    %243 = math.tanh %235 : vector<16x128xf32>
    %244 = arith.mulf %242, %243 : vector<16x128xf32>
    %245 = arith.addi %12, %c5_i32 : i32
    %c8_i32_74 = arith.constant 8 : i32
    %246 = arith.cmpi slt, %245, %c8_i32_74 : i32
    %247 = arith.select %246, %244, %208 : vector<16x128xf32>
    %248 = arith.select %246, %235, %209 : vector<16x128xf32>
    %c6_i32 = arith.constant 6 : i32
    %c16_i32_75 = arith.constant 16 : i32
    %249 = arith.muli %c6_i32, %c16_i32_75 : i32
    %250 = tpu.assume_multiple %249, 16 : i32
    %251 = arith.index_cast %250 : i32 to index
    %c0_76 = arith.constant 0 : index
    %252 = vector.load %arg11[%251, %c0_76] : memref<128x512xf32, #tpu.memory_space<vmem>>, vector<16x512xf32>
    %253 = arith.truncf %247 : vector<16x128xf32> to vector<16x128xbf16>
    %cst_77 = arith.constant dense<0.000000e+00> : vector<16x512xf32>
    %254 = tpu.matmul %253, %11, %cst_77 {dimension_numbers = #tpu.dot_dimension_numbers<[1], [0], [0], [1], [0, 0, 1, 1], [], []>} : vector<16x128xbf16>, vector<128x512xbf16>, vector<16x512xf32> -> vector<16x512xf32>
    %255 = arith.addf %252, %254 : vector<16x512xf32>
    %256 = vector.extract_strided_slice %255 {offsets = [0, 0], sizes = [16, 128], strides = [1, 1]} : vector<16x512xf32> to vector<16x128xf32>
    %cst_78 = arith.constant 0.000000e+00 : f32
    %257 = vector.broadcast %cst_78 : f32 to vector<16x128xf32>
    %258 = arith.subf %257, %256 : vector<16x128xf32>
    %259 = math.exp %258 : vector<16x128xf32>
    %cst_79 = arith.constant 1.000000e+00 : f32
    %260 = vector.broadcast %cst_79 : f32 to vector<16x128xf32>
    %261 = arith.addf %260, %259 : vector<16x128xf32>
    %262 = tpu.reciprocal %261 {approx = true} : vector<16x128xf32> -> vector<16x128xf32>
    %263 = vector.extract_strided_slice %255 {offsets = [0, 256], sizes = [16, 128], strides = [1, 1]} : vector<16x512xf32> to vector<16x128xf32>
    %264 = math.tanh %263 : vector<16x128xf32>
    %265 = vector.extract_strided_slice %255 {offsets = [0, 128], sizes = [16, 128], strides = [1, 1]} : vector<16x512xf32> to vector<16x128xf32>
    %cst_80 = arith.constant 0.000000e+00 : f32
    %266 = vector.broadcast %cst_80 : f32 to vector<16x128xf32>
    %267 = arith.subf %266, %265 : vector<16x128xf32>
    %268 = math.exp %267 : vector<16x128xf32>
    %cst_81 = arith.constant 1.000000e+00 : f32
    %269 = vector.broadcast %cst_81 : f32 to vector<16x128xf32>
    %270 = arith.addf %269, %268 : vector<16x128xf32>
    %271 = tpu.reciprocal %270 {approx = true} : vector<16x128xf32> -> vector<16x128xf32>
    %272 = arith.mulf %271, %248 : vector<16x128xf32>
    %273 = arith.mulf %262, %264 : vector<16x128xf32>
    %274 = arith.addf %272, %273 : vector<16x128xf32>
    %275 = vector.extract_strided_slice %255 {offsets = [0, 384], sizes = [16, 128], strides = [1, 1]} : vector<16x512xf32> to vector<16x128xf32>
    %cst_82 = arith.constant 0.000000e+00 : f32
    %276 = vector.broadcast %cst_82 : f32 to vector<16x128xf32>
    %277 = arith.subf %276, %275 : vector<16x128xf32>
    %278 = math.exp %277 : vector<16x128xf32>
    %cst_83 = arith.constant 1.000000e+00 : f32
    %279 = vector.broadcast %cst_83 : f32 to vector<16x128xf32>
    %280 = arith.addf %279, %278 : vector<16x128xf32>
    %281 = tpu.reciprocal %280 {approx = true} : vector<16x128xf32> -> vector<16x128xf32>
    %282 = math.tanh %274 : vector<16x128xf32>
    %283 = arith.mulf %281, %282 : vector<16x128xf32>
    %284 = arith.addi %12, %c6_i32 : i32
    %c8_i32_84 = arith.constant 8 : i32
    %285 = arith.cmpi slt, %284, %c8_i32_84 : i32
    %286 = arith.select %285, %283, %247 : vector<16x128xf32>
    %287 = arith.select %285, %274, %248 : vector<16x128xf32>
    %c7_i32 = arith.constant 7 : i32
    %c16_i32_85 = arith.constant 16 : i32
    %288 = arith.muli %c7_i32, %c16_i32_85 : i32
    %289 = tpu.assume_multiple %288, 16 : i32
    %290 = arith.index_cast %289 : i32 to index
    %c0_86 = arith.constant 0 : index
    %291 = vector.load %arg11[%290, %c0_86] : memref<128x512xf32, #tpu.memory_space<vmem>>, vector<16x512xf32>
    %292 = arith.truncf %286 : vector<16x128xf32> to vector<16x128xbf16>
    %cst_87 = arith.constant dense<0.000000e+00> : vector<16x512xf32>
    %293 = tpu.matmul %292, %11, %cst_87 {dimension_numbers = #tpu.dot_dimension_numbers<[1], [0], [0], [1], [0, 0, 1, 1], [], []>} : vector<16x128xbf16>, vector<128x512xbf16>, vector<16x512xf32> -> vector<16x512xf32>
    %294 = arith.addf %291, %293 : vector<16x512xf32>
    %295 = vector.extract_strided_slice %294 {offsets = [0, 0], sizes = [16, 128], strides = [1, 1]} : vector<16x512xf32> to vector<16x128xf32>
    %cst_88 = arith.constant 0.000000e+00 : f32
    %296 = vector.broadcast %cst_88 : f32 to vector<16x128xf32>
    %297 = arith.subf %296, %295 : vector<16x128xf32>
    %298 = math.exp %297 : vector<16x128xf32>
    %cst_89 = arith.constant 1.000000e+00 : f32
    %299 = vector.broadcast %cst_89 : f32 to vector<16x128xf32>
    %300 = arith.addf %299, %298 : vector<16x128xf32>
    %301 = tpu.reciprocal %300 {approx = true} : vector<16x128xf32> -> vector<16x128xf32>
    %302 = vector.extract_strided_slice %294 {offsets = [0, 256], sizes = [16, 128], strides = [1, 1]} : vector<16x512xf32> to vector<16x128xf32>
    %303 = math.tanh %302 : vector<16x128xf32>
    %304 = vector.extract_strided_slice %294 {offsets = [0, 128], sizes = [16, 128], strides = [1, 1]} : vector<16x512xf32> to vector<16x128xf32>
    %cst_90 = arith.constant 0.000000e+00 : f32
    %305 = vector.broadcast %cst_90 : f32 to vector<16x128xf32>
    %306 = arith.subf %305, %304 : vector<16x128xf32>
    %307 = math.exp %306 : vector<16x128xf32>
    %cst_91 = arith.constant 1.000000e+00 : f32
    %308 = vector.broadcast %cst_91 : f32 to vector<16x128xf32>
    %309 = arith.addf %308, %307 : vector<16x128xf32>
    %310 = tpu.reciprocal %309 {approx = true} : vector<16x128xf32> -> vector<16x128xf32>
    %311 = arith.mulf %310, %287 : vector<16x128xf32>
    %312 = arith.mulf %301, %303 : vector<16x128xf32>
    %313 = arith.addf %311, %312 : vector<16x128xf32>
    %314 = vector.extract_strided_slice %294 {offsets = [0, 384], sizes = [16, 128], strides = [1, 1]} : vector<16x512xf32> to vector<16x128xf32>
    %cst_92 = arith.constant 0.000000e+00 : f32
    %315 = vector.broadcast %cst_92 : f32 to vector<16x128xf32>
    %316 = arith.subf %315, %314 : vector<16x128xf32>
    %317 = math.exp %316 : vector<16x128xf32>
    %cst_93 = arith.constant 1.000000e+00 : f32
    %318 = vector.broadcast %cst_93 : f32 to vector<16x128xf32>
    %319 = arith.addf %318, %317 : vector<16x128xf32>
    %320 = tpu.reciprocal %319 {approx = true} : vector<16x128xf32> -> vector<16x128xf32>
    %321 = math.tanh %313 : vector<16x128xf32>
    %322 = arith.mulf %320, %321 : vector<16x128xf32>
    %323 = arith.addi %12, %c7_i32 : i32
    %c8_i32_94 = arith.constant 8 : i32
    %324 = arith.cmpi slt, %323, %c8_i32_94 : i32
    %325 = arith.select %324, %322, %286 : vector<16x128xf32>
    %326 = arith.select %324, %313, %287 : vector<16x128xf32>
    %c8_i32_95 = arith.constant 8 : i32
    %c0_96 = arith.constant 0 : index
    %c0_97 = arith.constant 0 : index
    %327 = vector.load %arg9[%c0_96, %c0_97] : memref<16x128xf32, #tpu.memory_space<vmem>>, vector<16x128xf32>
    tpu.vector_store %arg9[%c0_96, %c0_97], %325 {strides = array<i32>} : memref<16x128xf32, #tpu.memory_space<vmem>>, vector<16x128xf32>,
    %c0_98 = arith.constant 0 : index
    %c0_99 = arith.constant 0 : index
    %328 = vector.load %arg10[%c0_98, %c0_99] : memref<16x128xf32, #tpu.memory_space<vmem>>, vector<16x128xf32>
    tpu.vector_store %arg10[%c0_98, %c0_99], %326 {strides = array<i32>} : memref<16x128xf32, #tpu.memory_space<vmem>>, vector<16x128xf32>,
    %c0_i32_100 = arith.constant 0 : i32
    %329 = arith.cmpi eq, %arg1, %c0_i32_100 : i32
    %330 = arith.extui %329 : i1 to i32
    %c0_i32_101 = arith.constant 0 : i32
    %331 = arith.cmpi ne, %330, %c0_i32_101 : i32
    scf.if %331 {
      %332 = arith.truncf %325 : vector<16x128xf32> to vector<16x128xbf16>
      %c0_102 = arith.constant 0 : index
      %c0_103 = arith.constant 0 : index
      %333 = vector.load %arg6[%c0_102, %c0_103] : memref<128x128xbf16, #tpu.memory_space<vmem>>, vector<128x128xbf16>
      %cst_104 = arith.constant dense<0.000000e+00> : vector<16x128xf32>
      %334 = tpu.matmul %332, %333, %cst_104 {dimension_numbers = #tpu.dot_dimension_numbers<[1], [0], [0], [1], [0, 0, 1, 1], [], []>} : vector<16x128xbf16>, vector<128x128xbf16>, vector<16x128xf32> -> vector<16x128xf32>
      %c0_105 = arith.constant 0 : index
      %c0_106 = arith.constant 0 : index
      %335 = vector.load %arg7[%c0_105, %c0_106] : memref<1x128xf32, #tpu.memory_space<vmem>>, vector<1x128xf32>
      %336 = vector.broadcast %335 : vector<1x128xf32> to vector<16x128xf32>
      %337 = arith.addf %334, %336 : vector<16x128xf32>
      %cst_107 = arith.constant 0.000000e+00 : f32
      %338 = vector.broadcast %cst_107 : f32 to vector<16x128xf32>
      %339 = arith.subf %338, %337 : vector<16x128xf32>
      %340 = math.exp %339 : vector<16x128xf32>
      %cst_108 = arith.constant 1.000000e+00 : f32
      %341 = vector.broadcast %cst_108 : f32 to vector<16x128xf32>
      %342 = arith.addf %341, %340 : vector<16x128xf32>
      %cst_109 = arith.constant 1.000000e+00 : f32
      %343 = vector.broadcast %cst_109 : f32 to vector<16x128xf32>
      %344 = arith.divf %343, %342 : vector<16x128xf32>
      %c0_110 = arith.constant 0 : index
      %c0_111 = arith.constant 0 : index
      %345 = vector.load %arg8[%c0_110, %c0_111] : memref<16x128xf32, #tpu.memory_space<vmem>>, vector<16x128xf32>
      tpu.vector_store %arg8[%c0_110, %c0_111], %344 {strides = array<i32>} : memref<16x128xf32, #tpu.memory_space<vmem>>, vector<16x128xf32>,
    } else {
    }
    return
  }
  func.func @transform_0(%arg0: i32, %arg1: i32) -> (i32, i32, i32) {
    %c0_i32 = arith.constant 0 : i32
    %c0_i32_0 = arith.constant 0 : i32
    return %arg1, %arg0, %c0_i32 : i32, i32, i32
  }
  func.func @transform_1(%arg0: i32, %arg1: i32) -> (i32, i32) {
    %c0_i32 = arith.constant 0 : i32
    %c0_i32_0 = arith.constant 0 : i32
    %c0_i32_1 = arith.constant 0 : i32
    return %c0_i32, %c0_i32_0 : i32, i32
  }
  func.func @transform_2(%arg0: i32, %arg1: i32) -> (i32, i32) {
    %c0_i32 = arith.constant 0 : i32
    %c0_i32_0 = arith.constant 0 : i32
    %c0_i32_1 = arith.constant 0 : i32
    return %c0_i32, %c0_i32_0 : i32, i32
  }
  func.func @transform_3(%arg0: i32, %arg1: i32) -> (i32, i32) {
    %c0_i32 = arith.constant 0 : i32
    %c0_i32_0 = arith.constant 0 : i32
    %c0_i32_1 = arith.constant 0 : i32
    return %c0_i32, %c0_i32_0 : i32, i32
  }
  func.func @transform_4(%arg0: i32, %arg1: i32) -> (i32, i32) {
    %c0_i32 = arith.constant 0 : i32
    %c0_i32_0 = arith.constant 0 : i32
    %c0_i32_1 = arith.constant 0 : i32
    return %c0_i32, %c0_i32_0 : i32, i32
  }
  func.func @transform_5(%arg0: i32, %arg1: i32) -> (i32, i32) {
    %c0_i32 = arith.constant 0 : i32
    %c0_i32_0 = arith.constant 0 : i32
    %c0_i32_1 = arith.constant 0 : i32
    return %c0_i32, %c0_i32_0 : i32, i32
  }
  func.func @transform_6(%arg0: i32, %arg1: i32) -> (i32, i32) {
    %c0_i32 = arith.constant 0 : i32
    %c0_i32_0 = arith.constant 0 : i32
    return %arg0, %c0_i32 : i32, i32
  }
}

module attributes {stable_mosaic.version = 11 : i64} {
  func.func @_lstm_kernel(%arg0: i32, %arg1: i32, %arg2: memref<8x16x128xbf16, #tpu.memory_space<vmem>>, %arg3: memref<128x512xbf16, #tpu.memory_space<vmem>>, %arg4: memref<128x512xbf16, #tpu.memory_space<vmem>>, %arg5: memref<1x512xf32, #tpu.memory_space<vmem>>, %arg6: memref<128x128xbf16, #tpu.memory_space<vmem>>, %arg7: memref<1x128xf32, #tpu.memory_space<vmem>>, %arg8: memref<16x128xf32, #tpu.memory_space<vmem>>, %arg9: memref<16x128xf32, #tpu.memory_space<vmem>>, %arg10: memref<16x128xf32, #tpu.memory_space<vmem>>, %arg11: memref<128x512xf32, #tpu.memory_space<vmem>>) attributes {dimension_semantics = [#tpu.dimension_semantics<parallel>, #tpu.dimension_semantics<arbitrary>], iteration_bounds = array<i64: 1, 1>, scalar_prefetch = 0 : i64, scratch_operands = 3 : i64, tpu.core_type = #tpu.core_type<tc>, window_params = [{transform_indices = @transform_0, window_bounds = array<i64: 8, 16, 128>}, {pipeline_mode = #tpu.pipeline_mode<synchronous>, transform_indices = @transform_1, window_bounds = array<i64: 128, 512>}, {pipeline_mode = #tpu.pipeline_mode<synchronous>, transform_indices = @transform_2, window_bounds = array<i64: 128, 512>}, {pipeline_mode = #tpu.pipeline_mode<synchronous>, transform_indices = @transform_3, window_bounds = array<i64: 1, 512>}, {pipeline_mode = #tpu.pipeline_mode<synchronous>, transform_indices = @transform_4, window_bounds = array<i64: 128, 128>}, {pipeline_mode = #tpu.pipeline_mode<synchronous>, transform_indices = @transform_5, window_bounds = array<i64: 1, 128>}, {transform_indices = @transform_6, window_bounds = array<i64: 16, 128>}]} {
    %c0_i32 = arith.constant 0 : i32
    %0 = arith.cmpi eq, %arg1, %c0_i32 : i32
    %1 = arith.extui %0 : i1 to i32
    %c0_i32_0 = arith.constant 0 : i32
    %2 = arith.cmpi ne, %1, %c0_i32_0 : i32
    scf.if %2 {
      %cst_102 = arith.constant 0.000000e+00 : f32
      %332 = vector.broadcast %cst_102 : f32 to vector<16x128xf32>
      %c0_103 = arith.constant 0 : index
      %c0_104 = arith.constant 0 : index
      %333 = vector.load %arg9[%c0_103, %c0_104] : memref<16x128xf32, #tpu.memory_space<vmem>>, vector<16x128xf32>
      tpu.vector_store %arg9[%c0_103, %c0_104], %332 {strides = array<i32>} : memref<16x128xf32, #tpu.memory_space<vmem>>, vector<16x128xf32>,
      %cst_105 = arith.constant 0.000000e+00 : f32
      %334 = vector.broadcast %cst_105 : f32 to vector<16x128xf32>
      %c0_106 = arith.constant 0 : index
      %c0_107 = arith.constant 0 : index
      %335 = vector.load %arg10[%c0_106, %c0_107] : memref<16x128xf32, #tpu.memory_space<vmem>>, vector<16x128xf32>
      tpu.vector_store %arg10[%c0_106, %c0_107], %334 {strides = array<i32>} : memref<16x128xf32, #tpu.memory_space<vmem>>, vector<16x128xf32>,
    } else {
    }
    %c0 = arith.constant 0 : index
    %c0_1 = arith.constant 0 : index
    %c0_2 = arith.constant 0 : index
    %3 = vector.load %arg2[%c0, %c0_1, %c0_2] : memref<8x16x128xbf16, #tpu.memory_space<vmem>>, vector<8x16x128xbf16>
    %4 = vector.shape_cast %3 : vector<8x16x128xbf16> to vector<128x128xbf16>
    %c0_3 = arith.constant 0 : index
    %c0_4 = arith.constant 0 : index
    %5 = vector.load %arg3[%c0_3, %c0_4] : memref<128x512xbf16, #tpu.memory_space<vmem>>, vector<128x512xbf16>
    %cst = arith.constant dense<0.000000e+00> : vector<128x512xf32>
    %6 = tpu.matmul %4, %5, %cst {dimension_numbers = #tpu.dot_dimension_numbers<[1], [0], [0], [1], [0, 0, 1, 1], [], []>} : vector<128x128xbf16>, vector<128x512xbf16>, vector<128x512xf32> -> vector<128x512xf32>
    %c0_5 = arith.constant 0 : index
    %c0_6 = arith.constant 0 : index
    %7 = vector.load %arg5[%c0_5, %c0_6] : memref<1x512xf32, #tpu.memory_space<vmem>>, vector<1x512xf32>
    %8 = vector.broadcast %7 : vector<1x512xf32> to vector<128x512xf32>
    %9 = arith.addf %6, %8 : vector<128x512xf32>
    %c0_7 = arith.constant 0 : index
    %c0_8 = arith.constant 0 : index
    %10 = vector.load %arg11[%c0_7, %c0_8] : memref<128x512xf32, #tpu.memory_space<vmem>>, vector<128x512xf32>
    tpu.vector_store %arg11[%c0_7, %c0_8], %9 {strides = array<i32>} : memref<128x512xf32, #tpu.memory_space<vmem>>, vector<128x512xf32>,
    %c0_9 = arith.constant 0 : index
    %c0_10 = arith.constant 0 : index
    %11 = vector.load %arg4[%c0_9, %c0_10] : memref<128x512xbf16, #tpu.memory_space<vmem>>, vector<128x512xbf16>
    %c8_i32 = arith.constant 8 : i32
    %12 = arith.muli %arg1, %c8_i32 : i32
    %c0_11 = arith.constant 0 : index
    %c0_12 = arith.constant 0 : index
    %13 = vector.load %arg9[%c0_11, %c0_12] : memref<16x128xf32, #tpu.memory_space<vmem>>, vector<16x128xf32>
    %c0_13 = arith.constant 0 : index
    %c0_14 = arith.constant 0 : index
    %14 = vector.load %arg10[%c0_13, %c0_14] : memref<16x128xf32, #tpu.memory_space<vmem>>, vector<16x128xf32>
    %c0_i32_15 = arith.constant 0 : i32
    %c16_i32 = arith.constant 16 : i32
    %15 = arith.muli %c0_i32_15, %c16_i32 : i32
    %16 = tpu.assume_multiple %15, 16 : i32
    %17 = arith.index_cast %16 : i32 to index
    %c0_16 = arith.constant 0 : index
    %18 = vector.load %arg11[%17, %c0_16] : memref<128x512xf32, #tpu.memory_space<vmem>>, vector<16x512xf32>
    %19 = arith.truncf %13 : vector<16x128xf32> to vector<16x128xbf16>
    %cst_17 = arith.constant dense<0.000000e+00> : vector<16x512xf32>
    %20 = tpu.matmul %19, %11, %cst_17 {dimension_numbers = #tpu.dot_dimension_numbers<[1], [0], [0], [1], [0, 0, 1, 1], [], []>} : vector<16x128xbf16>, vector<128x512xbf16>, vector<16x512xf32> -> vector<16x512xf32>
    %21 = arith.addf %18, %20 : vector<16x512xf32>
    %22 = vector.extract_strided_slice %21 {offsets = [0, 0], sizes = [16, 128], strides = [1, 1]} : vector<16x512xf32> to vector<16x128xf32>
    %cst_18 = arith.constant 0.000000e+00 : f32
    %23 = vector.broadcast %cst_18 : f32 to vector<16x128xf32>
    %24 = arith.subf %23, %22 : vector<16x128xf32>
    %25 = math.exp %24 : vector<16x128xf32>
    %cst_19 = arith.constant 1.000000e+00 : f32
    %26 = vector.broadcast %cst_19 : f32 to vector<16x128xf32>
    %27 = arith.addf %26, %25 : vector<16x128xf32>
    %28 = tpu.reciprocal %27 {approx = true} : vector<16x128xf32> -> vector<16x128xf32>
    %29 = vector.extract_strided_slice %21 {offsets = [0, 256], sizes = [16, 128], strides = [1, 1]} : vector<16x512xf32> to vector<16x128xf32>
    %30 = math.tanh %29 : vector<16x128xf32>
    %31 = vector.extract_strided_slice %21 {offsets = [0, 128], sizes = [16, 128], strides = [1, 1]} : vector<16x512xf32> to vector<16x128xf32>
    %cst_20 = arith.constant 0.000000e+00 : f32
    %32 = vector.broadcast %cst_20 : f32 to vector<16x128xf32>
    %33 = arith.subf %32, %31 : vector<16x128xf32>
    %34 = math.exp %33 : vector<16x128xf32>
    %cst_21 = arith.constant 1.000000e+00 : f32
    %35 = vector.broadcast %cst_21 : f32 to vector<16x128xf32>
    %36 = arith.addf %35, %34 : vector<16x128xf32>
    %37 = tpu.reciprocal %36 {approx = true} : vector<16x128xf32> -> vector<16x128xf32>
    %38 = arith.mulf %37, %14 : vector<16x128xf32>
    %39 = arith.mulf %28, %30 : vector<16x128xf32>
    %40 = arith.addf %38, %39 : vector<16x128xf32>
    %41 = vector.extract_strided_slice %21 {offsets = [0, 384], sizes = [16, 128], strides = [1, 1]} : vector<16x512xf32> to vector<16x128xf32>
    %cst_22 = arith.constant 0.000000e+00 : f32
    %42 = vector.broadcast %cst_22 : f32 to vector<16x128xf32>
    %43 = arith.subf %42, %41 : vector<16x128xf32>
    %44 = math.exp %43 : vector<16x128xf32>
    %cst_23 = arith.constant 1.000000e+00 : f32
    %45 = vector.broadcast %cst_23 : f32 to vector<16x128xf32>
    %46 = arith.addf %45, %44 : vector<16x128xf32>
    %47 = tpu.reciprocal %46 {approx = true} : vector<16x128xf32> -> vector<16x128xf32>
    %48 = math.tanh %40 : vector<16x128xf32>
    %49 = arith.mulf %47, %48 : vector<16x128xf32>
    %50 = arith.addi %12, %c0_i32_15 : i32
    %c8_i32_24 = arith.constant 8 : i32
    %51 = arith.cmpi slt, %50, %c8_i32_24 : i32
    %52 = arith.select %51, %49, %13 : vector<16x128xf32>
    %53 = arith.select %51, %40, %14 : vector<16x128xf32>
    %c1_i32 = arith.constant 1 : i32
    %c16_i32_25 = arith.constant 16 : i32
    %54 = arith.muli %c1_i32, %c16_i32_25 : i32
    %55 = tpu.assume_multiple %54, 16 : i32
    %56 = arith.index_cast %55 : i32 to index
    %c0_26 = arith.constant 0 : index
    %57 = vector.load %arg11[%56, %c0_26] : memref<128x512xf32, #tpu.memory_space<vmem>>, vector<16x512xf32>
    %58 = arith.truncf %52 : vector<16x128xf32> to vector<16x128xbf16>
    %cst_27 = arith.constant dense<0.000000e+00> : vector<16x512xf32>
    %59 = tpu.matmul %58, %11, %cst_27 {dimension_numbers = #tpu.dot_dimension_numbers<[1], [0], [0], [1], [0, 0, 1, 1], [], []>} : vector<16x128xbf16>, vector<128x512xbf16>, vector<16x512xf32> -> vector<16x512xf32>
    %60 = arith.addf %57, %59 : vector<16x512xf32>
    %61 = vector.extract_strided_slice %60 {offsets = [0, 0], sizes = [16, 128], strides = [1, 1]} : vector<16x512xf32> to vector<16x128xf32>
    %cst_28 = arith.constant 0.000000e+00 : f32
    %62 = vector.broadcast %cst_28 : f32 to vector<16x128xf32>
    %63 = arith.subf %62, %61 : vector<16x128xf32>
    %64 = math.exp %63 : vector<16x128xf32>
    %cst_29 = arith.constant 1.000000e+00 : f32
    %65 = vector.broadcast %cst_29 : f32 to vector<16x128xf32>
    %66 = arith.addf %65, %64 : vector<16x128xf32>
    %67 = tpu.reciprocal %66 {approx = true} : vector<16x128xf32> -> vector<16x128xf32>
    %68 = vector.extract_strided_slice %60 {offsets = [0, 256], sizes = [16, 128], strides = [1, 1]} : vector<16x512xf32> to vector<16x128xf32>
    %69 = math.tanh %68 : vector<16x128xf32>
    %70 = vector.extract_strided_slice %60 {offsets = [0, 128], sizes = [16, 128], strides = [1, 1]} : vector<16x512xf32> to vector<16x128xf32>
    %cst_30 = arith.constant 0.000000e+00 : f32
    %71 = vector.broadcast %cst_30 : f32 to vector<16x128xf32>
    %72 = arith.subf %71, %70 : vector<16x128xf32>
    %73 = math.exp %72 : vector<16x128xf32>
    %cst_31 = arith.constant 1.000000e+00 : f32
    %74 = vector.broadcast %cst_31 : f32 to vector<16x128xf32>
    %75 = arith.addf %74, %73 : vector<16x128xf32>
    %76 = tpu.reciprocal %75 {approx = true} : vector<16x128xf32> -> vector<16x128xf32>
    %77 = arith.mulf %76, %53 : vector<16x128xf32>
    %78 = arith.mulf %67, %69 : vector<16x128xf32>
    %79 = arith.addf %77, %78 : vector<16x128xf32>
    %80 = vector.extract_strided_slice %60 {offsets = [0, 384], sizes = [16, 128], strides = [1, 1]} : vector<16x512xf32> to vector<16x128xf32>
    %cst_32 = arith.constant 0.000000e+00 : f32
    %81 = vector.broadcast %cst_32 : f32 to vector<16x128xf32>
    %82 = arith.subf %81, %80 : vector<16x128xf32>
    %83 = math.exp %82 : vector<16x128xf32>
    %cst_33 = arith.constant 1.000000e+00 : f32
    %84 = vector.broadcast %cst_33 : f32 to vector<16x128xf32>
    %85 = arith.addf %84, %83 : vector<16x128xf32>
    %86 = tpu.reciprocal %85 {approx = true} : vector<16x128xf32> -> vector<16x128xf32>
    %87 = math.tanh %79 : vector<16x128xf32>
    %88 = arith.mulf %86, %87 : vector<16x128xf32>
    %89 = arith.addi %12, %c1_i32 : i32
    %c8_i32_34 = arith.constant 8 : i32
    %90 = arith.cmpi slt, %89, %c8_i32_34 : i32
    %91 = arith.select %90, %88, %52 : vector<16x128xf32>
    %92 = arith.select %90, %79, %53 : vector<16x128xf32>
    %c2_i32 = arith.constant 2 : i32
    %c16_i32_35 = arith.constant 16 : i32
    %93 = arith.muli %c2_i32, %c16_i32_35 : i32
    %94 = tpu.assume_multiple %93, 16 : i32
    %95 = arith.index_cast %94 : i32 to index
    %c0_36 = arith.constant 0 : index
    %96 = vector.load %arg11[%95, %c0_36] : memref<128x512xf32, #tpu.memory_space<vmem>>, vector<16x512xf32>
    %97 = arith.truncf %91 : vector<16x128xf32> to vector<16x128xbf16>
    %cst_37 = arith.constant dense<0.000000e+00> : vector<16x512xf32>
    %98 = tpu.matmul %97, %11, %cst_37 {dimension_numbers = #tpu.dot_dimension_numbers<[1], [0], [0], [1], [0, 0, 1, 1], [], []>} : vector<16x128xbf16>, vector<128x512xbf16>, vector<16x512xf32> -> vector<16x512xf32>
    %99 = arith.addf %96, %98 : vector<16x512xf32>
    %100 = vector.extract_strided_slice %99 {offsets = [0, 0], sizes = [16, 128], strides = [1, 1]} : vector<16x512xf32> to vector<16x128xf32>
    %cst_38 = arith.constant 0.000000e+00 : f32
    %101 = vector.broadcast %cst_38 : f32 to vector<16x128xf32>
    %102 = arith.subf %101, %100 : vector<16x128xf32>
    %103 = math.exp %102 : vector<16x128xf32>
    %cst_39 = arith.constant 1.000000e+00 : f32
    %104 = vector.broadcast %cst_39 : f32 to vector<16x128xf32>
    %105 = arith.addf %104, %103 : vector<16x128xf32>
    %106 = tpu.reciprocal %105 {approx = true} : vector<16x128xf32> -> vector<16x128xf32>
    %107 = vector.extract_strided_slice %99 {offsets = [0, 256], sizes = [16, 128], strides = [1, 1]} : vector<16x512xf32> to vector<16x128xf32>
    %108 = math.tanh %107 : vector<16x128xf32>
    %109 = vector.extract_strided_slice %99 {offsets = [0, 128], sizes = [16, 128], strides = [1, 1]} : vector<16x512xf32> to vector<16x128xf32>
    %cst_40 = arith.constant 0.000000e+00 : f32
    %110 = vector.broadcast %cst_40 : f32 to vector<16x128xf32>
    %111 = arith.subf %110, %109 : vector<16x128xf32>
    %112 = math.exp %111 : vector<16x128xf32>
    %cst_41 = arith.constant 1.000000e+00 : f32
    %113 = vector.broadcast %cst_41 : f32 to vector<16x128xf32>
    %114 = arith.addf %113, %112 : vector<16x128xf32>
    %115 = tpu.reciprocal %114 {approx = true} : vector<16x128xf32> -> vector<16x128xf32>
    %116 = arith.mulf %115, %92 : vector<16x128xf32>
    %117 = arith.mulf %106, %108 : vector<16x128xf32>
    %118 = arith.addf %116, %117 : vector<16x128xf32>
    %119 = vector.extract_strided_slice %99 {offsets = [0, 384], sizes = [16, 128], strides = [1, 1]} : vector<16x512xf32> to vector<16x128xf32>
    %cst_42 = arith.constant 0.000000e+00 : f32
    %120 = vector.broadcast %cst_42 : f32 to vector<16x128xf32>
    %121 = arith.subf %120, %119 : vector<16x128xf32>
    %122 = math.exp %121 : vector<16x128xf32>
    %cst_43 = arith.constant 1.000000e+00 : f32
    %123 = vector.broadcast %cst_43 : f32 to vector<16x128xf32>
    %124 = arith.addf %123, %122 : vector<16x128xf32>
    %125 = tpu.reciprocal %124 {approx = true} : vector<16x128xf32> -> vector<16x128xf32>
    %126 = math.tanh %118 : vector<16x128xf32>
    %127 = arith.mulf %125, %126 : vector<16x128xf32>
    %128 = arith.addi %12, %c2_i32 : i32
    %c8_i32_44 = arith.constant 8 : i32
    %129 = arith.cmpi slt, %128, %c8_i32_44 : i32
    %130 = arith.select %129, %127, %91 : vector<16x128xf32>
    %131 = arith.select %129, %118, %92 : vector<16x128xf32>
    %c3_i32 = arith.constant 3 : i32
    %c16_i32_45 = arith.constant 16 : i32
    %132 = arith.muli %c3_i32, %c16_i32_45 : i32
    %133 = tpu.assume_multiple %132, 16 : i32
    %134 = arith.index_cast %133 : i32 to index
    %c0_46 = arith.constant 0 : index
    %135 = vector.load %arg11[%134, %c0_46] : memref<128x512xf32, #tpu.memory_space<vmem>>, vector<16x512xf32>
    %136 = arith.truncf %130 : vector<16x128xf32> to vector<16x128xbf16>
    %cst_47 = arith.constant dense<0.000000e+00> : vector<16x512xf32>
    %137 = tpu.matmul %136, %11, %cst_47 {dimension_numbers = #tpu.dot_dimension_numbers<[1], [0], [0], [1], [0, 0, 1, 1], [], []>} : vector<16x128xbf16>, vector<128x512xbf16>, vector<16x512xf32> -> vector<16x512xf32>
    %138 = arith.addf %135, %137 : vector<16x512xf32>
    %139 = vector.extract_strided_slice %138 {offsets = [0, 0], sizes = [16, 128], strides = [1, 1]} : vector<16x512xf32> to vector<16x128xf32>
    %cst_48 = arith.constant 0.000000e+00 : f32
    %140 = vector.broadcast %cst_48 : f32 to vector<16x128xf32>
    %141 = arith.subf %140, %139 : vector<16x128xf32>
    %142 = math.exp %141 : vector<16x128xf32>
    %cst_49 = arith.constant 1.000000e+00 : f32
    %143 = vector.broadcast %cst_49 : f32 to vector<16x128xf32>
    %144 = arith.addf %143, %142 : vector<16x128xf32>
    %145 = tpu.reciprocal %144 {approx = true} : vector<16x128xf32> -> vector<16x128xf32>
    %146 = vector.extract_strided_slice %138 {offsets = [0, 256], sizes = [16, 128], strides = [1, 1]} : vector<16x512xf32> to vector<16x128xf32>
    %147 = math.tanh %146 : vector<16x128xf32>
    %148 = vector.extract_strided_slice %138 {offsets = [0, 128], sizes = [16, 128], strides = [1, 1]} : vector<16x512xf32> to vector<16x128xf32>
    %cst_50 = arith.constant 0.000000e+00 : f32
    %149 = vector.broadcast %cst_50 : f32 to vector<16x128xf32>
    %150 = arith.subf %149, %148 : vector<16x128xf32>
    %151 = math.exp %150 : vector<16x128xf32>
    %cst_51 = arith.constant 1.000000e+00 : f32
    %152 = vector.broadcast %cst_51 : f32 to vector<16x128xf32>
    %153 = arith.addf %152, %151 : vector<16x128xf32>
    %154 = tpu.reciprocal %153 {approx = true} : vector<16x128xf32> -> vector<16x128xf32>
    %155 = arith.mulf %154, %131 : vector<16x128xf32>
    %156 = arith.mulf %145, %147 : vector<16x128xf32>
    %157 = arith.addf %155, %156 : vector<16x128xf32>
    %158 = vector.extract_strided_slice %138 {offsets = [0, 384], sizes = [16, 128], strides = [1, 1]} : vector<16x512xf32> to vector<16x128xf32>
    %cst_52 = arith.constant 0.000000e+00 : f32
    %159 = vector.broadcast %cst_52 : f32 to vector<16x128xf32>
    %160 = arith.subf %159, %158 : vector<16x128xf32>
    %161 = math.exp %160 : vector<16x128xf32>
    %cst_53 = arith.constant 1.000000e+00 : f32
    %162 = vector.broadcast %cst_53 : f32 to vector<16x128xf32>
    %163 = arith.addf %162, %161 : vector<16x128xf32>
    %164 = tpu.reciprocal %163 {approx = true} : vector<16x128xf32> -> vector<16x128xf32>
    %165 = math.tanh %157 : vector<16x128xf32>
    %166 = arith.mulf %164, %165 : vector<16x128xf32>
    %167 = arith.addi %12, %c3_i32 : i32
    %c8_i32_54 = arith.constant 8 : i32
    %168 = arith.cmpi slt, %167, %c8_i32_54 : i32
    %169 = arith.select %168, %166, %130 : vector<16x128xf32>
    %170 = arith.select %168, %157, %131 : vector<16x128xf32>
    %c4_i32 = arith.constant 4 : i32
    %c16_i32_55 = arith.constant 16 : i32
    %171 = arith.muli %c4_i32, %c16_i32_55 : i32
    %172 = tpu.assume_multiple %171, 16 : i32
    %173 = arith.index_cast %172 : i32 to index
    %c0_56 = arith.constant 0 : index
    %174 = vector.load %arg11[%173, %c0_56] : memref<128x512xf32, #tpu.memory_space<vmem>>, vector<16x512xf32>
    %175 = arith.truncf %169 : vector<16x128xf32> to vector<16x128xbf16>
    %cst_57 = arith.constant dense<0.000000e+00> : vector<16x512xf32>
    %176 = tpu.matmul %175, %11, %cst_57 {dimension_numbers = #tpu.dot_dimension_numbers<[1], [0], [0], [1], [0, 0, 1, 1], [], []>} : vector<16x128xbf16>, vector<128x512xbf16>, vector<16x512xf32> -> vector<16x512xf32>
    %177 = arith.addf %174, %176 : vector<16x512xf32>
    %178 = vector.extract_strided_slice %177 {offsets = [0, 0], sizes = [16, 128], strides = [1, 1]} : vector<16x512xf32> to vector<16x128xf32>
    %cst_58 = arith.constant 0.000000e+00 : f32
    %179 = vector.broadcast %cst_58 : f32 to vector<16x128xf32>
    %180 = arith.subf %179, %178 : vector<16x128xf32>
    %181 = math.exp %180 : vector<16x128xf32>
    %cst_59 = arith.constant 1.000000e+00 : f32
    %182 = vector.broadcast %cst_59 : f32 to vector<16x128xf32>
    %183 = arith.addf %182, %181 : vector<16x128xf32>
    %184 = tpu.reciprocal %183 {approx = true} : vector<16x128xf32> -> vector<16x128xf32>
    %185 = vector.extract_strided_slice %177 {offsets = [0, 256], sizes = [16, 128], strides = [1, 1]} : vector<16x512xf32> to vector<16x128xf32>
    %186 = math.tanh %185 : vector<16x128xf32>
    %187 = vector.extract_strided_slice %177 {offsets = [0, 128], sizes = [16, 128], strides = [1, 1]} : vector<16x512xf32> to vector<16x128xf32>
    %cst_60 = arith.constant 0.000000e+00 : f32
    %188 = vector.broadcast %cst_60 : f32 to vector<16x128xf32>
    %189 = arith.subf %188, %187 : vector<16x128xf32>
    %190 = math.exp %189 : vector<16x128xf32>
    %cst_61 = arith.constant 1.000000e+00 : f32
    %191 = vector.broadcast %cst_61 : f32 to vector<16x128xf32>
    %192 = arith.addf %191, %190 : vector<16x128xf32>
    %193 = tpu.reciprocal %192 {approx = true} : vector<16x128xf32> -> vector<16x128xf32>
    %194 = arith.mulf %193, %170 : vector<16x128xf32>
    %195 = arith.mulf %184, %186 : vector<16x128xf32>
    %196 = arith.addf %194, %195 : vector<16x128xf32>
    %197 = vector.extract_strided_slice %177 {offsets = [0, 384], sizes = [16, 128], strides = [1, 1]} : vector<16x512xf32> to vector<16x128xf32>
    %cst_62 = arith.constant 0.000000e+00 : f32
    %198 = vector.broadcast %cst_62 : f32 to vector<16x128xf32>
    %199 = arith.subf %198, %197 : vector<16x128xf32>
    %200 = math.exp %199 : vector<16x128xf32>
    %cst_63 = arith.constant 1.000000e+00 : f32
    %201 = vector.broadcast %cst_63 : f32 to vector<16x128xf32>
    %202 = arith.addf %201, %200 : vector<16x128xf32>
    %203 = tpu.reciprocal %202 {approx = true} : vector<16x128xf32> -> vector<16x128xf32>
    %204 = math.tanh %196 : vector<16x128xf32>
    %205 = arith.mulf %203, %204 : vector<16x128xf32>
    %206 = arith.addi %12, %c4_i32 : i32
    %c8_i32_64 = arith.constant 8 : i32
    %207 = arith.cmpi slt, %206, %c8_i32_64 : i32
    %208 = arith.select %207, %205, %169 : vector<16x128xf32>
    %209 = arith.select %207, %196, %170 : vector<16x128xf32>
    %c5_i32 = arith.constant 5 : i32
    %c16_i32_65 = arith.constant 16 : i32
    %210 = arith.muli %c5_i32, %c16_i32_65 : i32
    %211 = tpu.assume_multiple %210, 16 : i32
    %212 = arith.index_cast %211 : i32 to index
    %c0_66 = arith.constant 0 : index
    %213 = vector.load %arg11[%212, %c0_66] : memref<128x512xf32, #tpu.memory_space<vmem>>, vector<16x512xf32>
    %214 = arith.truncf %208 : vector<16x128xf32> to vector<16x128xbf16>
    %cst_67 = arith.constant dense<0.000000e+00> : vector<16x512xf32>
    %215 = tpu.matmul %214, %11, %cst_67 {dimension_numbers = #tpu.dot_dimension_numbers<[1], [0], [0], [1], [0, 0, 1, 1], [], []>} : vector<16x128xbf16>, vector<128x512xbf16>, vector<16x512xf32> -> vector<16x512xf32>
    %216 = arith.addf %213, %215 : vector<16x512xf32>
    %217 = vector.extract_strided_slice %216 {offsets = [0, 0], sizes = [16, 128], strides = [1, 1]} : vector<16x512xf32> to vector<16x128xf32>
    %cst_68 = arith.constant 0.000000e+00 : f32
    %218 = vector.broadcast %cst_68 : f32 to vector<16x128xf32>
    %219 = arith.subf %218, %217 : vector<16x128xf32>
    %220 = math.exp %219 : vector<16x128xf32>
    %cst_69 = arith.constant 1.000000e+00 : f32
    %221 = vector.broadcast %cst_69 : f32 to vector<16x128xf32>
    %222 = arith.addf %221, %220 : vector<16x128xf32>
    %223 = tpu.reciprocal %222 {approx = true} : vector<16x128xf32> -> vector<16x128xf32>
    %224 = vector.extract_strided_slice %216 {offsets = [0, 256], sizes = [16, 128], strides = [1, 1]} : vector<16x512xf32> to vector<16x128xf32>
    %225 = math.tanh %224 : vector<16x128xf32>
    %226 = vector.extract_strided_slice %216 {offsets = [0, 128], sizes = [16, 128], strides = [1, 1]} : vector<16x512xf32> to vector<16x128xf32>
    %cst_70 = arith.constant 0.000000e+00 : f32
    %227 = vector.broadcast %cst_70 : f32 to vector<16x128xf32>
    %228 = arith.subf %227, %226 : vector<16x128xf32>
    %229 = math.exp %228 : vector<16x128xf32>
    %cst_71 = arith.constant 1.000000e+00 : f32
    %230 = vector.broadcast %cst_71 : f32 to vector<16x128xf32>
    %231 = arith.addf %230, %229 : vector<16x128xf32>
    %232 = tpu.reciprocal %231 {approx = true} : vector<16x128xf32> -> vector<16x128xf32>
    %233 = arith.mulf %232, %209 : vector<16x128xf32>
    %234 = arith.mulf %223, %225 : vector<16x128xf32>
    %235 = arith.addf %233, %234 : vector<16x128xf32>
    %236 = vector.extract_strided_slice %216 {offsets = [0, 384], sizes = [16, 128], strides = [1, 1]} : vector<16x512xf32> to vector<16x128xf32>
    %cst_72 = arith.constant 0.000000e+00 : f32
    %237 = vector.broadcast %cst_72 : f32 to vector<16x128xf32>
    %238 = arith.subf %237, %236 : vector<16x128xf32>
    %239 = math.exp %238 : vector<16x128xf32>
    %cst_73 = arith.constant 1.000000e+00 : f32
    %240 = vector.broadcast %cst_73 : f32 to vector<16x128xf32>
    %241 = arith.addf %240, %239 : vector<16x128xf32>
    %242 = tpu.reciprocal %241 {approx = true} : vector<16x128xf32> -> vector<16x128xf32>
    %243 = math.tanh %235 : vector<16x128xf32>
    %244 = arith.mulf %242, %243 : vector<16x128xf32>
    %245 = arith.addi %12, %c5_i32 : i32
    %c8_i32_74 = arith.constant 8 : i32
    %246 = arith.cmpi slt, %245, %c8_i32_74 : i32
    %247 = arith.select %246, %244, %208 : vector<16x128xf32>
    %248 = arith.select %246, %235, %209 : vector<16x128xf32>
    %c6_i32 = arith.constant 6 : i32
    %c16_i32_75 = arith.constant 16 : i32
    %249 = arith.muli %c6_i32, %c16_i32_75 : i32
    %250 = tpu.assume_multiple %249, 16 : i32
    %251 = arith.index_cast %250 : i32 to index
    %c0_76 = arith.constant 0 : index
    %252 = vector.load %arg11[%251, %c0_76] : memref<128x512xf32, #tpu.memory_space<vmem>>, vector<16x512xf32>
    %253 = arith.truncf %247 : vector<16x128xf32> to vector<16x128xbf16>
    %cst_77 = arith.constant dense<0.000000e+00> : vector<16x512xf32>
    %254 = tpu.matmul %253, %11, %cst_77 {dimension_numbers = #tpu.dot_dimension_numbers<[1], [0], [0], [1], [0, 0, 1, 1], [], []>} : vector<16x128xbf16>, vector<128x512xbf16>, vector<16x512xf32> -> vector<16x512xf32>
    %255 = arith.addf %252, %254 : vector<16x512xf32>
    %256 = vector.extract_strided_slice %255 {offsets = [0, 0], sizes = [16, 128], strides = [1, 1]} : vector<16x512xf32> to vector<16x128xf32>
    %cst_78 = arith.constant 0.000000e+00 : f32
    %257 = vector.broadcast %cst_78 : f32 to vector<16x128xf32>
    %258 = arith.subf %257, %256 : vector<16x128xf32>
    %259 = math.exp %258 : vector<16x128xf32>
    %cst_79 = arith.constant 1.000000e+00 : f32
    %260 = vector.broadcast %cst_79 : f32 to vector<16x128xf32>
    %261 = arith.addf %260, %259 : vector<16x128xf32>
    %262 = tpu.reciprocal %261 {approx = true} : vector<16x128xf32> -> vector<16x128xf32>
    %263 = vector.extract_strided_slice %255 {offsets = [0, 256], sizes = [16, 128], strides = [1, 1]} : vector<16x512xf32> to vector<16x128xf32>
    %264 = math.tanh %263 : vector<16x128xf32>
    %265 = vector.extract_strided_slice %255 {offsets = [0, 128], sizes = [16, 128], strides = [1, 1]} : vector<16x512xf32> to vector<16x128xf32>
    %cst_80 = arith.constant 0.000000e+00 : f32
    %266 = vector.broadcast %cst_80 : f32 to vector<16x128xf32>
    %267 = arith.subf %266, %265 : vector<16x128xf32>
    %268 = math.exp %267 : vector<16x128xf32>
    %cst_81 = arith.constant 1.000000e+00 : f32
    %269 = vector.broadcast %cst_81 : f32 to vector<16x128xf32>
    %270 = arith.addf %269, %268 : vector<16x128xf32>
    %271 = tpu.reciprocal %270 {approx = true} : vector<16x128xf32> -> vector<16x128xf32>
    %272 = arith.mulf %271, %248 : vector<16x128xf32>
    %273 = arith.mulf %262, %264 : vector<16x128xf32>
    %274 = arith.addf %272, %273 : vector<16x128xf32>
    %275 = vector.extract_strided_slice %255 {offsets = [0, 384], sizes = [16, 128], strides = [1, 1]} : vector<16x512xf32> to vector<16x128xf32>
    %cst_82 = arith.constant 0.000000e+00 : f32
    %276 = vector.broadcast %cst_82 : f32 to vector<16x128xf32>
    %277 = arith.subf %276, %275 : vector<16x128xf32>
    %278 = math.exp %277 : vector<16x128xf32>
    %cst_83 = arith.constant 1.000000e+00 : f32
    %279 = vector.broadcast %cst_83 : f32 to vector<16x128xf32>
    %280 = arith.addf %279, %278 : vector<16x128xf32>
    %281 = tpu.reciprocal %280 {approx = true} : vector<16x128xf32> -> vector<16x128xf32>
    %282 = math.tanh %274 : vector<16x128xf32>
    %283 = arith.mulf %281, %282 : vector<16x128xf32>
    %284 = arith.addi %12, %c6_i32 : i32
    %c8_i32_84 = arith.constant 8 : i32
    %285 = arith.cmpi slt, %284, %c8_i32_84 : i32
    %286 = arith.select %285, %283, %247 : vector<16x128xf32>
    %287 = arith.select %285, %274, %248 : vector<16x128xf32>
    %c7_i32 = arith.constant 7 : i32
    %c16_i32_85 = arith.constant 16 : i32
    %288 = arith.muli %c7_i32, %c16_i32_85 : i32
    %289 = tpu.assume_multiple %288, 16 : i32
    %290 = arith.index_cast %289 : i32 to index
    %c0_86 = arith.constant 0 : index
    %291 = vector.load %arg11[%290, %c0_86] : memref<128x512xf32, #tpu.memory_space<vmem>>, vector<16x512xf32>
    %292 = arith.truncf %286 : vector<16x128xf32> to vector<16x128xbf16>
    %cst_87 = arith.constant dense<0.000000e+00> : vector<16x512xf32>
    %293 = tpu.matmul %292, %11, %cst_87 {dimension_numbers = #tpu.dot_dimension_numbers<[1], [0], [0], [1], [0, 0, 1, 1], [], []>} : vector<16x128xbf16>, vector<128x512xbf16>, vector<16x512xf32> -> vector<16x512xf32>
    %294 = arith.addf %291, %293 : vector<16x512xf32>
    %295 = vector.extract_strided_slice %294 {offsets = [0, 0], sizes = [16, 128], strides = [1, 1]} : vector<16x512xf32> to vector<16x128xf32>
    %cst_88 = arith.constant 0.000000e+00 : f32
    %296 = vector.broadcast %cst_88 : f32 to vector<16x128xf32>
    %297 = arith.subf %296, %295 : vector<16x128xf32>
    %298 = math.exp %297 : vector<16x128xf32>
    %cst_89 = arith.constant 1.000000e+00 : f32
    %299 = vector.broadcast %cst_89 : f32 to vector<16x128xf32>
    %300 = arith.addf %299, %298 : vector<16x128xf32>
    %301 = tpu.reciprocal %300 {approx = true} : vector<16x128xf32> -> vector<16x128xf32>
    %302 = vector.extract_strided_slice %294 {offsets = [0, 256], sizes = [16, 128], strides = [1, 1]} : vector<16x512xf32> to vector<16x128xf32>
    %303 = math.tanh %302 : vector<16x128xf32>
    %304 = vector.extract_strided_slice %294 {offsets = [0, 128], sizes = [16, 128], strides = [1, 1]} : vector<16x512xf32> to vector<16x128xf32>
    %cst_90 = arith.constant 0.000000e+00 : f32
    %305 = vector.broadcast %cst_90 : f32 to vector<16x128xf32>
    %306 = arith.subf %305, %304 : vector<16x128xf32>
    %307 = math.exp %306 : vector<16x128xf32>
    %cst_91 = arith.constant 1.000000e+00 : f32
    %308 = vector.broadcast %cst_91 : f32 to vector<16x128xf32>
    %309 = arith.addf %308, %307 : vector<16x128xf32>
    %310 = tpu.reciprocal %309 {approx = true} : vector<16x128xf32> -> vector<16x128xf32>
    %311 = arith.mulf %310, %287 : vector<16x128xf32>
    %312 = arith.mulf %301, %303 : vector<16x128xf32>
    %313 = arith.addf %311, %312 : vector<16x128xf32>
    %314 = vector.extract_strided_slice %294 {offsets = [0, 384], sizes = [16, 128], strides = [1, 1]} : vector<16x512xf32> to vector<16x128xf32>
    %cst_92 = arith.constant 0.000000e+00 : f32
    %315 = vector.broadcast %cst_92 : f32 to vector<16x128xf32>
    %316 = arith.subf %315, %314 : vector<16x128xf32>
    %317 = math.exp %316 : vector<16x128xf32>
    %cst_93 = arith.constant 1.000000e+00 : f32
    %318 = vector.broadcast %cst_93 : f32 to vector<16x128xf32>
    %319 = arith.addf %318, %317 : vector<16x128xf32>
    %320 = tpu.reciprocal %319 {approx = true} : vector<16x128xf32> -> vector<16x128xf32>
    %321 = math.tanh %313 : vector<16x128xf32>
    %322 = arith.mulf %320, %321 : vector<16x128xf32>
    %323 = arith.addi %12, %c7_i32 : i32
    %c8_i32_94 = arith.constant 8 : i32
    %324 = arith.cmpi slt, %323, %c8_i32_94 : i32
    %325 = arith.select %324, %322, %286 : vector<16x128xf32>
    %326 = arith.select %324, %313, %287 : vector<16x128xf32>
    %c8_i32_95 = arith.constant 8 : i32
    %c0_96 = arith.constant 0 : index
    %c0_97 = arith.constant 0 : index
    %327 = vector.load %arg9[%c0_96, %c0_97] : memref<16x128xf32, #tpu.memory_space<vmem>>, vector<16x128xf32>
    tpu.vector_store %arg9[%c0_96, %c0_97], %325 {strides = array<i32>} : memref<16x128xf32, #tpu.memory_space<vmem>>, vector<16x128xf32>,
    %c0_98 = arith.constant 0 : index
    %c0_99 = arith.constant 0 : index
    %328 = vector.load %arg10[%c0_98, %c0_99] : memref<16x128xf32, #tpu.memory_space<vmem>>, vector<16x128xf32>
    tpu.vector_store %arg10[%c0_98, %c0_99], %326 {strides = array<i32>} : memref<16x128xf32, #tpu.memory_space<vmem>>, vector<16x128xf32>,
    %c0_i32_100 = arith.constant 0 : i32
    %329 = arith.cmpi eq, %arg1, %c0_i32_100 : i32
    %330 = arith.extui %329 : i1 to i32
    %c0_i32_101 = arith.constant 0 : i32
    %331 = arith.cmpi ne, %330, %c0_i32_101 : i32
    scf.if %331 {
      %332 = arith.truncf %325 : vector<16x128xf32> to vector<16x128xbf16>
      %c0_102 = arith.constant 0 : index
      %c0_103 = arith.constant 0 : index
      %333 = vector.load %arg6[%c0_102, %c0_103] : memref<128x128xbf16, #tpu.memory_space<vmem>>, vector<128x128xbf16>
      %cst_104 = arith.constant dense<0.000000e+00> : vector<16x128xf32>
      %334 = tpu.matmul %332, %333, %cst_104 {dimension_numbers = #tpu.dot_dimension_numbers<[1], [0], [0], [1], [0, 0, 1, 1], [], []>} : vector<16x128xbf16>, vector<128x128xbf16>, vector<16x128xf32> -> vector<16x128xf32>
      %c0_105 = arith.constant 0 : index
      %c0_106 = arith.constant 0 : index
      %335 = vector.load %arg7[%c0_105, %c0_106] : memref<1x128xf32, #tpu.memory_space<vmem>>, vector<1x128xf32>
      %336 = vector.broadcast %335 : vector<1x128xf32> to vector<16x128xf32>
      %337 = arith.addf %334, %336 : vector<16x128xf32>
      %cst_107 = arith.constant 0.000000e+00 : f32
      %338 = vector.broadcast %cst_107 : f32 to vector<16x128xf32>
      %339 = arith.subf %338, %337 : vector<16x128xf32>
      %340 = math.exp %339 : vector<16x128xf32>
      %cst_108 = arith.constant 1.000000e+00 : f32
      %341 = vector.broadcast %cst_108 : f32 to vector<16x128xf32>
      %342 = arith.addf %341, %340 : vector<16x128xf32>
      %cst_109 = arith.constant 1.000000e+00 : f32
      %343 = vector.broadcast %cst_109 : f32 to vector<16x128xf32>
      %344 = arith.divf %343, %342 : vector<16x128xf32>
      %c0_110 = arith.constant 0 : index
      %c0_111 = arith.constant 0 : index
      %345 = vector.load %arg8[%c0_110, %c0_111] : memref<16x128xf32, #tpu.memory_space<vmem>>, vector<16x128xf32>
      tpu.vector_store %arg8[%c0_110, %c0_111], %344 {strides = array<i32>} : memref<16x128xf32, #tpu.memory_space<vmem>>, vector<16x128xf32>,
    } else {
    }
    return
  }
  func.func @transform_0(%arg0: i32, %arg1: i32) -> (i32, i32, i32) {
    %c0_i32 = arith.constant 0 : i32
    %c0_i32_0 = arith.constant 0 : i32
    return %arg1, %arg0, %c0_i32 : i32, i32, i32
  }
  func.func @transform_1(%arg0: i32, %arg1: i32) -> (i32, i32) {
    %c0_i32 = arith.constant 0 : i32
    %c0_i32_0 = arith.constant 0 : i32
    %c0_i32_1 = arith.constant 0 : i32
    return %c0_i32, %c0_i32_0 : i32, i32
  }
  func.func @transform_2(%arg0: i32, %arg1: i32) -> (i32, i32) {
    %c0_i32 = arith.constant 0 : i32
    %c0_i32_0 = arith.constant 0 : i32
    %c0_i32_1 = arith.constant 0 : i32
    return %c0_i32, %c0_i32_0 : i32, i32
  }
  func.func @transform_3(%arg0: i32, %arg1: i32) -> (i32, i32) {
    %c0_i32 = arith.constant 0 : i32
    %c0_i32_0 = arith.constant 0 : i32
    %c0_i32_1 = arith.constant 0 : i32
    return %c0_i32, %c0_i32_0 : i32, i32
  }
  func.func @transform_4(%arg0: i32, %arg1: i32) -> (i32, i32) {
    %c0_i32 = arith.constant 0 : i32
    %c0_i32_0 = arith.constant 0 : i32
    %c0_i32_1 = arith.constant 0 : i32
    return %c0_i32, %c0_i32_0 : i32, i32
  }
  func.func @transform_5(%arg0: i32, %arg1: i32) -> (i32, i32) {
    %c0_i32 = arith.constant 0 : i32
    %c0_i32_0 = arith.constant 0 : i32
    %c0_i32_1 = arith.constant 0 : i32
    return %c0_i32, %c0_i32_0 : i32, i32
  }
  func.func @transform_6(%arg0: i32, %arg1: i32) -> (i32, i32) {
    %c0_i32 = arith.constant 0 : i32
    %c0_i32_0 = arith.constant 0 : i32
    return %arg0, %c0_i32 : i32, i32
  }
}

</mosaic_0001>

<llo_original>
// kernel: tpu_custom_call.1
$region0: #{tpu_custom_call.1}
  #allocation0 [shape = 'u32[]', space=smem, size = 0x4, offset = 0x4, fixed_abs, tag = 'smem constant byte address 0x4 - core index']
  #allocation1 [shape = 'u32[144,128]{1,0:T(1,128)}', space=vmem, size = 0x12000, scoped, tag = 'internal scratch']
  #allocation2 [shape = 'f32[16,128]{1,0:T(8,128)}', space=vmem, size = 0x2000, scoped, tag = 'scratch operand']
  #allocation3 [shape = 'f32[16,128]{1,0:T(8,128)}', space=vmem, size = 0x2000, scoped, tag = 'scratch operand']
  #allocation4 [shape = 'f32[128,512]{1,0:T(8,128)}', space=vmem, size = 0x40000, scoped, tag = 'scratch operand']
  %s0 = inlined_call_operand.hbm [shape: bf16[8,16,128], index: 0, kind: input, shape index: {}]
  %s1 = inlined_call_operand.hbm [shape: bf16[128,512], index: 1, kind: input, shape index: {}]
  %s2 = inlined_call_operand.hbm [shape: bf16[128,512], index: 2, kind: input, shape index: {}]
  %s3 = inlined_call_operand.vmem [shape: f32[1,512], index: 3, kind: input, shape index: {}]
  %s4 = inlined_call_operand.hbm [shape: bf16[128,128], index: 4, kind: input, shape index: {}]
  %s5 = inlined_call_operand.vmem [shape: f32[1,128], index: 5, kind: input, shape index: {}]
  %s6 = inlined_call_operand.hbm [shape: f32[16,128], index: 6, kind: output, shape index: {}]
  %s7 = sld [smem:[#allocation0]]
  $region58: #{tpu_custom_call.1} parent=0
    _
  %s9 = ssub.s32 1, %s7
  %s10 = scalar_select 0, %s9, %s7
  $region1: #{tpu_custom_call.1} parent=0
    #allocation5 [shape = 'u8[32768]{0}', space=vmem, size = 0x8000, scoped, tag = 'input window, operand 0, single buffered']
    #allocation6 [shape = 's32[1]{0}', space=sflag, size = 0x4, scoped, tag = 'scoped memory for tpu_custom_call.1']
    #allocation7 [shape = 's32[1]{0}', space=sflag, size = 0x4, scoped, tag = 'scoped memory for tpu_custom_call.1']
    #allocation8 [shape = 'u8[131072]{0}', space=vmem, size = 0x20000, scoped, tag = 'input window, operand 1, single buffered']
    #allocation9 [shape = 's32[1]{0}', space=sflag, size = 0x4, scoped, tag = 'scoped memory for tpu_custom_call.1']
    #allocation10 [shape = 'u8[131072]{0}', space=vmem, size = 0x20000, scoped, tag = 'input window, operand 2, single buffered']
    #allocation11 [shape = 'u8[32768]{0}', space=vmem, size = 0x8000, scoped, tag = 'input window, operand 4, single buffered']
    #allocation12 [shape = 's32[1]{0}', space=sflag, size = 0x4, scoped, tag = 'scoped memory for tpu_custom_call.1']
    #allocation13 [shape = 'u8[8192]{0}', space=vmem, size = 0x2000, scoped, tag = 'output window, operand 0, single buffered']
    %11 = vsyncpa [#allocation6], 0
    %12 = vsyncpa [#allocation9], 0
    %13 = vsyncpa [#allocation12], 0
    %14 = vsyncpa [#allocation7], 0
    // Predicated region
    $region2: #{tpu_custom_call.1} parent=1 // pred_check
      _
    $region3: #{tpu_custom_call.1} parent=1 // pred_check_branch
      %16 = sbr.rel (0) target = $region5
    $region4: #{tpu_custom_call.1} parent=1 // pred_region
      %s18 = ssub.s32 1024, 1024
      %19 = vsyncadd [#allocation6], %s18
      %s20 = sshll.u32 [#allocation5], 4
      %s21 = int_to_ptr.vmem [resolvable:$true] %s20
      %26 = dma.hbm_to_vmem [thread:$0]  %s0, 1024, %s21, [#allocation6], 64, 64, 4
    $region5: #{tpu_custom_call.1} parent=1 // pred_fallthru
      _
    // Predicated region
    $region6: #{tpu_custom_call.1} parent=1 // pred_check
      _
    $region7: #{tpu_custom_call.1} parent=1 // pred_check_branch
      %28 = sbr.rel (0) target = $region9
    $region8: #{tpu_custom_call.1} parent=1 // pred_region
      %s30 = ssub.s32 4096, 4096
      %31 = vsyncadd [#allocation9], %s30
      %s32 = sshll.u32 [#allocation8], 4
      %s33 = int_to_ptr.vmem [resolvable:$true] %s32
      %38 = dma.hbm_to_vmem [thread:$0]  %s1, 4096, %s33, [#allocation9], 256, 256, 16
    $region9: #{tpu_custom_call.1} parent=1 // pred_fallthru
      _
    // Predicated region
    $region10: #{tpu_custom_call.1} parent=1 // pred_check
      _
    $region11: #{tpu_custom_call.1} parent=1 // pred_check_branch
      %40 = sbr.rel (0) target = $region13
    $region12: #{tpu_custom_call.1} parent=1 // pred_region
      %s42 = ssub.s32 4096, 4096
      %43 = vsyncadd [#allocation9], %s42
      %s44 = sshll.u32 [#allocation10], 4
      %s45 = int_to_ptr.vmem [resolvable:$true] %s44
      %50 = dma.hbm_to_vmem [thread:$0]  %s2, 4096, %s45, [#allocation9], 256, 256, 16
    $region13: #{tpu_custom_call.1} parent=1 // pred_fallthru
      _
    // Predicated region
    $region14: #{tpu_custom_call.1} parent=1 // pred_check
      _
    $region15: #{tpu_custom_call.1} parent=1 // pred_check_branch
      %52 = sbr.rel (0) target = $region17
    $region16: #{tpu_custom_call.1} parent=1 // pred_region
      _
    $region17: #{tpu_custom_call.1} parent=1 // pred_fallthru
      _
    // Predicated region
    $region18: #{tpu_custom_call.1} parent=1 // pred_check
      _
    $region19: #{tpu_custom_call.1} parent=1 // pred_check_branch
      %54 = sbr.rel (0) target = $region21
    $region20: #{tpu_custom_call.1} parent=1 // pred_region
      %s56 = ssub.s32 1024, 1024
      %57 = vsyncadd [#allocation12], %s56
      %s58 = sshll.u32 [#allocation11], 4
      %s59 = int_to_ptr.vmem [resolvable:$true] %s58
      %64 = dma.hbm_to_vmem [thread:$0]  %s4, 1024, %s59, [#allocation12], 64, 64, 4
    $region21: #{tpu_custom_call.1} parent=1 // pred_fallthru
      _
    // Predicated region
    $region22: #{tpu_custom_call.1} parent=1 // pred_check
      _
    $region23: #{tpu_custom_call.1} parent=1 // pred_check_branch
      %66 = sbr.rel (0) target = $region25
    $region24: #{tpu_custom_call.1} parent=1 // pred_region
      _
    $region25: #{tpu_custom_call.1} parent=1 // pred_fallthru
      _
    // Predicated region
    $region26: #{tpu_custom_call.1} parent=1 // pred_check
      _
    $region27: #{tpu_custom_call.1} parent=1 // pred_check_branch
      %68 = sbr.rel (0) target = $region29
    $region28: #{tpu_custom_call.1} parent=1 // pred_region
      %69 = dma.done [#allocation6], 1024
    $region29: #{tpu_custom_call.1} parent=1 // pred_fallthru
      _
    // Predicated region
    $region30: #{tpu_custom_call.1} parent=1 // pred_check
      _
    $region31: #{tpu_custom_call.1} parent=1 // pred_check_branch
      %71 = sbr.rel (0) target = $region33
    $region32: #{tpu_custom_call.1} parent=1 // pred_region
      %72 = dma.done [#allocation9], 4096
    $region33: #{tpu_custom_call.1} parent=1 // pred_fallthru
      _
    // Predicated region
    $region34: #{tpu_custom_call.1} parent=1 // pred_check
      _
    $region35: #{tpu_custom_call.1} parent=1 // pred_check_branch
      %74 = sbr.rel (0) target = $region37
    $region36: #{tpu_custom_call.1} parent=1 // pred_region
      %75 = dma.done [#allocation9], 4096
    $region37: #{tpu_custom_call.1} parent=1 // pred_fallthru
      _
    // Predicated region
    $region38: #{tpu_custom_call.1} parent=1 // pred_check
      _
    $region39: #{tpu_custom_call.1} parent=1 // pred_check_branch
      %77 = sbr.rel (0) target = $region41
    $region40: #{tpu_custom_call.1} parent=1 // pred_region
      %78 = dma.done [#allocation12], 1024
    $region41: #{tpu_custom_call.1} parent=1 // pred_fallthru
      _
    %p80 = scmp.eq.s32.totalorder 0, 0
    // Predicated region
    $region42: #{tpu_custom_call.1} parent=1 // pred_check
      %p81 = pneg %p80
    $region43: #{tpu_custom_call.1} parent=1 // pred_check_branch
      %83 = sbr.rel (%p81) target = $region45
    $region44: #{tpu_custom_call.1} parent=1 // pred_region
      %84 = vst [vmem:[#allocation2] sm:$0xff] 0.0
      %85 = vst [vmem:[#allocation2 + $0x8] sm:$0xff] 0.0
      %86 = vst [vmem:[#allocation3] sm:$0xff] 0.0
      %87 = vst [vmem:[#allocation3 + $0x8] sm:$0xff] 0.0
    $region45: #{tpu_custom_call.1} parent=1 // pred_fallthru
      _
    %v88 = vld [vmem:[#allocation5] sm:$0xf]
    %v89 = vld [vmem:[#allocation5 + $0x4] sm:$0xf]
    %v90 = vld [vmem:[#allocation5 + $0x8] sm:$0xf]
    %v91 = vld [vmem:[#allocation5 + $0xc] sm:$0xf]
    %v92 = vld [vmem:[#allocation5 + $0x10] sm:$0xf]
    %v93 = vld [vmem:[#allocation5 + $0x14] sm:$0xf]
    %v94 = vld [vmem:[#allocation5 + $0x18] sm:$0xf]
    %v95 = vld [vmem:[#allocation5 + $0x1c] sm:$0xf]
    %v96 = vld [vmem:[#allocation5 + $0x20] sm:$0xf]
    %v97 = vld [vmem:[#allocation5 + $0x24] sm:$0xf]
    %v98 = vld [vmem:[#allocation5 + $0x28] sm:$0xf]
    %v99 = vld [vmem:[#allocation5 + $0x2c] sm:$0xf]
    %v100 = vld [vmem:[#allocation5 + $0x30] sm:$0xf]
    %v101 = vld [vmem:[#allocation5 + $0x34] sm:$0xf]
    %v102 = vld [vmem:[#allocation5 + $0x38] sm:$0xf]
    %v103 = vld [vmem:[#allocation5 + $0x3c] sm:$0xf]
    %v104 = vld [vmem:[#allocation8] sm:$0xff]
    %v105 = vld [vmem:[#allocation8 + $0x8] sm:$0xff]
    %v106 = vld [vmem:[#allocation8 + $0x10] sm:$0xff]
    %v107 = vld [vmem:[#allocation8 + $0x18] sm:$0xff]
    %v108 = vld [vmem:[#allocation8 + $0x20] sm:$0xff]
    %v109 = vld [vmem:[#allocation8 + $0x28] sm:$0xff]
    %v110 = vld [vmem:[#allocation8 + $0x30] sm:$0xff]
    %v111 = vld [vmem:[#allocation8 + $0x38] sm:$0xff]
    %v112 = vld [vmem:[#allocation8 + $0x40] sm:$0xff]
    %v113 = vld [vmem:[#allocation8 + $0x48] sm:$0xff]
    %v114 = vld [vmem:[#allocation8 + $0x50] sm:$0xff]
    %v115 = vld [vmem:[#allocation8 + $0x58] sm:$0xff]
    %v116 = vld [vmem:[#allocation8 + $0x60] sm:$0xff]
    %v117 = vld [vmem:[#allocation8 + $0x68] sm:$0xff]
    %v118 = vld [vmem:[#allocation8 + $0x70] sm:$0xff]
    %v119 = vld [vmem:[#allocation8 + $0x78] sm:$0xff]
    %v120 = vld [vmem:[#allocation8 + $0x80] sm:$0xff]
    %v121 = vld [vmem:[#allocation8 + $0x88] sm:$0xff]
    %v122 = vld [vmem:[#allocation8 + $0x90] sm:$0xff]
    %v123 = vld [vmem:[#allocation8 + $0x98] sm:$0xff]
    %v124 = vld [vmem:[#allocation8 + $0xa0] sm:$0xff]
    %v125 = vld [vmem:[#allocation8 + $0xa8] sm:$0xff]
    %v126 = vld [vmem:[#allocation8 + $0xb0] sm:$0xff]
    %v127 = vld [vmem:[#allocation8 + $0xb8] sm:$0xff]
    %v128 = vld [vmem:[#allocation8 + $0xc0] sm:$0xff]
    %v129 = vld [vmem:[#allocation8 + $0xc8] sm:$0xff]
    %v130 = vld [vmem:[#allocation8 + $0xd0] sm:$0xff]
    %v131 = vld [vmem:[#allocation8 + $0xd8] sm:$0xff]
    %v132 = vld [vmem:[#allocation8 + $0xe0] sm:$0xff]
    %v133 = vld [vmem:[#allocation8 + $0xe8] sm:$0xff]
    %v134 = vld [vmem:[#allocation8 + $0xf0] sm:$0xff]
    %v135 = vld [vmem:[#allocation8 + $0xf8] sm:$0xff]
    %v136 = vld [vmem:[%s3] sm:$0xf]
    %v138 = vlaneseq
    %v139 = vshrl.u32 %v138, 7
    %v140 = vsub.s32 0, %v139
    %v141 = vrot.slane %v136, %v140
    %v142 = vlaneseq
    %v143 = vshrl.u32 %v142, 7
    %v144 = vsub.s32 1, %v143
    %v145 = vrot.slane %v136, %v144
    %v146 = vlaneseq
    %v147 = vshrl.u32 %v146, 7
    %v148 = vsub.s32 2, %v147
    %v149 = vrot.slane %v136, %v148
    %v150 = vlaneseq
    %v151 = vshrl.u32 %v150, 7
    %v152 = vsub.s32 3, %v151
    %v153 = vrot.slane %v136, %v152
    %v174 = vunpack.c.l.b16 %v88
    %v175 = vunpack.c.l.b16 %v89
    %v176 = vunpack.c.l.b16 %v90
    %v177 = vunpack.c.l.b16 %v91
    %v178 = vunpack.c.l.b16 %v92
    %v179 = vunpack.c.l.b16 %v93
    %v180 = vunpack.c.l.b16 %v94
    %v181 = vunpack.c.l.b16 %v95
    %v182 = vunpack.c.l.b16 %v96
    %v183 = vunpack.c.l.b16 %v97
    %v184 = vunpack.c.l.b16 %v98
    %v185 = vunpack.c.l.b16 %v99
    %v186 = vunpack.c.l.b16 %v100
    %v187 = vunpack.c.l.b16 %v101
    %v188 = vunpack.c.l.b16 %v102
    %v189 = vunpack.c.l.b16 %v103
    %v190 = vpack.c.b16 %v175, %v174
    %v191 = vpack.c.b16 %v177, %v176
    %v192 = vpack.c.b16 %v179, %v178
    %v193 = vpack.c.b16 %v181, %v180
    %v194 = vpack.c.b16 %v183, %v182
    %v195 = vpack.c.b16 %v185, %v184
    %v196 = vpack.c.b16 %v187, %v186
    %v197 = vpack.c.b16 %v189, %v188
    %v238 = vunpack.c.l.b16 %v104
    %v239 = vunpack.c.h.b16 %v104
    %v240 = vunpack.c.l.b16 %v105
    %v241 = vunpack.c.h.b16 %v105
    %v242 = vunpack.c.l.b16 %v106
    %v243 = vunpack.c.h.b16 %v106
    %v244 = vunpack.c.l.b16 %v107
    %v245 = vunpack.c.h.b16 %v107
    %v246 = vunpack.c.l.b16 %v108
    %v247 = vunpack.c.h.b16 %v108
    %v248 = vunpack.c.l.b16 %v109
    %v249 = vunpack.c.h.b16 %v109
    %v250 = vunpack.c.l.b16 %v110
    %v251 = vunpack.c.h.b16 %v110
    %v252 = vunpack.c.l.b16 %v111
    %v253 = vunpack.c.h.b16 %v111
    %v254 = vunpack.c.l.b16 %v112
    %v255 = vunpack.c.h.b16 %v112
    %v256 = vunpack.c.l.b16 %v113
    %v257 = vunpack.c.h.b16 %v113
    %v258 = vunpack.c.l.b16 %v114
    %v259 = vunpack.c.h.b16 %v114
    %v260 = vunpack.c.l.b16 %v115
    %v261 = vunpack.c.h.b16 %v115
    %v262 = vunpack.c.l.b16 %v116
    %v263 = vunpack.c.h.b16 %v116
    %v264 = vunpack.c.l.b16 %v117
    %v265 = vunpack.c.h.b16 %v117
    %v266 = vunpack.c.l.b16 %v118
    %v267 = vunpack.c.h.b16 %v118
    %v268 = vunpack.c.l.b16 %v119
    %v269 = vunpack.c.h.b16 %v119
    %v270 = vunpack.c.l.b16 %v120
    %v271 = vunpack.c.h.b16 %v120
    %v272 = vunpack.c.l.b16 %v121
    %v273 = vunpack.c.h.b16 %v121
    %v274 = vunpack.c.l.b16 %v122
    %v275 = vunpack.c.h.b16 %v122
    %v276 = vunpack.c.l.b16 %v123
    %v277 = vunpack.c.h.b16 %v123
    %v278 = vunpack.c.l.b16 %v124
    %v279 = vunpack.c.h.b16 %v124
    %v280 = vunpack.c.l.b16 %v125
    %v281 = vunpack.c.h.b16 %v125
    %v282 = vunpack.c.l.b16 %v126
    %v283 = vunpack.c.h.b16 %v126
    %v284 = vunpack.c.l.b16 %v127
    %v285 = vunpack.c.h.b16 %v127
    %v286 = vunpack.c.l.b16 %v128
    %v287 = vunpack.c.h.b16 %v128
    %v288 = vunpack.c.l.b16 %v129
    %v289 = vunpack.c.h.b16 %v129
    %v290 = vunpack.c.l.b16 %v130
    %v291 = vunpack.c.h.b16 %v130
    %v292 = vunpack.c.l.b16 %v131
    %v293 = vunpack.c.h.b16 %v131
    %v294 = vunpack.c.l.b16 %v132
    %v295 = vunpack.c.h.b16 %v132
    %v296 = vunpack.c.l.b16 %v133
    %v297 = vunpack.c.h.b16 %v133
    %v298 = vunpack.c.l.b16 %v134
    %v299 = vunpack.c.h.b16 %v134
    %v300 = vunpack.c.l.b16 %v135
    %v301 = vunpack.c.h.b16 %v135
    %v302 = vpack.c.b16 %v242, %v238
    %v303 = vpack.c.b16 %v243, %v239
    %v304 = vpack.c.b16 %v244, %v240
    %v305 = vpack.c.b16 %v245, %v241
    %v306 = vpack.c.b16 %v250, %v246
    %v307 = vpack.c.b16 %v251, %v247
    %v308 = vpack.c.b16 %v252, %v248
    %v309 = vpack.c.b16 %v253, %v249
    %v310 = vpack.c.b16 %v258, %v254
    %v311 = vpack.c.b16 %v259, %v255
    %v312 = vpack.c.b16 %v260, %v256
    %v313 = vpack.c.b16 %v261, %v257
    %v314 = vpack.c.b16 %v266, %v262
    %v315 = vpack.c.b16 %v267, %v263
    %v316 = vpack.c.b16 %v268, %v264
    %v317 = vpack.c.b16 %v269, %v265
    %v318 = vpack.c.b16 %v274, %v270
    %v319 = vpack.c.b16 %v275, %v271
    %v320 = vpack.c.b16 %v276, %v272
    %v321 = vpack.c.b16 %v277, %v273
    %v322 = vpack.c.b16 %v282, %v278
    %v323 = vpack.c.b16 %v283, %v279
    %v324 = vpack.c.b16 %v284, %v280
    %v325 = vpack.c.b16 %v285, %v281
    %v326 = vpack.c.b16 %v290, %v286
    %v327 = vpack.c.b16 %v291, %v287
    %v328 = vpack.c.b16 %v292, %v288
    %v329 = vpack.c.b16 %v293, %v289
    %v330 = vpack.c.b16 %v298, %v294
    %v331 = vpack.c.b16 %v299, %v295
    %v332 = vpack.c.b16 %v300, %v296
    %v333 = vpack.c.b16 %v301, %v297
    %366 = vmatprep.subr.bf16.mxu0 %v303
    %367 = vmatpush1.bf16.msra.mxu0 %v302
    %368 = vmatprep.subr.bf16.mxu0 %v307
    %369 = vmatpush1.bf16.msra.mxu0 %v306
    %370 = vmatprep.subr.bf16.mxu0 %v311
    %371 = vmatpush1.bf16.msra.mxu0 %v310
    %372 = vmatprep.subr.bf16.mxu0 %v315
    %373 = vmatpush1.bf16.msra.mxu0 %v314
    %374 = vmatprep.subr.bf16.mxu0 %v319
    %375 = vmatpush1.bf16.msra.mxu0 %v318
    %376 = vmatprep.subr.bf16.mxu0 %v323
    %377 = vmatpush1.bf16.msra.mxu0 %v322
    %378 = vmatprep.subr.bf16.mxu0 %v327
    %379 = vmatpush1.bf16.msra.mxu0 %v326
    %380 = vmatprep.subr.bf16.mxu0 %v331
    %381 = vmatpush1.bf16.msra.mxu0 %v330
    %382 = vmatprep.subr.bf16.mxu0 0
    %383 = vmatpush1.bf16.msra.mxu0 0
    %384 = vmatprep.subr.bf16.mxu0 0
    %385 = vmatpush1.bf16.msra.mxu0 0
    %386 = vmatprep.subr.bf16.mxu0 0
    %387 = vmatpush1.bf16.msra.mxu0 0
    %388 = vmatprep.subr.bf16.mxu0 0
    %389 = vmatpush1.bf16.msra.mxu0 0
    %390 = vmatprep.subr.bf16.mxu0 0
    %391 = vmatpush1.bf16.msra.mxu0 0
    %392 = vmatprep.subr.bf16.mxu0 0
    %393 = vmatpush1.bf16.msra.mxu0 0
    %394 = vmatprep.subr.bf16.mxu0 0
    %395 = vmatpush1.bf16.msra.mxu0 0
    %396 = vmatprep.subr.bf16.mxu0 0
    %397 = vmatpush1.bf16.msra.mxu0 0
    %398 = vmatprep.mubr.bf16.mxu0 0
    %399 = vmatmul.mubr.bf16.gmra.mrb[0].mxu0 %v190
    %v400 = vpop.f32.mrb[0].mxu0
    %v401 = vadd.f32 %v141, %v400
    %v402 = vpop.f32.mrb[0].mxu0
    %v403 = vadd.f32 %v145, %v402
    %v404 = vpop.f32.mrb[0].mxu0
    %v405 = vadd.f32 %v141, %v404
    %v406 = vpop.f32.mrb[0].mxu0
    %v407 = vadd.f32 %v145, %v406
    %408 = vmatprep.mubr.bf16.mxu0 0
    %409 = vmatmul.mubr.bf16.gmra.mrb[0].mxu0 %v191
    %v410 = vpop.f32.mrb[0].mxu0
    %v411 = vadd.f32 %v141, %v410
    %v412 = vpop.f32.mrb[0].mxu0
    %v413 = vadd.f32 %v145, %v412
    %v414 = vpop.f32.mrb[0].mxu0
    %v415 = vadd.f32 %v141, %v414
    %v416 = vpop.f32.mrb[0].mxu0
    %v417 = vadd.f32 %v145, %v416
    %418 = vmatprep.mubr.bf16.mxu0 0
    %419 = vmatmul.mubr.bf16.gmra.mrb[0].mxu0 %v192
    %v420 = vpop.f32.mrb[0].mxu0
    %v421 = vadd.f32 %v141, %v420
    %v422 = vpop.f32.mrb[0].mxu0
    %v423 = vadd.f32 %v145, %v422
    %v424 = vpop.f32.mrb[0].mxu0
    %v425 = vadd.f32 %v141, %v424
    %v426 = vpop.f32.mrb[0].mxu0
    %v427 = vadd.f32 %v145, %v426
    %428 = vmatprep.mubr.bf16.mxu0 0
    %429 = vmatmul.mubr.bf16.gmra.mrb[0].mxu0 %v193
    %v430 = vpop.f32.mrb[0].mxu0
    %v431 = vadd.f32 %v141, %v430
    %v432 = vpop.f32.mrb[0].mxu0
    %v433 = vadd.f32 %v145, %v432
    %v434 = vpop.f32.mrb[0].mxu0
    %v435 = vadd.f32 %v141, %v434
    %v436 = vpop.f32.mrb[0].mxu0
    %v437 = vadd.f32 %v145, %v436
    %438 = vmatprep.mubr.bf16.mxu0 0
    %439 = vmatmul.mubr.bf16.gmra.mrb[0].mxu0 %v194
    %v440 = vpop.f32.mrb[0].mxu0
    %v441 = vadd.f32 %v141, %v440
    %v442 = vpop.f32.mrb[0].mxu0
    %v443 = vadd.f32 %v145, %v442
    %v444 = vpop.f32.mrb[0].mxu0
    %v445 = vadd.f32 %v141, %v444
    %v446 = vpop.f32.mrb[0].mxu0
    %v447 = vadd.f32 %v145, %v446
    %448 = vmatprep.mubr.bf16.mxu0 0
    %449 = vmatmul.mubr.bf16.gmra.mrb[0].mxu0 %v195
    %v450 = vpop.f32.mrb[0].mxu0
    %v451 = vadd.f32 %v141, %v450
    %v452 = vpop.f32.mrb[0].mxu0
    %v453 = vadd.f32 %v145, %v452
    %v454 = vpop.f32.mrb[0].mxu0
    %v455 = vadd.f32 %v141, %v454
    %v456 = vpop.f32.mrb[0].mxu0
    %v457 = vadd.f32 %v145, %v456
    %458 = vmatprep.mubr.bf16.mxu0 0
    %459 = vmatmul.mubr.bf16.gmra.mrb[0].mxu0 %v196
    %v460 = vpop.f32.mrb[0].mxu0
    %v461 = vadd.f32 %v141, %v460
    %v462 = vpop.f32.mrb[0].mxu0
    %v463 = vadd.f32 %v145, %v462
    %v464 = vpop.f32.mrb[0].mxu0
    %v465 = vadd.f32 %v141, %v464
    %v466 = vpop.f32.mrb[0].mxu0
    %v467 = vadd.f32 %v145, %v466
    %468 = vmatprep.mubr.bf16.mxu0 0
    %469 = vmatmul.mubr.bf16.gmra.mrb[0].mxu0 %v197
    %v470 = vpop.f32.mrb[0].mxu0
    %v471 = vadd.f32 %v141, %v470
    %v472 = vpop.f32.mrb[0].mxu0
    %v473 = vadd.f32 %v145, %v472
    %v474 = vpop.f32.mrb[0].mxu0
    %v475 = vadd.f32 %v141, %v474
    %v476 = vpop.f32.mrb[0].mxu0
    %v477 = vadd.f32 %v145, %v476
    %478 = vdwg.mxu0
    %479 = vmatprep.subr.bf16.mxu0 %v305
    %480 = vmatpush1.bf16.msra.mxu0 %v304
    %481 = vmatprep.subr.bf16.mxu0 %v309
    %482 = vmatpush1.bf16.msra.mxu0 %v308
    %483 = vmatprep.subr.bf16.mxu0 %v313
    %484 = vmatpush1.bf16.msra.mxu0 %v312
    %485 = vmatprep.subr.bf16.mxu0 %v317
    %486 = vmatpush1.bf16.msra.mxu0 %v316
    %487 = vmatprep.subr.bf16.mxu0 %v321
    %488 = vmatpush1.bf16.msra.mxu0 %v320
    %489 = vmatprep.subr.bf16.mxu0 %v325
    %490 = vmatpush1.bf16.msra.mxu0 %v324
    %491 = vmatprep.subr.bf16.mxu0 %v329
    %492 = vmatpush1.bf16.msra.mxu0 %v328
    %493 = vmatprep.subr.bf16.mxu0 %v333
    %494 = vmatpush1.bf16.msra.mxu0 %v332
    %495 = vmatprep.subr.bf16.mxu0 0
    %496 = vmatpush1.bf16.msra.mxu0 0
    %497 = vmatprep.subr.bf16.mxu0 0
    %498 = vmatpush1.bf16.msra.mxu0 0
    %499 = vmatprep.subr.bf16.mxu0 0
    %500 = vmatpush1.bf16.msra.mxu0 0
    %501 = vmatprep.subr.bf16.mxu0 0
    %502 = vmatpush1.bf16.msra.mxu0 0
    %503 = vmatprep.subr.bf16.mxu0 0
    %504 = vmatpush1.bf16.msra.mxu0 0
    %505 = vmatprep.subr.bf16.mxu0 0
    %506 = vmatpush1.bf16.msra.mxu0 0
    %507 = vmatprep.subr.bf16.mxu0 0
    %508 = vmatpush1.bf16.msra.mxu0 0
    %509 = vmatprep.subr.bf16.mxu0 0
    %510 = vmatpush1.bf16.msra.mxu0 0
    %511 = vmatprep.mubr.bf16.mxu0 0
    %512 = vmatmul.mubr.bf16.gmra.mrb[0].mxu0 %v190
    %v513 = vpop.f32.mrb[0].mxu0
    %v514 = vadd.f32 %v149, %v513
    %v515 = vpop.f32.mrb[0].mxu0
    %v516 = vadd.f32 %v153, %v515
    %v517 = vpop.f32.mrb[0].mxu0
    %v518 = vadd.f32 %v149, %v517
    %v519 = vpop.f32.mrb[0].mxu0
    %v520 = vadd.f32 %v153, %v519
    %521 = vmatprep.mubr.bf16.mxu0 0
    %522 = vmatmul.mubr.bf16.gmra.mrb[0].mxu0 %v191
    %v523 = vpop.f32.mrb[0].mxu0
    %v524 = vadd.f32 %v149, %v523
    %v525 = vpop.f32.mrb[0].mxu0
    %v526 = vadd.f32 %v153, %v525
    %v527 = vpop.f32.mrb[0].mxu0
    %v528 = vadd.f32 %v149, %v527
    %v529 = vpop.f32.mrb[0].mxu0
    %v530 = vadd.f32 %v153, %v529
    %531 = vmatprep.mubr.bf16.mxu0 0
    %532 = vmatmul.mubr.bf16.gmra.mrb[0].mxu0 %v192
    %v533 = vpop.f32.mrb[0].mxu0
    %v534 = vadd.f32 %v149, %v533
    %v535 = vpop.f32.mrb[0].mxu0
    %v536 = vadd.f32 %v153, %v535
    %v537 = vpop.f32.mrb[0].mxu0
    %v538 = vadd.f32 %v149, %v537
    %v539 = vpop.f32.mrb[0].mxu0
    %v540 = vadd.f32 %v153, %v539
    %541 = vmatprep.mubr.bf16.mxu0 0
    %542 = vmatmul.mubr.bf16.gmra.mrb[0].mxu0 %v193
    %v543 = vpop.f32.mrb[0].mxu0
    %v544 = vadd.f32 %v149, %v543
    %v545 = vpop.f32.mrb[0].mxu0
    %v546 = vadd.f32 %v153, %v545
    %v547 = vpop.f32.mrb[0].mxu0
    %v548 = vadd.f32 %v149, %v547
    %v549 = vpop.f32.mrb[0].mxu0
    %v550 = vadd.f32 %v153, %v549
    %551 = vmatprep.mubr.bf16.mxu0 0
    %552 = vmatmul.mubr.bf16.gmra.mrb[0].mxu0 %v194
    %v553 = vpop.f32.mrb[0].mxu0
    %v554 = vadd.f32 %v149, %v553
    %v555 = vpop.f32.mrb[0].mxu0
    %v556 = vadd.f32 %v153, %v555
    %v557 = vpop.f32.mrb[0].mxu0
    %v558 = vadd.f32 %v149, %v557
    %v559 = vpop.f32.mrb[0].mxu0
    %v560 = vadd.f32 %v153, %v559
    %561 = vmatprep.mubr.bf16.mxu0 0
    %562 = vmatmul.mubr.bf16.gmra.mrb[0].mxu0 %v195
    %v563 = vpop.f32.mrb[0].mxu0
    %v564 = vadd.f32 %v149, %v563
    %v565 = vpop.f32.mrb[0].mxu0
    %v566 = vadd.f32 %v153, %v565
    %v567 = vpop.f32.mrb[0].mxu0
    %v568 = vadd.f32 %v149, %v567
    %v569 = vpop.f32.mrb[0].mxu0
    %v570 = vadd.f32 %v153, %v569
    %571 = vmatprep.mubr.bf16.mxu0 0
    %572 = vmatmul.mubr.bf16.gmra.mrb[0].mxu0 %v196
    %v573 = vpop.f32.mrb[0].mxu0
    %v574 = vadd.f32 %v149, %v573
    %v575 = vpop.f32.mrb[0].mxu0
    %v576 = vadd.f32 %v153, %v575
    %v577 = vpop.f32.mrb[0].mxu0
    %v578 = vadd.f32 %v149, %v577
    %v579 = vpop.f32.mrb[0].mxu0
    %v580 = vadd.f32 %v153, %v579
    %581 = vmatprep.mubr.bf16.mxu0 0
    %582 = vmatmul.mubr.bf16.gmra.mrb[0].mxu0 %v197
    %v583 = vpop.f32.mrb[0].mxu0
    %v584 = vadd.f32 %v149, %v583
    %v585 = vpop.f32.mrb[0].mxu0
    %v586 = vadd.f32 %v153, %v585
    %v587 = vpop.f32.mrb[0].mxu0
    %v588 = vadd.f32 %v149, %v587
    %v589 = vpop.f32.mrb[0].mxu0
    %v590 = vadd.f32 %v153, %v589
    %591 = vdwg.mxu0
    %592 = vst [vmem:[#allocation4] sm:$0xff] %v401
    %593 = vst [vmem:[#allocation4 + $0x8] sm:$0xff] %v403
    %594 = vst [vmem:[#allocation4 + $0x10] sm:$0xff] %v514
    %595 = vst [vmem:[#allocation4 + $0x18] sm:$0xff] %v516
    %596 = vst [vmem:[#allocation4 + $0x20] sm:$0xff] %v405
    %597 = vst [vmem:[#allocation4 + $0x28] sm:$0xff] %v407
    %598 = vst [vmem:[#allocation4 + $0x30] sm:$0xff] %v518
    %599 = vst [vmem:[#allocation4 + $0x38] sm:$0xff] %v520
    %600 = vst [vmem:[#allocation4 + $0x40] sm:$0xff] %v411
    %601 = vst [vmem:[#allocation4 + $0x48] sm:$0xff] %v413
    %602 = vst [vmem:[#allocation4 + $0x50] sm:$0xff] %v524
    %603 = vst [vmem:[#allocation4 + $0x58] sm:$0xff] %v526
    %604 = vst [vmem:[#allocation4 + $0x60] sm:$0xff] %v415
    %605 = vst [vmem:[#allocation4 + $0x68] sm:$0xff] %v417
    %606 = vst [vmem:[#allocation4 + $0x70] sm:$0xff] %v528
    %607 = vst [vmem:[#allocation4 + $0x78] sm:$0xff] %v530
    %608 = vst [vmem:[#allocation4 + $0x80] sm:$0xff] %v421
    %609 = vst [vmem:[#allocation4 + $0x88] sm:$0xff] %v423
    %610 = vst [vmem:[#allocation4 + $0x90] sm:$0xff] %v534
    %611 = vst [vmem:[#allocation4 + $0x98] sm:$0xff] %v536
    %612 = vst [vmem:[#allocation4 + $0xa0] sm:$0xff] %v425
    %613 = vst [vmem:[#allocation4 + $0xa8] sm:$0xff] %v427
    %614 = vst [vmem:[#allocation4 + $0xb0] sm:$0xff] %v538
    %615 = vst [vmem:[#allocation4 + $0xb8] sm:$0xff] %v540
    %616 = vst [vmem:[#allocation4 + $0xc0] sm:$0xff] %v431
    %617 = vst [vmem:[#allocation4 + $0xc8] sm:$0xff] %v433
    %618 = vst [vmem:[#allocation4 + $0xd0] sm:$0xff] %v544
    %619 = vst [vmem:[#allocation4 + $0xd8] sm:$0xff] %v546
    %620 = vst [vmem:[#allocation4 + $0xe0] sm:$0xff] %v435
    %621 = vst [vmem:[#allocation4 + $0xe8] sm:$0xff] %v437
    %622 = vst [vmem:[#allocation4 + $0xf0] sm:$0xff] %v548
    %623 = vst [vmem:[#allocation4 + $0xf8] sm:$0xff] %v550
    %624 = vst [vmem:[#allocation4 + $0x100] sm:$0xff] %v441
    %625 = vst [vmem:[#allocation4 + $0x108] sm:$0xff] %v443
    %626 = vst [vmem:[#allocation4 + $0x110] sm:$0xff] %v554
    %627 = vst [vmem:[#allocation4 + $0x118] sm:$0xff] %v556
    %628 = vst [vmem:[#allocation4 + $0x120] sm:$0xff] %v445
    %629 = vst [vmem:[#allocation4 + $0x128] sm:$0xff] %v447
    %630 = vst [vmem:[#allocation4 + $0x130] sm:$0xff] %v558
    %631 = vst [vmem:[#allocation4 + $0x138] sm:$0xff] %v560
    %632 = vst [vmem:[#allocation4 + $0x140] sm:$0xff] %v451
    %633 = vst [vmem:[#allocation4 + $0x148] sm:$0xff] %v453
    %634 = vst [vmem:[#allocation4 + $0x150] sm:$0xff] %v564
    %635 = vst [vmem:[#allocation4 + $0x158] sm:$0xff] %v566
    %636 = vst [vmem:[#allocation4 + $0x160] sm:$0xff] %v455
    %637 = vst [vmem:[#allocation4 + $0x168] sm:$0xff] %v457
    %638 = vst [vmem:[#allocation4 + $0x170] sm:$0xff] %v568
    %639 = vst [vmem:[#allocation4 + $0x178] sm:$0xff] %v570
    %640 = vst [vmem:[#allocation4 + $0x180] sm:$0xff] %v461
    %641 = vst [vmem:[#allocation4 + $0x188] sm:$0xff] %v463
    %642 = vst [vmem:[#allocation4 + $0x190] sm:$0xff] %v574
    %643 = vst [vmem:[#allocation4 + $0x198] sm:$0xff] %v576
    %644 = vst [vmem:[#allocation4 + $0x1a0] sm:$0xff] %v465
    %645 = vst [vmem:[#allocation4 + $0x1a8] sm:$0xff] %v467
    %646 = vst [vmem:[#allocation4 + $0x1b0] sm:$0xff] %v578
    %647 = vst [vmem:[#allocation4 + $0x1b8] sm:$0xff] %v580
    %648 = vst [vmem:[#allocation4 + $0x1c0] sm:$0xff] %v471
    %649 = vst [vmem:[#allocation4 + $0x1c8] sm:$0xff] %v473
    %650 = vst [vmem:[#allocation4 + $0x1d0] sm:$0xff] %v584
    %651 = vst [vmem:[#allocation4 + $0x1d8] sm:$0xff] %v586
    %652 = vst [vmem:[#allocation4 + $0x1e0] sm:$0xff] %v475
    %653 = vst [vmem:[#allocation4 + $0x1e8] sm:$0xff] %v477
    %654 = vst [vmem:[#allocation4 + $0x1f0] sm:$0xff] %v588
    %655 = vst [vmem:[#allocation4 + $0x1f8] sm:$0xff] %v590
    %v656 = vld [vmem:[#allocation10] sm:$0xff]
    %v657 = vld [vmem:[#allocation10 + $0x8] sm:$0xff]
    %v658 = vld [vmem:[#allocation10 + $0x10] sm:$0xff]
    %v659 = vld [vmem:[#allocation10 + $0x18] sm:$0xff]
    %v660 = vld [vmem:[#allocation10 + $0x20] sm:$0xff]
    %v661 = vld [vmem:[#allocation10 + $0x28] sm:$0xff]
    %v662 = vld [vmem:[#allocation10 + $0x30] sm:$0xff]
    %v663 = vld [vmem:[#allocation10 + $0x38] sm:$0xff]
    %v664 = vld [vmem:[#allocation10 + $0x40] sm:$0xff]
    %v665 = vld [vmem:[#allocation10 + $0x48] sm:$0xff]
    %v666 = vld [vmem:[#allocation10 + $0x50] sm:$0xff]
    %v667 = vld [vmem:[#allocation10 + $0x58] sm:$0xff]
    %v668 = vld [vmem:[#allocation10 + $0x60] sm:$0xff]
    %v669 = vld [vmem:[#allocation10 + $0x68] sm:$0xff]
    %v670 = vld [vmem:[#allocation10 + $0x70] sm:$0xff]
    %v671 = vld [vmem:[#allocation10 + $0x78] sm:$0xff]
    %v672 = vld [vmem:[#allocation10 + $0x80] sm:$0xff]
    %v673 = vld [vmem:[#allocation10 + $0x88] sm:$0xff]
    %v674 = vld [vmem:[#allocation10 + $0x90] sm:$0xff]
    %v675 = vld [vmem:[#allocation10 + $0x98] sm:$0xff]
    %v676 = vld [vmem:[#allocation10 + $0xa0] sm:$0xff]
    %v677 = vld [vmem:[#allocation10 + $0xa8] sm:$0xff]
    %v678 = vld [vmem:[#allocation10 + $0xb0] sm:$0xff]
    %v679 = vld [vmem:[#allocation10 + $0xb8] sm:$0xff]
    %v680 = vld [vmem:[#allocation10 + $0xc0] sm:$0xff]
    %v681 = vld [vmem:[#allocation10 + $0xc8] sm:$0xff]
    %v682 = vld [vmem:[#allocation10 + $0xd0] sm:$0xff]
    %v683 = vld [vmem:[#allocation10 + $0xd8] sm:$0xff]
    %v684 = vld [vmem:[#allocation10 + $0xe0] sm:$0xff]
    %v685 = vld [vmem:[#allocation10 + $0xe8] sm:$0xff]
    %v686 = vld [vmem:[#allocation10 + $0xf0] sm:$0xff]
    %v687 = vld [vmem:[#allocation10 + $0xf8] sm:$0xff]
    %s688 = smul.u32 0, 8
    %v689 = vld [vmem:[#allocation2] sm:$0xff]
    %v690 = vld [vmem:[#allocation2 + $0x8] sm:$0xff]
    %v691 = vld [vmem:[#allocation3] sm:$0xff]
    %v692 = vld [vmem:[#allocation3 + $0x8] sm:$0xff]
    %s693 = smul.u32 0, 4
    %s694 = smul.addr %s693, 8
    %s695 = scalar_lea.vmem [#allocation4], %s694
    %v696 = vld [vmem:[%s695] sm:$0xff]
    %v697 = vld [vmem:[%s695 + $0x8] sm:$0xff]
    %v698 = vld [vmem:[%s695 + $0x10] sm:$0xff]
    %v699 = vld [vmem:[%s695 + $0x18] sm:$0xff]
    %v700 = vld [vmem:[%s695 + $0x20] sm:$0xff]
    %v701 = vld [vmem:[%s695 + $0x28] sm:$0xff]
    %v702 = vld [vmem:[%s695 + $0x30] sm:$0xff]
    %v703 = vld [vmem:[%s695 + $0x38] sm:$0xff]
    %v704 = vpack.c.bf16 %v690, %v689
    %v737 = vunpack.c.l.b16 %v656
    %v738 = vunpack.c.h.b16 %v656
    %v739 = vunpack.c.l.b16 %v657
    %v740 = vunpack.c.h.b16 %v657
    %v741 = vunpack.c.l.b16 %v658
    %v742 = vunpack.c.h.b16 %v658
    %v743 = vunpack.c.l.b16 %v659
    %v744 = vunpack.c.h.b16 %v659
    %v745 = vunpack.c.l.b16 %v660
    %v746 = vunpack.c.h.b16 %v660
    %v747 = vunpack.c.l.b16 %v661
    %v748 = vunpack.c.h.b16 %v661
    %v749 = vunpack.c.l.b16 %v662
    %v750 = vunpack.c.h.b16 %v662
    %v751 = vunpack.c.l.b16 %v663
    %v752 = vunpack.c.h.b16 %v663
    %v753 = vunpack.c.l.b16 %v664
    %v754 = vunpack.c.h.b16 %v664
    %v755 = vunpack.c.l.b16 %v665
    %v756 = vunpack.c.h.b16 %v665
    %v757 = vunpack.c.l.b16 %v666
    %v758 = vunpack.c.h.b16 %v666
    %v759 = vunpack.c.l.b16 %v667
    %v760 = vunpack.c.h.b16 %v667
    %v761 = vunpack.c.l.b16 %v668
    %v762 = vunpack.c.h.b16 %v668
    %v763 = vunpack.c.l.b16 %v669
    %v764 = vunpack.c.h.b16 %v669
    %v765 = vunpack.c.l.b16 %v670
    %v766 = vunpack.c.h.b16 %v670
    %v767 = vunpack.c.l.b16 %v671
    %v768 = vunpack.c.h.b16 %v671
    %v769 = vunpack.c.l.b16 %v672
    %v770 = vunpack.c.h.b16 %v672
    %v771 = vunpack.c.l.b16 %v673
    %v772 = vunpack.c.h.b16 %v673
    %v773 = vunpack.c.l.b16 %v674
    %v774 = vunpack.c.h.b16 %v674
    %v775 = vunpack.c.l.b16 %v675
    %v776 = vunpack.c.h.b16 %v675
    %v777 = vunpack.c.l.b16 %v676
    %v778 = vunpack.c.h.b16 %v676
    %v779 = vunpack.c.l.b16 %v677
    %v780 = vunpack.c.h.b16 %v677
    %v781 = vunpack.c.l.b16 %v678
    %v782 = vunpack.c.h.b16 %v678
    %v783 = vunpack.c.l.b16 %v679
    %v784 = vunpack.c.h.b16 %v679
    %v785 = vunpack.c.l.b16 %v680
    %v786 = vunpack.c.h.b16 %v680
    %v787 = vunpack.c.l.b16 %v681
    %v788 = vunpack.c.h.b16 %v681
    %v789 = vunpack.c.l.b16 %v682
    %v790 = vunpack.c.h.b16 %v682
    %v791 = vunpack.c.l.b16 %v683
    %v792 = vunpack.c.h.b16 %v683
    %v793 = vunpack.c.l.b16 %v684
    %v794 = vunpack.c.h.b16 %v684
    %v795 = vunpack.c.l.b16 %v685
    %v796 = vunpack.c.h.b16 %v685
    %v797 = vunpack.c.l.b16 %v686
    %v798 = vunpack.c.h.b16 %v686
    %v799 = vunpack.c.l.b16 %v687
    %v800 = vunpack.c.h.b16 %v687
    %v801 = vpack.c.b16 %v741, %v737
    %v802 = vpack.c.b16 %v742, %v738
    %v803 = vpack.c.b16 %v743, %v739
    %v804 = vpack.c.b16 %v744, %v740
    %v805 = vpack.c.b16 %v749, %v745
    %v806 = vpack.c.b16 %v750, %v746
    %v807 = vpack.c.b16 %v751, %v747
    %v808 = vpack.c.b16 %v752, %v748
    %v809 = vpack.c.b16 %v757, %v753
    %v810 = vpack.c.b16 %v758, %v754
    %v811 = vpack.c.b16 %v759, %v755
    %v812 = vpack.c.b16 %v760, %v756
    %v813 = vpack.c.b16 %v765, %v761
    %v814 = vpack.c.b16 %v766, %v762
    %v815 = vpack.c.b16 %v767, %v763
    %v816 = vpack.c.b16 %v768, %v764
    %v817 = vpack.c.b16 %v773, %v769
    %v818 = vpack.c.b16 %v774, %v770
    %v819 = vpack.c.b16 %v775, %v771
    %v820 = vpack.c.b16 %v776, %v772
    %v821 = vpack.c.b16 %v781, %v777
    %v822 = vpack.c.b16 %v782, %v778
    %v823 = vpack.c.b16 %v783, %v779
    %v824 = vpack.c.b16 %v784, %v780
    %v825 = vpack.c.b16 %v789, %v785
    %v826 = vpack.c.b16 %v790, %v786
    %v827 = vpack.c.b16 %v791, %v787
    %v828 = vpack.c.b16 %v792, %v788
    %v829 = vpack.c.b16 %v797, %v793
    %v830 = vpack.c.b16 %v798, %v794
    %v831 = vpack.c.b16 %v799, %v795
    %v832 = vpack.c.b16 %v800, %v796
    %865 = vmatprep.subr.bf16.mxu0 %v802
    %866 = vmatpush1.bf16.msra.mxu0 %v801
    %867 = vmatprep.subr.bf16.mxu0 %v806
    %868 = vmatpush1.bf16.msra.mxu0 %v805
    %869 = vmatprep.subr.bf16.mxu0 %v810
    %870 = vmatpush1.bf16.msra.mxu0 %v809
    %871 = vmatprep.subr.bf16.mxu0 %v814
    %872 = vmatpush1.bf16.msra.mxu0 %v813
    %873 = vmatprep.subr.bf16.mxu0 %v818
    %874 = vmatpush1.bf16.msra.mxu0 %v817
    %875 = vmatprep.subr.bf16.mxu0 %v822
    %876 = vmatpush1.bf16.msra.mxu0 %v821
    %877 = vmatprep.subr.bf16.mxu0 %v826
    %878 = vmatpush1.bf16.msra.mxu0 %v825
    %879 = vmatprep.subr.bf16.mxu0 %v830
    %880 = vmatpush1.bf16.msra.mxu0 %v829
    %881 = vmatprep.subr.bf16.mxu0 0
    %882 = vmatpush1.bf16.msra.mxu0 0
    %883 = vmatprep.subr.bf16.mxu0 0
    %884 = vmatpush1.bf16.msra.mxu0 0
    %885 = vmatprep.subr.bf16.mxu0 0
    %886 = vmatpush1.bf16.msra.mxu0 0
    %887 = vmatprep.subr.bf16.mxu0 0
    %888 = vmatpush1.bf16.msra.mxu0 0
    %889 = vmatprep.subr.bf16.mxu0 0
    %890 = vmatpush1.bf16.msra.mxu0 0
    %891 = vmatprep.subr.bf16.mxu0 0
    %892 = vmatpush1.bf16.msra.mxu0 0
    %893 = vmatprep.subr.bf16.mxu0 0
    %894 = vmatpush1.bf16.msra.mxu0 0
    %895 = vmatprep.subr.bf16.mxu0 0
    %896 = vmatpush1.bf16.msra.mxu0 0
    %897 = vmatprep.mubr.bf16.mxu0 0
    %898 = vmatmul.mubr.bf16.gmra.mrb[0].mxu0 %v704
    %v899 = vpop.f32.mrb[0].mxu0
    %v900 = vadd.f32 0.0, %v899
    %v901 = vpop.f32.mrb[0].mxu0
    %v902 = vadd.f32 0.0, %v901
    %v903 = vpop.f32.mrb[0].mxu0
    %v904 = vadd.f32 0.0, %v903
    %v905 = vpop.f32.mrb[0].mxu0
    %v906 = vadd.f32 0.0, %v905
    %907 = vdwg.mxu0
    %908 = vmatprep.subr.bf16.mxu0 %v804
    %909 = vmatpush1.bf16.msra.mxu0 %v803
    %910 = vmatprep.subr.bf16.mxu0 %v808
    %911 = vmatpush1.bf16.msra.mxu0 %v807
    %912 = vmatprep.subr.bf16.mxu0 %v812
    %913 = vmatpush1.bf16.msra.mxu0 %v811
    %914 = vmatprep.subr.bf16.mxu0 %v816
    %915 = vmatpush1.bf16.msra.mxu0 %v815
    %916 = vmatprep.subr.bf16.mxu0 %v820
    %917 = vmatpush1.bf16.msra.mxu0 %v819
    %918 = vmatprep.subr.bf16.mxu0 %v824
    %919 = vmatpush1.bf16.msra.mxu0 %v823
    %920 = vmatprep.subr.bf16.mxu0 %v828
    %921 = vmatpush1.bf16.msra.mxu0 %v827
    %922 = vmatprep.subr.bf16.mxu0 %v832
    %923 = vmatpush1.bf16.msra.mxu0 %v831
    %924 = vmatprep.subr.bf16.mxu0 0
    %925 = vmatpush1.bf16.msra.mxu0 0
    %926 = vmatprep.subr.bf16.mxu0 0
    %927 = vmatpush1.bf16.msra.mxu0 0
    %928 = vmatprep.subr.bf16.mxu0 0
    %929 = vmatpush1.bf16.msra.mxu0 0
    %930 = vmatprep.subr.bf16.mxu0 0
    %931 = vmatpush1.bf16.msra.mxu0 0
    %932 = vmatprep.subr.bf16.mxu0 0
    %933 = vmatpush1.bf16.msra.mxu0 0
    %934 = vmatprep.subr.bf16.mxu0 0
    %935 = vmatpush1.bf16.msra.mxu0 0
    %936 = vmatprep.subr.bf16.mxu0 0
    %937 = vmatpush1.bf16.msra.mxu0 0
    %938 = vmatprep.subr.bf16.mxu0 0
    %939 = vmatpush1.bf16.msra.mxu0 0
    %940 = vmatprep.mubr.bf16.mxu0 0
    %941 = vmatmul.mubr.bf16.gmra.mrb[0].mxu0 %v704
    %v942 = vpop.f32.mrb[0].mxu0
    %v943 = vadd.f32 0.0, %v942
    %v944 = vpop.f32.mrb[0].mxu0
    %v945 = vadd.f32 0.0, %v944
    %v946 = vpop.f32.mrb[0].mxu0
    %v947 = vadd.f32 0.0, %v946
    %v948 = vpop.f32.mrb[0].mxu0
    %v949 = vadd.f32 0.0, %v948
    %950 = vdwg.mxu0
    %v951 = vadd.f32 %v696, %v900
    %v952 = vadd.f32 %v697, %v902
    %v953 = vadd.f32 %v698, %v943
    %v954 = vadd.f32 %v699, %v945
    %v955 = vadd.f32 %v700, %v904
    %v956 = vadd.f32 %v701, %v906
    %v957 = vadd.f32 %v702, %v947
    %v958 = vadd.f32 %v703, %v949
    %v959 = vsub.f32 0.0, %v951
    %v960 = vsub.f32 0.0, %v955
    %v961 = vmul.f32 %v959, 1.442695
    %v962 = vpow.pop %v961
    %v963 = vmul.f32 %v960, 1.442695
    %v964 = vpow.pop %v963
    %v965 = vadd.f32 %v962, 1.0
    %v966 = vadd.f32 %v964, 1.0
    %v967 = vrcp.pop %v965
    %v968 = vrcp.pop %v966
    %v969 = vtanh.pop %v953
    %v970 = vtanh.pop %v957
    %v971 = vsub.f32 0.0, %v952
    %v972 = vsub.f32 0.0, %v956
    %v973 = vmul.f32 %v971, 1.442695
    %v974 = vpow.pop %v973
    %v975 = vmul.f32 %v972, 1.442695
    %v976 = vpow.pop %v975
    %v977 = vadd.f32 %v974, 1.0
    %v978 = vadd.f32 %v976, 1.0
    %v979 = vrcp.pop %v977
    %v980 = vrcp.pop %v978
    %v981 = vmul.f32 %v979, %v691
    %v982 = vmul.f32 %v980, %v692
    %v983 = vmul.f32 %v967, %v969
    %v984 = vmul.f32 %v968, %v970
    %v985 = vadd.f32 %v981, %v983
    %v986 = vadd.f32 %v982, %v984
    %v987 = vsub.f32 0.0, %v954
    %v988 = vsub.f32 0.0, %v958
    %v989 = vmul.f32 %v987, 1.442695
    %v990 = vpow.pop %v989
    %v991 = vmul.f32 %v988, 1.442695
    %v992 = vpow.pop %v991
    %v993 = vadd.f32 %v990, 1.0
    %v994 = vadd.f32 %v992, 1.0
    %v995 = vrcp.pop %v993
    %v996 = vrcp.pop %v994
    %v997 = vtanh.pop %v985
    %v998 = vtanh.pop %v986
    %v999 = vmul.f32 %v995, %v997
    %v1000 = vmul.f32 %v996, %v998
    %p1001 = scmp.lt.s32.totalorder %s688, 8
    %s1002 = scalar_select %p1001, 1, 0
    %v1003 = vstv %s1002
    %vm1004 = vcmp.eq.s32.totalorder %v1003, 1
    %v1005 = vsel %vm1004, %v999, %v689
    %v1006 = vsel %vm1004, %v1000, %v690
    %v1007 = vsel %vm1004, %v985, %v691
    %v1008 = vsel %vm1004, %v986, %v692
    %s1009 = smul.u32 2, 4
    %s1010 = smul.addr %s1009, 8
    %s1011 = scalar_lea.vmem [#allocation4], %s1010
    %v1012 = vld [vmem:[%s1011] sm:$0xff]
    %v1013 = vld [vmem:[%s1011 + $0x8] sm:$0xff]
    %v1014 = vld [vmem:[%s1011 + $0x10] sm:$0xff]
    %v1015 = vld [vmem:[%s1011 + $0x18] sm:$0xff]
    %v1016 = vld [vmem:[%s1011 + $0x20] sm:$0xff]
    %v1017 = vld [vmem:[%s1011 + $0x28] sm:$0xff]
    %v1018 = vld [vmem:[%s1011 + $0x30] sm:$0xff]
    %v1019 = vld [vmem:[%s1011 + $0x38] sm:$0xff]
    %v1020 = vpack.c.bf16 %v1006, %v1005
    %1021 = vmatprep.subr.bf16.mxu0 %v802
    %1022 = vmatpush1.bf16.msra.mxu0 %v801
    %1023 = vmatprep.subr.bf16.mxu0 %v806
    %1024 = vmatpush1.bf16.msra.mxu0 %v805
    %1025 = vmatprep.subr.bf16.mxu0 %v810
    %1026 = vmatpush1.bf16.msra.mxu0 %v809
    %1027 = vmatprep.subr.bf16.mxu0 %v814
    %1028 = vmatpush1.bf16.msra.mxu0 %v813
    %1029 = vmatprep.subr.bf16.mxu0 %v818
    %1030 = vmatpush1.bf16.msra.mxu0 %v817
    %1031 = vmatprep.subr.bf16.mxu0 %v822
    %1032 = vmatpush1.bf16.msra.mxu0 %v821
    %1033 = vmatprep.subr.bf16.mxu0 %v826
    %1034 = vmatpush1.bf16.msra.mxu0 %v825
    %1035 = vmatprep.subr.bf16.mxu0 %v830
    %1036 = vmatpush1.bf16.msra.mxu0 %v829
    %1037 = vmatprep.subr.bf16.mxu0 0
    %1038 = vmatpush1.bf16.msra.mxu0 0
    %1039 = vmatprep.subr.bf16.mxu0 0
    %1040 = vmatpush1.bf16.msra.mxu0 0
    %1041 = vmatprep.subr.bf16.mxu0 0
    %1042 = vmatpush1.bf16.msra.mxu0 0
    %1043 = vmatprep.subr.bf16.mxu0 0
    %1044 = vmatpush1.bf16.msra.mxu0 0
    %1045 = vmatprep.subr.bf16.mxu0 0
    %1046 = vmatpush1.bf16.msra.mxu0 0
    %1047 = vmatprep.subr.bf16.mxu0 0
    %1048 = vmatpush1.bf16.msra.mxu0 0
    %1049 = vmatprep.subr.bf16.mxu0 0
    %1050 = vmatpush1.bf16.msra.mxu0 0
    %1051 = vmatprep.subr.bf16.mxu0 0
    %1052 = vmatpush1.bf16.msra.mxu0 0
    %1053 = vmatprep.mubr.bf16.mxu0 0
    %1054 = vmatmul.mubr.bf16.gmra.mrb[0].mxu0 %v1020
    %v1055 = vpop.f32.mrb[0].mxu0
    %v1056 = vadd.f32 0.0, %v1055
    %v1057 = vpop.f32.mrb[0].mxu0
    %v1058 = vadd.f32 0.0, %v1057
    %v1059 = vpop.f32.mrb[0].mxu0
    %v1060 = vadd.f32 0.0, %v1059
    %v1061 = vpop.f32.mrb[0].mxu0
    %v1062 = vadd.f32 0.0, %v1061
    %1063 = vdwg.mxu0
    %1064 = vmatprep.subr.bf16.mxu0 %v804
    %1065 = vmatpush1.bf16.msra.mxu0 %v803
    %1066 = vmatprep.subr.bf16.mxu0 %v808
    %1067 = vmatpush1.bf16.msra.mxu0 %v807
    %1068 = vmatprep.subr.bf16.mxu0 %v812
    %1069 = vmatpush1.bf16.msra.mxu0 %v811
    %1070 = vmatprep.subr.bf16.mxu0 %v816
    %1071 = vmatpush1.bf16.msra.mxu0 %v815
    %1072 = vmatprep.subr.bf16.mxu0 %v820
    %1073 = vmatpush1.bf16.msra.mxu0 %v819
    %1074 = vmatprep.subr.bf16.mxu0 %v824
    %1075 = vmatpush1.bf16.msra.mxu0 %v823
    %1076 = vmatprep.subr.bf16.mxu0 %v828
    %1077 = vmatpush1.bf16.msra.mxu0 %v827
    %1078 = vmatprep.subr.bf16.mxu0 %v832
    %1079 = vmatpush1.bf16.msra.mxu0 %v831
    %1080 = vmatprep.subr.bf16.mxu0 0
    %1081 = vmatpush1.bf16.msra.mxu0 0
    %1082 = vmatprep.subr.bf16.mxu0 0
    %1083 = vmatpush1.bf16.msra.mxu0 0
    %1084 = vmatprep.subr.bf16.mxu0 0
    %1085 = vmatpush1.bf16.msra.mxu0 0
    %1086 = vmatprep.subr.bf16.mxu0 0
    %1087 = vmatpush1.bf16.msra.mxu0 0
    %1088 = vmatprep.subr.bf16.mxu0 0
    %1089 = vmatpush1.bf16.msra.mxu0 0
    %1090 = vmatprep.subr.bf16.mxu0 0
    %1091 = vmatpush1.bf16.msra.mxu0 0
    %1092 = vmatprep.subr.bf16.mxu0 0
    %1093 = vmatpush1.bf16.msra.mxu0 0
    %1094 = vmatprep.subr.bf16.mxu0 0
    %1095 = vmatpush1.bf16.msra.mxu0 0
    %1096 = vmatprep.mubr.bf16.mxu0 0
    %1097 = vmatmul.mubr.bf16.gmra.mrb[0].mxu0 %v1020
    %v1098 = vpop.f32.mrb[0].mxu0
    %v1099 = vadd.f32 0.0, %v1098
    %v1100 = vpop.f32.mrb[0].mxu0
    %v1101 = vadd.f32 0.0, %v1100
    %v1102 = vpop.f32.mrb[0].mxu0
    %v1103 = vadd.f32 0.0, %v1102
    %v1104 = vpop.f32.mrb[0].mxu0
    %v1105 = vadd.f32 0.0, %v1104
    %1106 = vdwg.mxu0
    %v1107 = vadd.f32 %v1012, %v1056
    %v1108 = vadd.f32 %v1013, %v1058
    %v1109 = vadd.f32 %v1014, %v1099
    %v1110 = vadd.f32 %v1015, %v1101
    %v1111 = vadd.f32 %v1016, %v1060
    %v1112 = vadd.f32 %v1017, %v1062
    %v1113 = vadd.f32 %v1018, %v1103
    %v1114 = vadd.f32 %v1019, %v1105
    %v1115 = vsub.f32 0.0, %v1107
    %v1116 = vsub.f32 0.0, %v1111
    %v1117 = vmul.f32 %v1115, 1.442695
    %v1118 = vpow.pop %v1117
    %v1119 = vmul.f32 %v1116, 1.442695
    %v1120 = vpow.pop %v1119
    %v1121 = vadd.f32 %v1118, 1.0
    %v1122 = vadd.f32 %v1120, 1.0
    %v1123 = vrcp.pop %v1121
    %v1124 = vrcp.pop %v1122
    %v1125 = vtanh.pop %v1109
    %v1126 = vtanh.pop %v1113
    %v1127 = vsub.f32 0.0, %v1108
    %v1128 = vsub.f32 0.0, %v1112
    %v1129 = vmul.f32 %v1127, 1.442695
    %v1130 = vpow.pop %v1129
    %v1131 = vmul.f32 %v1128, 1.442695
    %v1132 = vpow.pop %v1131
    %v1133 = vadd.f32 %v1130, 1.0
    %v1134 = vadd.f32 %v1132, 1.0
    %v1135 = vrcp.pop %v1133
    %v1136 = vrcp.pop %v1134
    %v1137 = vmul.f32 %v1135, %v1007
    %v1138 = vmul.f32 %v1136, %v1008
    %v1139 = vmul.f32 %v1123, %v1125
    %v1140 = vmul.f32 %v1124, %v1126
    %v1141 = vadd.f32 %v1137, %v1139
    %v1142 = vadd.f32 %v1138, %v1140
    %v1143 = vsub.f32 0.0, %v1110
    %v1144 = vsub.f32 0.0, %v1114
    %v1145 = vmul.f32 %v1143, 1.442695
    %v1146 = vpow.pop %v1145
    %v1147 = vmul.f32 %v1144, 1.442695
    %v1148 = vpow.pop %v1147
    %v1149 = vadd.f32 %v1146, 1.0
    %v1150 = vadd.f32 %v1148, 1.0
    %v1151 = vrcp.pop %v1149
    %v1152 = vrcp.pop %v1150
    %v1153 = vtanh.pop %v1141
    %v1154 = vtanh.pop %v1142
    %v1155 = vmul.f32 %v1151, %v1153
    %v1156 = vmul.f32 %v1152, %v1154
    %s1157 = sadd.s32 %s688, 1
    %p1158 = scmp.lt.s32.totalorder %s1157, 8
    %s1159 = scalar_select %p1158, 1, 0
    %v1160 = vstv %s1159
    %vm1161 = vcmp.eq.s32.totalorder %v1160, 1
    %v1162 = vsel %vm1161, %v1155, %v1005
    %v1163 = vsel %vm1161, %v1156, %v1006
    %v1164 = vsel %vm1161, %v1141, %v1007
    %v1165 = vsel %vm1161, %v1142, %v1008
    %s1166 = smul.u32 4, 4
    %s1167 = smul.addr %s1166, 8
    %s1168 = scalar_lea.vmem [#allocation4], %s1167
    %v1169 = vld [vmem:[%s1168] sm:$0xff]
    %v1170 = vld [vmem:[%s1168 + $0x8] sm:$0xff]
    %v1171 = vld [vmem:[%s1168 + $0x10] sm:$0xff]
    %v1172 = vld [vmem:[%s1168 + $0x18] sm:$0xff]
    %v1173 = vld [vmem:[%s1168 + $0x20] sm:$0xff]
    %v1174 = vld [vmem:[%s1168 + $0x28] sm:$0xff]
    %v1175 = vld [vmem:[%s1168 + $0x30] sm:$0xff]
    %v1176 = vld [vmem:[%s1168 + $0x38] sm:$0xff]
    %v1177 = vpack.c.bf16 %v1163, %v1162
    %1178 = vmatprep.subr.bf16.mxu0 %v802
    %1179 = vmatpush1.bf16.msra.mxu0 %v801
    %1180 = vmatprep.subr.bf16.mxu0 %v806
    %1181 = vmatpush1.bf16.msra.mxu0 %v805
    %1182 = vmatprep.subr.bf16.mxu0 %v810
    %1183 = vmatpush1.bf16.msra.mxu0 %v809
    %1184 = vmatprep.subr.bf16.mxu0 %v814
    %1185 = vmatpush1.bf16.msra.mxu0 %v813
    %1186 = vmatprep.subr.bf16.mxu0 %v818
    %1187 = vmatpush1.bf16.msra.mxu0 %v817
    %1188 = vmatprep.subr.bf16.mxu0 %v822
    %1189 = vmatpush1.bf16.msra.mxu0 %v821
    %1190 = vmatprep.subr.bf16.mxu0 %v826
    %1191 = vmatpush1.bf16.msra.mxu0 %v825
    %1192 = vmatprep.subr.bf16.mxu0 %v830
    %1193 = vmatpush1.bf16.msra.mxu0 %v829
    %1194 = vmatprep.subr.bf16.mxu0 0
    %1195 = vmatpush1.bf16.msra.mxu0 0
    %1196 = vmatprep.subr.bf16.mxu0 0
    %1197 = vmatpush1.bf16.msra.mxu0 0
    %1198 = vmatprep.subr.bf16.mxu0 0
    %1199 = vmatpush1.bf16.msra.mxu0 0
    %1200 = vmatprep.subr.bf16.mxu0 0
    %1201 = vmatpush1.bf16.msra.mxu0 0
    %1202 = vmatprep.subr.bf16.mxu0 0
    %1203 = vmatpush1.bf16.msra.mxu0 0
    %1204 = vmatprep.subr.bf16.mxu0 0
    %1205 = vmatpush1.bf16.msra.mxu0 0
    %1206 = vmatprep.subr.bf16.mxu0 0
    %1207 = vmatpush1.bf16.msra.mxu0 0
    %1208 = vmatprep.subr.bf16.mxu0 0
    %1209 = vmatpush1.bf16.msra.mxu0 0
    %1210 = vmatprep.mubr.bf16.mxu0 0
    %1211 = vmatmul.mubr.bf16.gmra.mrb[0].mxu0 %v1177
    %v1212 = vpop.f32.mrb[0].mxu0
    %v1213 = vadd.f32 0.0, %v1212
    %v1214 = vpop.f32.mrb[0].mxu0
    %v1215 = vadd.f32 0.0, %v1214
    %v1216 = vpop.f32.mrb[0].mxu0
    %v1217 = vadd.f32 0.0, %v1216
    %v1218 = vpop.f32.mrb[0].mxu0
    %v1219 = vadd.f32 0.0, %v1218
    %1220 = vdwg.mxu0
    %1221 = vmatprep.subr.bf16.mxu0 %v804
    %1222 = vmatpush1.bf16.msra.mxu0 %v803
    %1223 = vmatprep.subr.bf16.mxu0 %v808
    %1224 = vmatpush1.bf16.msra.mxu0 %v807
    %1225 = vmatprep.subr.bf16.mxu0 %v812
    %1226 = vmatpush1.bf16.msra.mxu0 %v811
    %1227 = vmatprep.subr.bf16.mxu0 %v816
    %1228 = vmatpush1.bf16.msra.mxu0 %v815
    %1229 = vmatprep.subr.bf16.mxu0 %v820
    %1230 = vmatpush1.bf16.msra.mxu0 %v819
    %1231 = vmatprep.subr.bf16.mxu0 %v824
    %1232 = vmatpush1.bf16.msra.mxu0 %v823
    %1233 = vmatprep.subr.bf16.mxu0 %v828
    %1234 = vmatpush1.bf16.msra.mxu0 %v827
    %1235 = vmatprep.subr.bf16.mxu0 %v832
    %1236 = vmatpush1.bf16.msra.mxu0 %v831
    %1237 = vmatprep.subr.bf16.mxu0 0
    %1238 = vmatpush1.bf16.msra.mxu0 0
    %1239 = vmatprep.subr.bf16.mxu0 0
    %1240 = vmatpush1.bf16.msra.mxu0 0
    %1241 = vmatprep.subr.bf16.mxu0 0
    %1242 = vmatpush1.bf16.msra.mxu0 0
    %1243 = vmatprep.subr.bf16.mxu0 0
    %1244 = vmatpush1.bf16.msra.mxu0 0
    %1245 = vmatprep.subr.bf16.mxu0 0
    %1246 = vmatpush1.bf16.msra.mxu0 0
    %1247 = vmatprep.subr.bf16.mxu0 0
    %1248 = vmatpush1.bf16.msra.mxu0 0
    %1249 = vmatprep.subr.bf16.mxu0 0
    %1250 = vmatpush1.bf16.msra.mxu0 0
    %1251 = vmatprep.subr.bf16.mxu0 0
    %1252 = vmatpush1.bf16.msra.mxu0 0
    %1253 = vmatprep.mubr.bf16.mxu0 0
    %1254 = vmatmul.mubr.bf16.gmra.mrb[0].mxu0 %v1177
    %v1255 = vpop.f32.mrb[0].mxu0
    %v1256 = vadd.f32 0.0, %v1255
    %v1257 = vpop.f32.mrb[0].mxu0
    %v1258 = vadd.f32 0.0, %v1257
    %v1259 = vpop.f32.mrb[0].mxu0
    %v1260 = vadd.f32 0.0, %v1259
    %v1261 = vpop.f32.mrb[0].mxu0
    %v1262 = vadd.f32 0.0, %v1261
    %1263 = vdwg.mxu0
    %v1264 = vadd.f32 %v1169, %v1213
    %v1265 = vadd.f32 %v1170, %v1215
    %v1266 = vadd.f32 %v1171, %v1256
    %v1267 = vadd.f32 %v1172, %v1258
    %v1268 = vadd.f32 %v1173, %v1217
    %v1269 = vadd.f32 %v1174, %v1219
    %v1270 = vadd.f32 %v1175, %v1260
    %v1271 = vadd.f32 %v1176, %v1262
    %v1272 = vsub.f32 0.0, %v1264
    %v1273 = vsub.f32 0.0, %v1268
    %v1274 = vmul.f32 %v1272, 1.442695
    %v1275 = vpow.pop %v1274
    %v1276 = vmul.f32 %v1273, 1.442695
    %v1277 = vpow.pop %v1276
    %v1278 = vadd.f32 %v1275, 1.0
    %v1279 = vadd.f32 %v1277, 1.0
    %v1280 = vrcp.pop %v1278
    %v1281 = vrcp.pop %v1279
    %v1282 = vtanh.pop %v1266
    %v1283 = vtanh.pop %v1270
    %v1284 = vsub.f32 0.0, %v1265
    %v1285 = vsub.f32 0.0, %v1269
    %v1286 = vmul.f32 %v1284, 1.442695
    %v1287 = vpow.pop %v1286
    %v1288 = vmul.f32 %v1285, 1.442695
    %v1289 = vpow.pop %v1288
    %v1290 = vadd.f32 %v1287, 1.0
    %v1291 = vadd.f32 %v1289, 1.0
    %v1292 = vrcp.pop %v1290
    %v1293 = vrcp.pop %v1291
    %v1294 = vmul.f32 %v1292, %v1164
    %v1295 = vmul.f32 %v1293, %v1165
    %v1296 = vmul.f32 %v1280, %v1282
    %v1297 = vmul.f32 %v1281, %v1283
    %v1298 = vadd.f32 %v1294, %v1296
    %v1299 = vadd.f32 %v1295, %v1297
    %v1300 = vsub.f32 0.0, %v1267
    %v1301 = vsub.f32 0.0, %v1271
    %v1302 = vmul.f32 %v1300, 1.442695
    %v1303 = vpow.pop %v1302
    %v1304 = vmul.f32 %v1301, 1.442695
    %v1305 = vpow.pop %v1304
    %v1306 = vadd.f32 %v1303, 1.0
    %v1307 = vadd.f32 %v1305, 1.0
    %v1308 = vrcp.pop %v1306
    %v1309 = vrcp.pop %v1307
    %v1310 = vtanh.pop %v1298
    %v1311 = vtanh.pop %v1299
    %v1312 = vmul.f32 %v1308, %v1310
    %v1313 = vmul.f32 %v1309, %v1311
    %s1314 = sadd.s32 %s688, 2
    %p1315 = scmp.lt.s32.totalorder %s1314, 8
    %s1316 = scalar_select %p1315, 1, 0
    %v1317 = vstv %s1316
    %vm1318 = vcmp.eq.s32.totalorder %v1317, 1
    %v1319 = vsel %vm1318, %v1312, %v1162
    %v1320 = vsel %vm1318, %v1313, %v1163
    %v1321 = vsel %vm1318, %v1298, %v1164
    %v1322 = vsel %vm1318, %v1299, %v1165
    %s1323 = smul.u32 6, 4
    %s1324 = smul.addr %s1323, 8
    %s1325 = scalar_lea.vmem [#allocation4], %s1324
    %v1326 = vld [vmem:[%s1325] sm:$0xff]
    %v1327 = vld [vmem:[%s1325 + $0x8] sm:$0xff]
    %v1328 = vld [vmem:[%s1325 + $0x10] sm:$0xff]
    %v1329 = vld [vmem:[%s1325 + $0x18] sm:$0xff]
    %v1330 = vld [vmem:[%s1325 + $0x20] sm:$0xff]
    %v1331 = vld [vmem:[%s1325 + $0x28] sm:$0xff]
    %v1332 = vld [vmem:[%s1325 + $0x30] sm:$0xff]
    %v1333 = vld [vmem:[%s1325 + $0x38] sm:$0xff]
    %v1334 = vpack.c.bf16 %v1320, %v1319
    %1335 = vmatprep.subr.bf16.mxu0 %v802
    %1336 = vmatpush1.bf16.msra.mxu0 %v801
    %1337 = vmatprep.subr.bf16.mxu0 %v806
    %1338 = vmatpush1.bf16.msra.mxu0 %v805
    %1339 = vmatprep.subr.bf16.mxu0 %v810
    %1340 = vmatpush1.bf16.msra.mxu0 %v809
    %1341 = vmatprep.subr.bf16.mxu0 %v814
    %1342 = vmatpush1.bf16.msra.mxu0 %v813
    %1343 = vmatprep.subr.bf16.mxu0 %v818
    %1344 = vmatpush1.bf16.msra.mxu0 %v817
    %1345 = vmatprep.subr.bf16.mxu0 %v822
    %1346 = vmatpush1.bf16.msra.mxu0 %v821
    %1347 = vmatprep.subr.bf16.mxu0 %v826
    %1348 = vmatpush1.bf16.msra.mxu0 %v825
    %1349 = vmatprep.subr.bf16.mxu0 %v830
    %1350 = vmatpush1.bf16.msra.mxu0 %v829
    %1351 = vmatprep.subr.bf16.mxu0 0
    %1352 = vmatpush1.bf16.msra.mxu0 0
    %1353 = vmatprep.subr.bf16.mxu0 0
    %1354 = vmatpush1.bf16.msra.mxu0 0
    %1355 = vmatprep.subr.bf16.mxu0 0
    %1356 = vmatpush1.bf16.msra.mxu0 0
    %1357 = vmatprep.subr.bf16.mxu0 0
    %1358 = vmatpush1.bf16.msra.mxu0 0
    %1359 = vmatprep.subr.bf16.mxu0 0
    %1360 = vmatpush1.bf16.msra.mxu0 0
    %1361 = vmatprep.subr.bf16.mxu0 0
    %1362 = vmatpush1.bf16.msra.mxu0 0
    %1363 = vmatprep.subr.bf16.mxu0 0
    %1364 = vmatpush1.bf16.msra.mxu0 0
    %1365 = vmatprep.subr.bf16.mxu0 0
    %1366 = vmatpush1.bf16.msra.mxu0 0
    %1367 = vmatprep.mubr.bf16.mxu0 0
    %1368 = vmatmul.mubr.bf16.gmra.mrb[0].mxu0 %v1334
    %v1369 = vpop.f32.mrb[0].mxu0
    %v1370 = vadd.f32 0.0, %v1369
    %v1371 = vpop.f32.mrb[0].mxu0
    %v1372 = vadd.f32 0.0, %v1371
    %v1373 = vpop.f32.mrb[0].mxu0
    %v1374 = vadd.f32 0.0, %v1373
    %v1375 = vpop.f32.mrb[0].mxu0
    %v1376 = vadd.f32 0.0, %v1375
    %1377 = vdwg.mxu0
    %1378 = vmatprep.subr.bf16.mxu0 %v804
    %1379 = vmatpush1.bf16.msra.mxu0 %v803
    %1380 = vmatprep.subr.bf16.mxu0 %v808
    %1381 = vmatpush1.bf16.msra.mxu0 %v807
    %1382 = vmatprep.subr.bf16.mxu0 %v812
    %1383 = vmatpush1.bf16.msra.mxu0 %v811
    %1384 = vmatprep.subr.bf16.mxu0 %v816
    %1385 = vmatpush1.bf16.msra.mxu0 %v815
    %1386 = vmatprep.subr.bf16.mxu0 %v820
    %1387 = vmatpush1.bf16.msra.mxu0 %v819
    %1388 = vmatprep.subr.bf16.mxu0 %v824
    %1389 = vmatpush1.bf16.msra.mxu0 %v823
    %1390 = vmatprep.subr.bf16.mxu0 %v828
    %1391 = vmatpush1.bf16.msra.mxu0 %v827
    %1392 = vmatprep.subr.bf16.mxu0 %v832
    %1393 = vmatpush1.bf16.msra.mxu0 %v831
    %1394 = vmatprep.subr.bf16.mxu0 0
    %1395 = vmatpush1.bf16.msra.mxu0 0
    %1396 = vmatprep.subr.bf16.mxu0 0
    %1397 = vmatpush1.bf16.msra.mxu0 0
    %1398 = vmatprep.subr.bf16.mxu0 0
    %1399 = vmatpush1.bf16.msra.mxu0 0
    %1400 = vmatprep.subr.bf16.mxu0 0
    %1401 = vmatpush1.bf16.msra.mxu0 0
    %1402 = vmatprep.subr.bf16.mxu0 0
    %1403 = vmatpush1.bf16.msra.mxu0 0
    %1404 = vmatprep.subr.bf16.mxu0 0
    %1405 = vmatpush1.bf16.msra.mxu0 0
    %1406 = vmatprep.subr.bf16.mxu0 0
    %1407 = vmatpush1.bf16.msra.mxu0 0
    %1408 = vmatprep.subr.bf16.mxu0 0
    %1409 = vmatpush1.bf16.msra.mxu0 0
    %1410 = vmatprep.mubr.bf16.mxu0 0
    %1411 = vmatmul.mubr.bf16.gmra.mrb[0].mxu0 %v1334
    %v1412 = vpop.f32.mrb[0].mxu0
    %v1413 = vadd.f32 0.0, %v1412
    %v1414 = vpop.f32.mrb[0].mxu0
    %v1415 = vadd.f32 0.0, %v1414
    %v1416 = vpop.f32.mrb[0].mxu0
    %v1417 = vadd.f32 0.0, %v1416
    %v1418 = vpop.f32.mrb[0].mxu0
    %v1419 = vadd.f32 0.0, %v1418
    %1420 = vdwg.mxu0
    %v1421 = vadd.f32 %v1326, %v1370
    %v1422 = vadd.f32 %v1327, %v1372
    %v1423 = vadd.f32 %v1328, %v1413
    %v1424 = vadd.f32 %v1329, %v1415
    %v1425 = vadd.f32 %v1330, %v1374
    %v1426 = vadd.f32 %v1331, %v1376
    %v1427 = vadd.f32 %v1332, %v1417
    %v1428 = vadd.f32 %v1333, %v1419
    %v1429 = vsub.f32 0.0, %v1421
    %v1430 = vsub.f32 0.0, %v1425
    %v1431 = vmul.f32 %v1429, 1.442695
    %v1432 = vpow.pop %v1431
    %v1433 = vmul.f32 %v1430, 1.442695
    %v1434 = vpow.pop %v1433
    %v1435 = vadd.f32 %v1432, 1.0
    %v1436 = vadd.f32 %v1434, 1.0
    %v1437 = vrcp.pop %v1435
    %v1438 = vrcp.pop %v1436
    %v1439 = vtanh.pop %v1423
    %v1440 = vtanh.pop %v1427
    %v1441 = vsub.f32 0.0, %v1422
    %v1442 = vsub.f32 0.0, %v1426
    %v1443 = vmul.f32 %v1441, 1.442695
    %v1444 = vpow.pop %v1443
    %v1445 = vmul.f32 %v1442, 1.442695
    %v1446 = vpow.pop %v1445
    %v1447 = vadd.f32 %v1444, 1.0
    %v1448 = vadd.f32 %v1446, 1.0
    %v1449 = vrcp.pop %v1447
    %v1450 = vrcp.pop %v1448
    %v1451 = vmul.f32 %v1449, %v1321
    %v1452 = vmul.f32 %v1450, %v1322
    %v1453 = vmul.f32 %v1437, %v1439
    %v1454 = vmul.f32 %v1438, %v1440
    %v1455 = vadd.f32 %v1451, %v1453
    %v1456 = vadd.f32 %v1452, %v1454
    %v1457 = vsub.f32 0.0, %v1424
    %v1458 = vsub.f32 0.0, %v1428
    %v1459 = vmul.f32 %v1457, 1.442695
    %v1460 = vpow.pop %v1459
    %v1461 = vmul.f32 %v1458, 1.442695
    %v1462 = vpow.pop %v1461
    %v1463 = vadd.f32 %v1460, 1.0
    %v1464 = vadd.f32 %v1462, 1.0
    %v1465 = vrcp.pop %v1463
    %v1466 = vrcp.pop %v1464
    %v1467 = vtanh.pop %v1455
    %v1468 = vtanh.pop %v1456
    %v1469 = vmul.f32 %v1465, %v1467
    %v1470 = vmul.f32 %v1466, %v1468
    %s1471 = sadd.s32 %s688, 3
    %p1472 = scmp.lt.s32.totalorder %s1471, 8
    %s1473 = scalar_select %p1472, 1, 0
    %v1474 = vstv %s1473
    %vm1475 = vcmp.eq.s32.totalorder %v1474, 1
    %v1476 = vsel %vm1475, %v1469, %v1319
    %v1477 = vsel %vm1475, %v1470, %v1320
    %v1478 = vsel %vm1475, %v1455, %v1321
    %v1479 = vsel %vm1475, %v1456, %v1322
    %s1480 = smul.u32 8, 4
    %s1481 = smul.addr %s1480, 8
    %s1482 = scalar_lea.vmem [#allocation4], %s1481
    %v1483 = vld [vmem:[%s1482] sm:$0xff]
    %v1484 = vld [vmem:[%s1482 + $0x8] sm:$0xff]
    %v1485 = vld [vmem:[%s1482 + $0x10] sm:$0xff]
    %v1486 = vld [vmem:[%s1482 + $0x18] sm:$0xff]
    %v1487 = vld [vmem:[%s1482 + $0x20] sm:$0xff]
    %v1488 = vld [vmem:[%s1482 + $0x28] sm:$0xff]
    %v1489 = vld [vmem:[%s1482 + $0x30] sm:$0xff]
    %v1490 = vld [vmem:[%s1482 + $0x38] sm:$0xff]
    %v1491 = vpack.c.bf16 %v1477, %v1476
    %1492 = vmatprep.subr.bf16.mxu0 %v802
    %1493 = vmatpush1.bf16.msra.mxu0 %v801
    %1494 = vmatprep.subr.bf16.mxu0 %v806
    %1495 = vmatpush1.bf16.msra.mxu0 %v805
    %1496 = vmatprep.subr.bf16.mxu0 %v810
    %1497 = vmatpush1.bf16.msra.mxu0 %v809
    %1498 = vmatprep.subr.bf16.mxu0 %v814
    %1499 = vmatpush1.bf16.msra.mxu0 %v813
    %1500 = vmatprep.subr.bf16.mxu0 %v818
    %1501 = vmatpush1.bf16.msra.mxu0 %v817
    %1502 = vmatprep.subr.bf16.mxu0 %v822
    %1503 = vmatpush1.bf16.msra.mxu0 %v821
    %1504 = vmatprep.subr.bf16.mxu0 %v826
    %1505 = vmatpush1.bf16.msra.mxu0 %v825
    %1506 = vmatprep.subr.bf16.mxu0 %v830
    %1507 = vmatpush1.bf16.msra.mxu0 %v829
    %1508 = vmatprep.subr.bf16.mxu0 0
    %1509 = vmatpush1.bf16.msra.mxu0 0
    %1510 = vmatprep.subr.bf16.mxu0 0
    %1511 = vmatpush1.bf16.msra.mxu0 0
    %1512 = vmatprep.subr.bf16.mxu0 0
    %1513 = vmatpush1.bf16.msra.mxu0 0
    %1514 = vmatprep.subr.bf16.mxu0 0
    %1515 = vmatpush1.bf16.msra.mxu0 0
    %1516 = vmatprep.subr.bf16.mxu0 0
    %1517 = vmatpush1.bf16.msra.mxu0 0
    %1518 = vmatprep.subr.bf16.mxu0 0
    %1519 = vmatpush1.bf16.msra.mxu0 0
    %1520 = vmatprep.subr.bf16.mxu0 0
    %1521 = vmatpush1.bf16.msra.mxu0 0
    %1522 = vmatprep.subr.bf16.mxu0 0
    %1523 = vmatpush1.bf16.msra.mxu0 0
    %1524 = vmatprep.mubr.bf16.mxu0 0
    %1525 = vmatmul.mubr.bf16.gmra.mrb[0].mxu0 %v1491
    %v1526 = vpop.f32.mrb[0].mxu0
    %v1527 = vadd.f32 0.0, %v1526
    %v1528 = vpop.f32.mrb[0].mxu0
    %v1529 = vadd.f32 0.0, %v1528
    %v1530 = vpop.f32.mrb[0].mxu0
    %v1531 = vadd.f32 0.0, %v1530
    %v1532 = vpop.f32.mrb[0].mxu0
    %v1533 = vadd.f32 0.0, %v1532
    %1534 = vdwg.mxu0
    %1535 = vmatprep.subr.bf16.mxu0 %v804
    %1536 = vmatpush1.bf16.msra.mxu0 %v803
    %1537 = vmatprep.subr.bf16.mxu0 %v808
    %1538 = vmatpush1.bf16.msra.mxu0 %v807
    %1539 = vmatprep.subr.bf16.mxu0 %v812
    %1540 = vmatpush1.bf16.msra.mxu0 %v811
    %1541 = vmatprep.subr.bf16.mxu0 %v816
    %1542 = vmatpush1.bf16.msra.mxu0 %v815
    %1543 = vmatprep.subr.bf16.mxu0 %v820
    %1544 = vmatpush1.bf16.msra.mxu0 %v819
    %1545 = vmatprep.subr.bf16.mxu0 %v824
    %1546 = vmatpush1.bf16.msra.mxu0 %v823
    %1547 = vmatprep.subr.bf16.mxu0 %v828
    %1548 = vmatpush1.bf16.msra.mxu0 %v827
    %1549 = vmatprep.subr.bf16.mxu0 %v832
    %1550 = vmatpush1.bf16.msra.mxu0 %v831
    %1551 = vmatprep.subr.bf16.mxu0 0
    %1552 = vmatpush1.bf16.msra.mxu0 0
    %1553 = vmatprep.subr.bf16.mxu0 0
    %1554 = vmatpush1.bf16.msra.mxu0 0
    %1555 = vmatprep.subr.bf16.mxu0 0
    %1556 = vmatpush1.bf16.msra.mxu0 0
    %1557 = vmatprep.subr.bf16.mxu0 0
    %1558 = vmatpush1.bf16.msra.mxu0 0
    %1559 = vmatprep.subr.bf16.mxu0 0
    %1560 = vmatpush1.bf16.msra.mxu0 0
    %1561 = vmatprep.subr.bf16.mxu0 0
    %1562 = vmatpush1.bf16.msra.mxu0 0
    %1563 = vmatprep.subr.bf16.mxu0 0
    %1564 = vmatpush1.bf16.msra.mxu0 0
    %1565 = vmatprep.subr.bf16.mxu0 0
    %1566 = vmatpush1.bf16.msra.mxu0 0
    %1567 = vmatprep.mubr.bf16.mxu0 0
    %1568 = vmatmul.mubr.bf16.gmra.mrb[0].mxu0 %v1491
    %v1569 = vpop.f32.mrb[0].mxu0
    %v1570 = vadd.f32 0.0, %v1569
    %v1571 = vpop.f32.mrb[0].mxu0
    %v1572 = vadd.f32 0.0, %v1571
    %v1573 = vpop.f32.mrb[0].mxu0
    %v1574 = vadd.f32 0.0, %v1573
    %v1575 = vpop.f32.mrb[0].mxu0
    %v1576 = vadd.f32 0.0, %v1575
    %1577 = vdwg.mxu0
    %v1578 = vadd.f32 %v1483, %v1527
    %v1579 = vadd.f32 %v1484, %v1529
    %v1580 = vadd.f32 %v1485, %v1570
    %v1581 = vadd.f32 %v1486, %v1572
    %v1582 = vadd.f32 %v1487, %v1531
    %v1583 = vadd.f32 %v1488, %v1533
    %v1584 = vadd.f32 %v1489, %v1574
    %v1585 = vadd.f32 %v1490, %v1576
    %v1586 = vsub.f32 0.0, %v1578
    %v1587 = vsub.f32 0.0, %v1582
    %v1588 = vmul.f32 %v1586, 1.442695
    %v1589 = vpow.pop %v1588
    %v1590 = vmul.f32 %v1587, 1.442695
    %v1591 = vpow.pop %v1590
    %v1592 = vadd.f32 %v1589, 1.0
    %v1593 = vadd.f32 %v1591, 1.0
    %v1594 = vrcp.pop %v1592
    %v1595 = vrcp.pop %v1593
    %v1596 = vtanh.pop %v1580
    %v1597 = vtanh.pop %v1584
    %v1598 = vsub.f32 0.0, %v1579
    %v1599 = vsub.f32 0.0, %v1583
    %v1600 = vmul.f32 %v1598, 1.442695
    %v1601 = vpow.pop %v1600
    %v1602 = vmul.f32 %v1599, 1.442695
    %v1603 = vpow.pop %v1602
    %v1604 = vadd.f32 %v1601, 1.0
    %v1605 = vadd.f32 %v1603, 1.0
    %v1606 = vrcp.pop %v1604
    %v1607 = vrcp.pop %v1605
    %v1608 = vmul.f32 %v1606, %v1478
    %v1609 = vmul.f32 %v1607, %v1479
    %v1610 = vmul.f32 %v1594, %v1596
    %v1611 = vmul.f32 %v1595, %v1597
    %v1612 = vadd.f32 %v1608, %v1610
    %v1613 = vadd.f32 %v1609, %v1611
    %v1614 = vsub.f32 0.0, %v1581
    %v1615 = vsub.f32 0.0, %v1585
    %v1616 = vmul.f32 %v1614, 1.442695
    %v1617 = vpow.pop %v1616
    %v1618 = vmul.f32 %v1615, 1.442695
    %v1619 = vpow.pop %v1618
    %v1620 = vadd.f32 %v1617, 1.0
    %v1621 = vadd.f32 %v1619, 1.0
    %v1622 = vrcp.pop %v1620
    %v1623 = vrcp.pop %v1621
    %v1624 = vtanh.pop %v1612
    %v1625 = vtanh.pop %v1613
    %v1626 = vmul.f32 %v1622, %v1624
    %v1627 = vmul.f32 %v1623, %v1625
    %s1628 = sadd.s32 %s688, 4
    %p1629 = scmp.lt.s32.totalorder %s1628, 8
    %s1630 = scalar_select %p1629, 1, 0
    %v1631 = vstv %s1630
    %vm1632 = vcmp.eq.s32.totalorder %v1631, 1
    %v1633 = vsel %vm1632, %v1626, %v1476
    %v1634 = vsel %vm1632, %v1627, %v1477
    %v1635 = vsel %vm1632, %v1612, %v1478
    %v1636 = vsel %vm1632, %v1613, %v1479
    %s1637 = smul.u32 10, 4
    %s1638 = smul.addr %s1637, 8
    %s1639 = scalar_lea.vmem [#allocation4], %s1638
    %v1640 = vld [vmem:[%s1639] sm:$0xff]
    %v1641 = vld [vmem:[%s1639 + $0x8] sm:$0xff]
    %v1642 = vld [vmem:[%s1639 + $0x10] sm:$0xff]
    %v1643 = vld [vmem:[%s1639 + $0x18] sm:$0xff]
    %v1644 = vld [vmem:[%s1639 + $0x20] sm:$0xff]
    %v1645 = vld [vmem:[%s1639 + $0x28] sm:$0xff]
    %v1646 = vld [vmem:[%s1639 + $0x30] sm:$0xff]
    %v1647 = vld [vmem:[%s1639 + $0x38] sm:$0xff]
    %v1648 = vpack.c.bf16 %v1634, %v1633
    %1649 = vmatprep.subr.bf16.mxu0 %v802
    %1650 = vmatpush1.bf16.msra.mxu0 %v801
    %1651 = vmatprep.subr.bf16.mxu0 %v806
    %1652 = vmatpush1.bf16.msra.mxu0 %v805
    %1653 = vmatprep.subr.bf16.mxu0 %v810
    %1654 = vmatpush1.bf16.msra.mxu0 %v809
    %1655 = vmatprep.subr.bf16.mxu0 %v814
    %1656 = vmatpush1.bf16.msra.mxu0 %v813
    %1657 = vmatprep.subr.bf16.mxu0 %v818
    %1658 = vmatpush1.bf16.msra.mxu0 %v817
    %1659 = vmatprep.subr.bf16.mxu0 %v822
    %1660 = vmatpush1.bf16.msra.mxu0 %v821
    %1661 = vmatprep.subr.bf16.mxu0 %v826
    %1662 = vmatpush1.bf16.msra.mxu0 %v825
    %1663 = vmatprep.subr.bf16.mxu0 %v830
    %1664 = vmatpush1.bf16.msra.mxu0 %v829
    %1665 = vmatprep.subr.bf16.mxu0 0
    %1666 = vmatpush1.bf16.msra.mxu0 0
    %1667 = vmatprep.subr.bf16.mxu0 0
    %1668 = vmatpush1.bf16.msra.mxu0 0
    %1669 = vmatprep.subr.bf16.mxu0 0
    %1670 = vmatpush1.bf16.msra.mxu0 0
    %1671 = vmatprep.subr.bf16.mxu0 0
    %1672 = vmatpush1.bf16.msra.mxu0 0
    %1673 = vmatprep.subr.bf16.mxu0 0
    %1674 = vmatpush1.bf16.msra.mxu0 0
    %1675 = vmatprep.subr.bf16.mxu0 0
    %1676 = vmatpush1.bf16.msra.mxu0 0
    %1677 = vmatprep.subr.bf16.mxu0 0
    %1678 = vmatpush1.bf16.msra.mxu0 0
    %1679 = vmatprep.subr.bf16.mxu0 0
    %1680 = vmatpush1.bf16.msra.mxu0 0
    %1681 = vmatprep.mubr.bf16.mxu0 0
    %1682 = vmatmul.mubr.bf16.gmra.mrb[0].mxu0 %v1648
    %v1683 = vpop.f32.mrb[0].mxu0
    %v1684 = vadd.f32 0.0, %v1683
    %v1685 = vpop.f32.mrb[0].mxu0
    %v1686 = vadd.f32 0.0, %v1685
    %v1687 = vpop.f32.mrb[0].mxu0
    %v1688 = vadd.f32 0.0, %v1687
    %v1689 = vpop.f32.mrb[0].mxu0
    %v1690 = vadd.f32 0.0, %v1689
    %1691 = vdwg.mxu0
    %1692 = vmatprep.subr.bf16.mxu0 %v804
    %1693 = vmatpush1.bf16.msra.mxu0 %v803
    %1694 = vmatprep.subr.bf16.mxu0 %v808
    %1695 = vmatpush1.bf16.msra.mxu0 %v807
    %1696 = vmatprep.subr.bf16.mxu0 %v812
    %1697 = vmatpush1.bf16.msra.mxu0 %v811
    %1698 = vmatprep.subr.bf16.mxu0 %v816
    %1699 = vmatpush1.bf16.msra.mxu0 %v815
    %1700 = vmatprep.subr.bf16.mxu0 %v820
    %1701 = vmatpush1.bf16.msra.mxu0 %v819
    %1702 = vmatprep.subr.bf16.mxu0 %v824
    %1703 = vmatpush1.bf16.msra.mxu0 %v823
    %1704 = vmatprep.subr.bf16.mxu0 %v828
    %1705 = vmatpush1.bf16.msra.mxu0 %v827
    %1706 = vmatprep.subr.bf16.mxu0 %v832
    %1707 = vmatpush1.bf16.msra.mxu0 %v831
    %1708 = vmatprep.subr.bf16.mxu0 0
    %1709 = vmatpush1.bf16.msra.mxu0 0
    %1710 = vmatprep.subr.bf16.mxu0 0
    %1711 = vmatpush1.bf16.msra.mxu0 0
    %1712 = vmatprep.subr.bf16.mxu0 0
    %1713 = vmatpush1.bf16.msra.mxu0 0
    %1714 = vmatprep.subr.bf16.mxu0 0
    %1715 = vmatpush1.bf16.msra.mxu0 0
    %1716 = vmatprep.subr.bf16.mxu0 0
    %1717 = vmatpush1.bf16.msra.mxu0 0
    %1718 = vmatprep.subr.bf16.mxu0 0
    %1719 = vmatpush1.bf16.msra.mxu0 0
    %1720 = vmatprep.subr.bf16.mxu0 0
    %1721 = vmatpush1.bf16.msra.mxu0 0
    %1722 = vmatprep.subr.bf16.mxu0 0
    %1723 = vmatpush1.bf16.msra.mxu0 0
    %1724 = vmatprep.mubr.bf16.mxu0 0
    %1725 = vmatmul.mubr.bf16.gmra.mrb[0].mxu0 %v1648
    %v1726 = vpop.f32.mrb[0].mxu0
    %v1727 = vadd.f32 0.0, %v1726
    %v1728 = vpop.f32.mrb[0].mxu0
    %v1729 = vadd.f32 0.0, %v1728
    %v1730 = vpop.f32.mrb[0].mxu0
    %v1731 = vadd.f32 0.0, %v1730
    %v1732 = vpop.f32.mrb[0].mxu0
    %v1733 = vadd.f32 0.0, %v1732
    %1734 = vdwg.mxu0
    %v1735 = vadd.f32 %v1640, %v1684
    %v1736 = vadd.f32 %v1641, %v1686
    %v1737 = vadd.f32 %v1642, %v1727
    %v1738 = vadd.f32 %v1643, %v1729
    %v1739 = vadd.f32 %v1644, %v1688
    %v1740 = vadd.f32 %v1645, %v1690
    %v1741 = vadd.f32 %v1646, %v1731
    %v1742 = vadd.f32 %v1647, %v1733
    %v1743 = vsub.f32 0.0, %v1735
    %v1744 = vsub.f32 0.0, %v1739
    %v1745 = vmul.f32 %v1743, 1.442695
    %v1746 = vpow.pop %v1745
    %v1747 = vmul.f32 %v1744, 1.442695
    %v1748 = vpow.pop %v1747
    %v1749 = vadd.f32 %v1746, 1.0
    %v1750 = vadd.f32 %v1748, 1.0
    %v1751 = vrcp.pop %v1749
    %v1752 = vrcp.pop %v1750
    %v1753 = vtanh.pop %v1737
    %v1754 = vtanh.pop %v1741
    %v1755 = vsub.f32 0.0, %v1736
    %v1756 = vsub.f32 0.0, %v1740
    %v1757 = vmul.f32 %v1755, 1.442695
    %v1758 = vpow.pop %v1757
    %v1759 = vmul.f32 %v1756, 1.442695
    %v1760 = vpow.pop %v1759
    %v1761 = vadd.f32 %v1758, 1.0
    %v1762 = vadd.f32 %v1760, 1.0
    %v1763 = vrcp.pop %v1761
    %v1764 = vrcp.pop %v1762
    %v1765 = vmul.f32 %v1763, %v1635
    %v1766 = vmul.f32 %v1764, %v1636
    %v1767 = vmul.f32 %v1751, %v1753
    %v1768 = vmul.f32 %v1752, %v1754
    %v1769 = vadd.f32 %v1765, %v1767
    %v1770 = vadd.f32 %v1766, %v1768
    %v1771 = vsub.f32 0.0, %v1738
    %v1772 = vsub.f32 0.0, %v1742
    %v1773 = vmul.f32 %v1771, 1.442695
    %v1774 = vpow.pop %v1773
    %v1775 = vmul.f32 %v1772, 1.442695
    %v1776 = vpow.pop %v1775
    %v1777 = vadd.f32 %v1774, 1.0
    %v1778 = vadd.f32 %v1776, 1.0
    %v1779 = vrcp.pop %v1777
    %v1780 = vrcp.pop %v1778
    %v1781 = vtanh.pop %v1769
    %v1782 = vtanh.pop %v1770
    %v1783 = vmul.f32 %v1779, %v1781
    %v1784 = vmul.f32 %v1780, %v1782
    %s1785 = sadd.s32 %s688, 5
    %p1786 = scmp.lt.s32.totalorder %s1785, 8
    %s1787 = scalar_select %p1786, 1, 0
    %v1788 = vstv %s1787
    %vm1789 = vcmp.eq.s32.totalorder %v1788, 1
    %v1790 = vsel %vm1789, %v1783, %v1633
    %v1791 = vsel %vm1789, %v1784, %v1634
    %v1792 = vsel %vm1789, %v1769, %v1635
    %v1793 = vsel %vm1789, %v1770, %v1636
    %s1794 = smul.u32 12, 4
    %s1795 = smul.addr %s1794, 8
    %s1796 = scalar_lea.vmem [#allocation4], %s1795
    %v1797 = vld [vmem:[%s1796] sm:$0xff]
    %v1798 = vld [vmem:[%s1796 + $0x8] sm:$0xff]
    %v1799 = vld [vmem:[%s1796 + $0x10] sm:$0xff]
    %v1800 = vld [vmem:[%s1796 + $0x18] sm:$0xff]
    %v1801 = vld [vmem:[%s1796 + $0x20] sm:$0xff]
    %v1802 = vld [vmem:[%s1796 + $0x28] sm:$0xff]
    %v1803 = vld [vmem:[%s1796 + $0x30] sm:$0xff]
    %v1804 = vld [vmem:[%s1796 + $0x38] sm:$0xff]
    %v1805 = vpack.c.bf16 %v1791, %v1790
    %1806 = vmatprep.subr.bf16.mxu0 %v802
    %1807 = vmatpush1.bf16.msra.mxu0 %v801
    %1808 = vmatprep.subr.bf16.mxu0 %v806
    %1809 = vmatpush1.bf16.msra.mxu0 %v805
    %1810 = vmatprep.subr.bf16.mxu0 %v810
    %1811 = vmatpush1.bf16.msra.mxu0 %v809
    %1812 = vmatprep.subr.bf16.mxu0 %v814
    %1813 = vmatpush1.bf16.msra.mxu0 %v813
    %1814 = vmatprep.subr.bf16.mxu0 %v818
    %1815 = vmatpush1.bf16.msra.mxu0 %v817
    %1816 = vmatprep.subr.bf16.mxu0 %v822
    %1817 = vmatpush1.bf16.msra.mxu0 %v821
    %1818 = vmatprep.subr.bf16.mxu0 %v826
    %1819 = vmatpush1.bf16.msra.mxu0 %v825
    %1820 = vmatprep.subr.bf16.mxu0 %v830
    %1821 = vmatpush1.bf16.msra.mxu0 %v829
    %1822 = vmatprep.subr.bf16.mxu0 0
    %1823 = vmatpush1.bf16.msra.mxu0 0
    %1824 = vmatprep.subr.bf16.mxu0 0
    %1825 = vmatpush1.bf16.msra.mxu0 0
    %1826 = vmatprep.subr.bf16.mxu0 0
    %1827 = vmatpush1.bf16.msra.mxu0 0
    %1828 = vmatprep.subr.bf16.mxu0 0
    %1829 = vmatpush1.bf16.msra.mxu0 0
    %1830 = vmatprep.subr.bf16.mxu0 0
    %1831 = vmatpush1.bf16.msra.mxu0 0
    %1832 = vmatprep.subr.bf16.mxu0 0
    %1833 = vmatpush1.bf16.msra.mxu0 0
    %1834 = vmatprep.subr.bf16.mxu0 0
    %1835 = vmatpush1.bf16.msra.mxu0 0
    %1836 = vmatprep.subr.bf16.mxu0 0
    %1837 = vmatpush1.bf16.msra.mxu0 0
    %1838 = vmatprep.mubr.bf16.mxu0 0
    %1839 = vmatmul.mubr.bf16.gmra.mrb[0].mxu0 %v1805
    %v1840 = vpop.f32.mrb[0].mxu0
    %v1841 = vadd.f32 0.0, %v1840
    %v1842 = vpop.f32.mrb[0].mxu0
    %v1843 = vadd.f32 0.0, %v1842
    %v1844 = vpop.f32.mrb[0].mxu0
    %v1845 = vadd.f32 0.0, %v1844
    %v1846 = vpop.f32.mrb[0].mxu0
    %v1847 = vadd.f32 0.0, %v1846
    %1848 = vdwg.mxu0
    %1849 = vmatprep.subr.bf16.mxu0 %v804
    %1850 = vmatpush1.bf16.msra.mxu0 %v803
    %1851 = vmatprep.subr.bf16.mxu0 %v808
    %1852 = vmatpush1.bf16.msra.mxu0 %v807
    %1853 = vmatprep.subr.bf16.mxu0 %v812
    %1854 = vmatpush1.bf16.msra.mxu0 %v811
    %1855 = vmatprep.subr.bf16.mxu0 %v816
    %1856 = vmatpush1.bf16.msra.mxu0 %v815
    %1857 = vmatprep.subr.bf16.mxu0 %v820
    %1858 = vmatpush1.bf16.msra.mxu0 %v819
    %1859 = vmatprep.subr.bf16.mxu0 %v824
    %1860 = vmatpush1.bf16.msra.mxu0 %v823
    %1861 = vmatprep.subr.bf16.mxu0 %v828
    %1862 = vmatpush1.bf16.msra.mxu0 %v827
    %1863 = vmatprep.subr.bf16.mxu0 %v832
    %1864 = vmatpush1.bf16.msra.mxu0 %v831
    %1865 = vmatprep.subr.bf16.mxu0 0
    %1866 = vmatpush1.bf16.msra.mxu0 0
    %1867 = vmatprep.subr.bf16.mxu0 0
    %1868 = vmatpush1.bf16.msra.mxu0 0
    %1869 = vmatprep.subr.bf16.mxu0 0
    %1870 = vmatpush1.bf16.msra.mxu0 0
    %1871 = vmatprep.subr.bf16.mxu0 0
    %1872 = vmatpush1.bf16.msra.mxu0 0
    %1873 = vmatprep.subr.bf16.mxu0 0
    %1874 = vmatpush1.bf16.msra.mxu0 0
    %1875 = vmatprep.subr.bf16.mxu0 0
    %1876 = vmatpush1.bf16.msra.mxu0 0
    %1877 = vmatprep.subr.bf16.mxu0 0
    %1878 = vmatpush1.bf16.msra.mxu0 0
    %1879 = vmatprep.subr.bf16.mxu0 0
    %1880 = vmatpush1.bf16.msra.mxu0 0
    %1881 = vmatprep.mubr.bf16.mxu0 0
    %1882 = vmatmul.mubr.bf16.gmra.mrb[0].mxu0 %v1805
    %v1883 = vpop.f32.mrb[0].mxu0
    %v1884 = vadd.f32 0.0, %v1883
    %v1885 = vpop.f32.mrb[0].mxu0
    %v1886 = vadd.f32 0.0, %v1885
    %v1887 = vpop.f32.mrb[0].mxu0
    %v1888 = vadd.f32 0.0, %v1887
    %v1889 = vpop.f32.mrb[0].mxu0
    %v1890 = vadd.f32 0.0, %v1889
    %1891 = vdwg.mxu0
    %v1892 = vadd.f32 %v1797, %v1841
    %v1893 = vadd.f32 %v1798, %v1843
    %v1894 = vadd.f32 %v1799, %v1884
    %v1895 = vadd.f32 %v1800, %v1886
    %v1896 = vadd.f32 %v1801, %v1845
    %v1897 = vadd.f32 %v1802, %v1847
    %v1898 = vadd.f32 %v1803, %v1888
    %v1899 = vadd.f32 %v1804, %v1890
    %v1900 = vsub.f32 0.0, %v1892
    %v1901 = vsub.f32 0.0, %v1896
    %v1902 = vmul.f32 %v1900, 1.442695
    %v1903 = vpow.pop %v1902
    %v1904 = vmul.f32 %v1901, 1.442695
    %v1905 = vpow.pop %v1904
    %v1906 = vadd.f32 %v1903, 1.0
    %v1907 = vadd.f32 %v1905, 1.0
    %v1908 = vrcp.pop %v1906
    %v1909 = vrcp.pop %v1907
    %v1910 = vtanh.pop %v1894
    %v1911 = vtanh.pop %v1898
    %v1912 = vsub.f32 0.0, %v1893
    %v1913 = vsub.f32 0.0, %v1897
    %v1914 = vmul.f32 %v1912, 1.442695
    %v1915 = vpow.pop %v1914
    %v1916 = vmul.f32 %v1913, 1.442695
    %v1917 = vpow.pop %v1916
    %v1918 = vadd.f32 %v1915, 1.0
    %v1919 = vadd.f32 %v1917, 1.0
    %v1920 = vrcp.pop %v1918
    %v1921 = vrcp.pop %v1919
    %v1922 = vmul.f32 %v1920, %v1792
    %v1923 = vmul.f32 %v1921, %v1793
    %v1924 = vmul.f32 %v1908, %v1910
    %v1925 = vmul.f32 %v1909, %v1911
    %v1926 = vadd.f32 %v1922, %v1924
    %v1927 = vadd.f32 %v1923, %v1925
    %v1928 = vsub.f32 0.0, %v1895
    %v1929 = vsub.f32 0.0, %v1899
    %v1930 = vmul.f32 %v1928, 1.442695
    %v1931 = vpow.pop %v1930
    %v1932 = vmul.f32 %v1929, 1.442695
    %v1933 = vpow.pop %v1932
    %v1934 = vadd.f32 %v1931, 1.0
    %v1935 = vadd.f32 %v1933, 1.0
    %v1936 = vrcp.pop %v1934
    %v1937 = vrcp.pop %v1935
    %v1938 = vtanh.pop %v1926
    %v1939 = vtanh.pop %v1927
    %v1940 = vmul.f32 %v1936, %v1938
    %v1941 = vmul.f32 %v1937, %v1939
    %s1942 = sadd.s32 %s688, 6
    %p1943 = scmp.lt.s32.totalorder %s1942, 8
    %s1944 = scalar_select %p1943, 1, 0
    %v1945 = vstv %s1944
    %vm1946 = vcmp.eq.s32.totalorder %v1945, 1
    %v1947 = vsel %vm1946, %v1940, %v1790
    %v1948 = vsel %vm1946, %v1941, %v1791
    %v1949 = vsel %vm1946, %v1926, %v1792
    %v1950 = vsel %vm1946, %v1927, %v1793
    %s1951 = smul.u32 14, 4
    %s1952 = smul.addr %s1951, 8
    %s1953 = scalar_lea.vmem [#allocation4], %s1952
    %v1954 = vld [vmem:[%s1953] sm:$0xff]
    %v1955 = vld [vmem:[%s1953 + $0x8] sm:$0xff]
    %v1956 = vld [vmem:[%s1953 + $0x10] sm:$0xff]
    %v1957 = vld [vmem:[%s1953 + $0x18] sm:$0xff]
    %v1958 = vld [vmem:[%s1953 + $0x20] sm:$0xff]
    %v1959 = vld [vmem:[%s1953 + $0x28] sm:$0xff]
    %v1960 = vld [vmem:[%s1953 + $0x30] sm:$0xff]
    %v1961 = vld [vmem:[%s1953 + $0x38] sm:$0xff]
    %v1962 = vpack.c.bf16 %v1948, %v1947
    %1963 = vmatprep.subr.bf16.mxu0 %v802
    %1964 = vmatpush1.bf16.msra.mxu0 %v801
    %1965 = vmatprep.subr.bf16.mxu0 %v806
    %1966 = vmatpush1.bf16.msra.mxu0 %v805
    %1967 = vmatprep.subr.bf16.mxu0 %v810
    %1968 = vmatpush1.bf16.msra.mxu0 %v809
    %1969 = vmatprep.subr.bf16.mxu0 %v814
    %1970 = vmatpush1.bf16.msra.mxu0 %v813
    %1971 = vmatprep.subr.bf16.mxu0 %v818
    %1972 = vmatpush1.bf16.msra.mxu0 %v817
    %1973 = vmatprep.subr.bf16.mxu0 %v822
    %1974 = vmatpush1.bf16.msra.mxu0 %v821
    %1975 = vmatprep.subr.bf16.mxu0 %v826
    %1976 = vmatpush1.bf16.msra.mxu0 %v825
    %1977 = vmatprep.subr.bf16.mxu0 %v830
    %1978 = vmatpush1.bf16.msra.mxu0 %v829
    %1979 = vmatprep.subr.bf16.mxu0 0
    %1980 = vmatpush1.bf16.msra.mxu0 0
    %1981 = vmatprep.subr.bf16.mxu0 0
    %1982 = vmatpush1.bf16.msra.mxu0 0
    %1983 = vmatprep.subr.bf16.mxu0 0
    %1984 = vmatpush1.bf16.msra.mxu0 0
    %1985 = vmatprep.subr.bf16.mxu0 0
    %1986 = vmatpush1.bf16.msra.mxu0 0
    %1987 = vmatprep.subr.bf16.mxu0 0
    %1988 = vmatpush1.bf16.msra.mxu0 0
    %1989 = vmatprep.subr.bf16.mxu0 0
    %1990 = vmatpush1.bf16.msra.mxu0 0
    %1991 = vmatprep.subr.bf16.mxu0 0
    %1992 = vmatpush1.bf16.msra.mxu0 0
    %1993 = vmatprep.subr.bf16.mxu0 0
    %1994 = vmatpush1.bf16.msra.mxu0 0
    %1995 = vmatprep.mubr.bf16.mxu0 0
    %1996 = vmatmul.mubr.bf16.gmra.mrb[0].mxu0 %v1962
    %v1997 = vpop.f32.mrb[0].mxu0
    %v1998 = vadd.f32 0.0, %v1997
    %v1999 = vpop.f32.mrb[0].mxu0
    %v2000 = vadd.f32 0.0, %v1999
    %v2001 = vpop.f32.mrb[0].mxu0
    %v2002 = vadd.f32 0.0, %v2001
    %v2003 = vpop.f32.mrb[0].mxu0
    %v2004 = vadd.f32 0.0, %v2003
    %2005 = vdwg.mxu0
    %2006 = vmatprep.subr.bf16.mxu0 %v804
    %2007 = vmatpush1.bf16.msra.mxu0 %v803
    %2008 = vmatprep.subr.bf16.mxu0 %v808
    %2009 = vmatpush1.bf16.msra.mxu0 %v807
    %2010 = vmatprep.subr.bf16.mxu0 %v812
    %2011 = vmatpush1.bf16.msra.mxu0 %v811
    %2012 = vmatprep.subr.bf16.mxu0 %v816
    %2013 = vmatpush1.bf16.msra.mxu0 %v815
    %2014 = vmatprep.subr.bf16.mxu0 %v820
    %2015 = vmatpush1.bf16.msra.mxu0 %v819
    %2016 = vmatprep.subr.bf16.mxu0 %v824
    %2017 = vmatpush1.bf16.msra.mxu0 %v823
    %2018 = vmatprep.subr.bf16.mxu0 %v828
    %2019 = vmatpush1.bf16.msra.mxu0 %v827
    %2020 = vmatprep.subr.bf16.mxu0 %v832
    %2021 = vmatpush1.bf16.msra.mxu0 %v831
    %2022 = vmatprep.subr.bf16.mxu0 0
    %2023 = vmatpush1.bf16.msra.mxu0 0
    %2024 = vmatprep.subr.bf16.mxu0 0
    %2025 = vmatpush1.bf16.msra.mxu0 0
    %2026 = vmatprep.subr.bf16.mxu0 0
    %2027 = vmatpush1.bf16.msra.mxu0 0
    %2028 = vmatprep.subr.bf16.mxu0 0
    %2029 = vmatpush1.bf16.msra.mxu0 0
    %2030 = vmatprep.subr.bf16.mxu0 0
    %2031 = vmatpush1.bf16.msra.mxu0 0
    %2032 = vmatprep.subr.bf16.mxu0 0
    %2033 = vmatpush1.bf16.msra.mxu0 0
    %2034 = vmatprep.subr.bf16.mxu0 0
    %2035 = vmatpush1.bf16.msra.mxu0 0
    %2036 = vmatprep.subr.bf16.mxu0 0
    %2037 = vmatpush1.bf16.msra.mxu0 0
    %2038 = vmatprep.mubr.bf16.mxu0 0
    %2039 = vmatmul.mubr.bf16.gmra.mrb[0].mxu0 %v1962
    %v2040 = vpop.f32.mrb[0].mxu0
    %v2041 = vadd.f32 0.0, %v2040
    %v2042 = vpop.f32.mrb[0].mxu0
    %v2043 = vadd.f32 0.0, %v2042
    %v2044 = vpop.f32.mrb[0].mxu0
    %v2045 = vadd.f32 0.0, %v2044
    %v2046 = vpop.f32.mrb[0].mxu0
    %v2047 = vadd.f32 0.0, %v2046
    %2048 = vdwg.mxu0
    %v2049 = vadd.f32 %v1954, %v1998
    %v2050 = vadd.f32 %v1955, %v2000
    %v2051 = vadd.f32 %v1956, %v2041
    %v2052 = vadd.f32 %v1957, %v2043
    %v2053 = vadd.f32 %v1958, %v2002
    %v2054 = vadd.f32 %v1959, %v2004
    %v2055 = vadd.f32 %v1960, %v2045
    %v2056 = vadd.f32 %v1961, %v2047
    %v2057 = vsub.f32 0.0, %v2049
    %v2058 = vsub.f32 0.0, %v2053
    %v2059 = vmul.f32 %v2057, 1.442695
    %v2060 = vpow.pop %v2059
    %v2061 = vmul.f32 %v2058, 1.442695
    %v2062 = vpow.pop %v2061
    %v2063 = vadd.f32 %v2060, 1.0
    %v2064 = vadd.f32 %v2062, 1.0
    %v2065 = vrcp.pop %v2063
    %v2066 = vrcp.pop %v2064
    %v2067 = vtanh.pop %v2051
    %v2068 = vtanh.pop %v2055
    %v2069 = vsub.f32 0.0, %v2050
    %v2070 = vsub.f32 0.0, %v2054
    %v2071 = vmul.f32 %v2069, 1.442695
    %v2072 = vpow.pop %v2071
    %v2073 = vmul.f32 %v2070, 1.442695
    %v2074 = vpow.pop %v2073
    %v2075 = vadd.f32 %v2072, 1.0
    %v2076 = vadd.f32 %v2074, 1.0
    %v2077 = vrcp.pop %v2075
    %v2078 = vrcp.pop %v2076
    %v2079 = vmul.f32 %v2077, %v1949
    %v2080 = vmul.f32 %v2078, %v1950
    %v2081 = vmul.f32 %v2065, %v2067
    %v2082 = vmul.f32 %v2066, %v2068
    %v2083 = vadd.f32 %v2079, %v2081
    %v2084 = vadd.f32 %v2080, %v2082
    %v2085 = vsub.f32 0.0, %v2052
    %v2086 = vsub.f32 0.0, %v2056
    %v2087 = vmul.f32 %v2085, 1.442695
    %v2088 = vpow.pop %v2087
    %v2089 = vmul.f32 %v2086, 1.442695
    %v2090 = vpow.pop %v2089
    %v2091 = vadd.f32 %v2088, 1.0
    %v2092 = vadd.f32 %v2090, 1.0
    %v2093 = vrcp.pop %v2091
    %v2094 = vrcp.pop %v2092
    %v2095 = vtanh.pop %v2083
    %v2096 = vtanh.pop %v2084
    %v2097 = vmul.f32 %v2093, %v2095
    %v2098 = vmul.f32 %v2094, %v2096
    %s2099 = sadd.s32 %s688, 7
    %p2100 = scmp.lt.s32.totalorder %s2099, 8
    %s2101 = scalar_select %p2100, 1, 0
    %v2102 = vstv %s2101
    %vm2103 = vcmp.eq.s32.totalorder %v2102, 1
    %v2104 = vsel %vm2103, %v2097, %v1947
    %v2105 = vsel %vm2103, %v2098, %v1948
    %v2106 = vsel %vm2103, %v2083, %v1949
    %v2107 = vsel %vm2103, %v2084, %v1950
    %2108 = vst [vmem:[#allocation2] sm:$0xff] %v2104
    %2109 = vst [vmem:[#allocation2 + $0x8] sm:$0xff] %v2105
    %2110 = vst [vmem:[#allocation3] sm:$0xff] %v2106
    %2111 = vst [vmem:[#allocation3 + $0x8] sm:$0xff] %v2107
    // Predicated region
    $region46: #{tpu_custom_call.1} parent=1 // pred_check
      %p2112 = pneg %p80
    $region47: #{tpu_custom_call.1} parent=1 // pred_check_branch
      %2114 = sbr.rel (%p2112) target = $region49
    $region48: #{tpu_custom_call.1} parent=1 // pred_region
      %v2115 = vpack.c.bf16 %v2105, %v2104
      %v2116 = vld [vmem:[#allocation11] sm:$0xf]
      %v2117 = vld [vmem:[#allocation11 + $0x4] sm:$0xf]
      %v2118 = vld [vmem:[#allocation11 + $0x8] sm:$0xf]
      %v2119 = vld [vmem:[#allocation11 + $0xc] sm:$0xf]
      %v2120 = vld [vmem:[#allocation11 + $0x10] sm:$0xf]
      %v2121 = vld [vmem:[#allocation11 + $0x14] sm:$0xf]
      %v2122 = vld [vmem:[#allocation11 + $0x18] sm:$0xf]
      %v2123 = vld [vmem:[#allocation11 + $0x1c] sm:$0xf]
      %v2124 = vld [vmem:[#allocation11 + $0x20] sm:$0xf]
      %v2125 = vld [vmem:[#allocation11 + $0x24] sm:$0xf]
      %v2126 = vld [vmem:[#allocation11 + $0x28] sm:$0xf]
      %v2127 = vld [vmem:[#allocation11 + $0x2c] sm:$0xf]
      %v2128 = vld [vmem:[#allocation11 + $0x30] sm:$0xf]
      %v2129 = vld [vmem:[#allocation11 + $0x34] sm:$0xf]
      %v2130 = vld [vmem:[#allocation11 + $0x38] sm:$0xf]
      %v2131 = vld [vmem:[#allocation11 + $0x3c] sm:$0xf]
      %v2132 = vld [vmem:[%s5] sm:$0x1]
      %v2134 = vlaneseq
      %v2135 = vshrl.u32 %v2134, 7
      %v2136 = vsub.s32 0, %v2135
      %v2137 = vrot.slane %v2132, %v2136
      %v2155 = vunpack.c.l.b16 %v2116
      %v2156 = vunpack.c.l.b16 %v2117
      %v2157 = vunpack.c.l.b16 %v2118
      %v2158 = vunpack.c.l.b16 %v2119
      %v2159 = vunpack.c.l.b16 %v2120
      %v2160 = vunpack.c.l.b16 %v2121
      %v2161 = vunpack.c.l.b16 %v2122
      %v2162 = vunpack.c.l.b16 %v2123
      %v2163 = vunpack.c.l.b16 %v2124
      %v2164 = vunpack.c.l.b16 %v2125
      %v2165 = vunpack.c.l.b16 %v2126
      %v2166 = vunpack.c.l.b16 %v2127
      %v2167 = vunpack.c.l.b16 %v2128
      %v2168 = vunpack.c.l.b16 %v2129
      %v2169 = vunpack.c.l.b16 %v2130
      %v2170 = vunpack.c.l.b16 %v2131
      %v2171 = vpack.c.b16 %v2156, %v2155
      %v2172 = vpack.c.b16 %v2158, %v2157
      %v2173 = vpack.c.b16 %v2160, %v2159
      %v2174 = vpack.c.b16 %v2162, %v2161
      %v2175 = vpack.c.b16 %v2164, %v2163
      %v2176 = vpack.c.b16 %v2166, %v2165
      %v2177 = vpack.c.b16 %v2168, %v2167
      %v2178 = vpack.c.b16 %v2170, %v2169
      %2187 = vmatprep.subr.bf16.mxu0 0
      %2188 = vmatpush1.bf16.msra.mxu0 %v2171
      %2189 = vmatprep.subr.bf16.mxu0 0
      %2190 = vmatpush1.bf16.msra.mxu0 %v2172
      %2191 = vmatprep.subr.bf16.mxu0 0
      %2192 = vmatpush1.bf16.msra.mxu0 %v2173
      %2193 = vmatprep.subr.bf16.mxu0 0
      %2194 = vmatpush1.bf16.msra.mxu0 %v2174
      %2195 = vmatprep.subr.bf16.mxu0 0
      %2196 = vmatpush1.bf16.msra.mxu0 %v2175
      %2197 = vmatprep.subr.bf16.mxu0 0
      %2198 = vmatpush1.bf16.msra.mxu0 %v2176
      %2199 = vmatprep.subr.bf16.mxu0 0
      %2200 = vmatpush1.bf16.msra.mxu0 %v2177
      %2201 = vmatprep.subr.bf16.mxu0 0
      %2202 = vmatpush1.bf16.msra.mxu0 %v2178
      %2203 = vmatprep.subr.bf16.mxu0 0
      %2204 = vmatpush1.bf16.msra.mxu0 0
      %2205 = vmatprep.subr.bf16.mxu0 0
      %2206 = vmatpush1.bf16.msra.mxu0 0
      %2207 = vmatprep.subr.bf16.mxu0 0
      %2208 = vmatpush1.bf16.msra.mxu0 0
      %2209 = vmatprep.subr.bf16.mxu0 0
      %2210 = vmatpush1.bf16.msra.mxu0 0
      %2211 = vmatprep.subr.bf16.mxu0 0
      %2212 = vmatpush1.bf16.msra.mxu0 0
      %2213 = vmatprep.subr.bf16.mxu0 0
      %2214 = vmatpush1.bf16.msra.mxu0 0
      %2215 = vmatprep.subr.bf16.mxu0 0
      %2216 = vmatpush1.bf16.msra.mxu0 0
      %2217 = vmatprep.subr.bf16.mxu0 0
      %2218 = vmatpush1.bf16.msra.mxu0 0
      %2219 = vmatprep.mubr.bf16.mxu0 0
      %2220 = vmatmul.mubr.bf16.gmra.mrb[0].mxu0 %v2115
      %v2221 = vpop.f32.mrb[0].mxu0
      %v2222 = vadd.f32 %v2137, %v2221
      %v2223 = vpop.f32.mrb[0].mxu0
      %v2224 = vpop.f32.mrb[0].mxu0
      %v2225 = vadd.f32 %v2137, %v2224
      %v2226 = vpop.f32.mrb[0].mxu0
      %2227 = vdwg.mxu0
      %v2228 = vsub.f32 0.0, %v2222
      %v2229 = vsub.f32 0.0, %v2225
      %v2230 = vmul.f32 %v2228, 1.442695
      %v2231 = vpow.pop %v2230
      %v2232 = vmul.f32 %v2229, 1.442695
      %v2233 = vpow.pop %v2232
      %v2234 = vadd.f32 %v2231, 1.0
      %v2235 = vadd.f32 %v2233, 1.0
      %v2236 = vrcp.pop %v2234
      %v2237 = vmul.f32 1.0, %v2236
      %v2238 = vrcp.pop %v2235
      %v2239 = vmul.f32 1.0, %v2238
      %2240 = vst [vmem:[#allocation13] sm:$0xff] %v2237
      %2241 = vst [vmem:[#allocation13 + $0x8] sm:$0xff] %v2239
    $region49: #{tpu_custom_call.1} parent=1 // pred_fallthru
      _
    // Predicated region
    $region50: #{tpu_custom_call.1} parent=1 // pred_check
      _
    $region51: #{tpu_custom_call.1} parent=1 // pred_check_branch
      %2243 = sbr.rel (0) target = $region53
    $region52: #{tpu_custom_call.1} parent=1 // pred_region
      %s2245 = ssub.s32 256, 256
      %2246 = vsyncadd [#allocation7], %s2245
      %s2247 = sshll.u32 [#allocation13], 4
      %s2248 = int_to_ptr.vmem [resolvable:$true] %s2247
      %2253 = dma.vmem_to_hbm [thread:$0]  %s2248, 256, %s6, [#allocation7], 128, 128, 8
    $region53: #{tpu_custom_call.1} parent=1 // pred_fallthru
      _
    // Predicated region
    $region54: #{tpu_custom_call.1} parent=1 // pred_check
      _
    $region55: #{tpu_custom_call.1} parent=1 // pred_check_branch
      %2255 = sbr.rel (0) target = $region57
    $region56: #{tpu_custom_call.1} parent=1 // pred_region
      %2256 = dma.done [#allocation7], 256
    $region57: #{tpu_custom_call.1} parent=1 // pred_fallthru
      _
    %2257 = vsyncpa [#allocation6], 1
    %2258 = vsyncpa [#allocation9], 1
    %2259 = vsyncpa [#allocation12], 1
    %2260 = vsyncpa [#allocation7], 1

// kernel: tpu_custom_call.1
$region0: #{tpu_custom_call.1}
  #allocation0 [shape = 'u32[]', space=smem, size = 0x4, offset = 0x4, fixed_abs, tag = 'smem constant byte address 0x4 - core index']
  #allocation1 [shape = 'u32[144,128]{1,0:T(1,128)}', space=vmem, size = 0x12000, scoped, tag = 'internal scratch']
  #allocation2 [shape = 'f32[16,128]{1,0:T(8,128)}', space=vmem, size = 0x2000, scoped, tag = 'scratch operand']
  #allocation3 [shape = 'f32[16,128]{1,0:T(8,128)}', space=vmem, size = 0x2000, scoped, tag = 'scratch operand']
  #allocation4 [shape = 'f32[128,512]{1,0:T(8,128)}', space=vmem, size = 0x40000, scoped, tag = 'scratch operand']
  %s0 = inlined_call_operand.hbm [shape: bf16[8,16,128], index: 0, kind: input, shape index: {}]
  %s1 = inlined_call_operand.hbm [shape: bf16[128,512], index: 1, kind: input, shape index: {}]
  %s2 = inlined_call_operand.hbm [shape: bf16[128,512], index: 2, kind: input, shape index: {}]
  %s3 = inlined_call_operand.vmem [shape: f32[1,512], index: 3, kind: input, shape index: {}]
  %s4 = inlined_call_operand.hbm [shape: bf16[128,128], index: 4, kind: input, shape index: {}]
  %s5 = inlined_call_operand.vmem [shape: f32[1,128], index: 5, kind: input, shape index: {}]
  %s6 = inlined_call_operand.hbm [shape: f32[16,128], index: 6, kind: output, shape index: {}]
  %s7 = sld [smem:[#allocation0]]
  $region58: #{tpu_custom_call.1} parent=0
    _
  %s9 = ssub.s32 1, %s7
  %s10 = scalar_select 0, %s9, %s7
  $region1: #{tpu_custom_call.1} parent=0
    #allocation5 [shape = 'u8[32768]{0}', space=vmem, size = 0x8000, scoped, tag = 'input window, operand 0, single buffered']
    #allocation6 [shape = 's32[1]{0}', space=sflag, size = 0x4, scoped, tag = 'scoped memory for tpu_custom_call.1']
    #allocation7 [shape = 's32[1]{0}', space=sflag, size = 0x4, scoped, tag = 'scoped memory for tpu_custom_call.1']
    #allocation8 [shape = 'u8[131072]{0}', space=vmem, size = 0x20000, scoped, tag = 'input window, operand 1, single buffered']
    #allocation9 [shape = 's32[1]{0}', space=sflag, size = 0x4, scoped, tag = 'scoped memory for tpu_custom_call.1']
    #allocation10 [shape = 'u8[131072]{0}', space=vmem, size = 0x20000, scoped, tag = 'input window, operand 2, single buffered']
    #allocation11 [shape = 'u8[32768]{0}', space=vmem, size = 0x8000, scoped, tag = 'input window, operand 4, single buffered']
    #allocation12 [shape = 's32[1]{0}', space=sflag, size = 0x4, scoped, tag = 'scoped memory for tpu_custom_call.1']
    #allocation13 [shape = 'u8[8192]{0}', space=vmem, size = 0x2000, scoped, tag = 'output window, operand 0, single buffered']
    %11 = vsyncpa [#allocation6], 0
    %12 = vsyncpa [#allocation9], 0
    %13 = vsyncpa [#allocation12], 0
    %14 = vsyncpa [#allocation7], 0
    // Predicated region
    $region2: #{tpu_custom_call.1} parent=1 // pred_check
      _
    $region3: #{tpu_custom_call.1} parent=1 // pred_check_branch
      %16 = sbr.rel (0) target = $region5
    $region4: #{tpu_custom_call.1} parent=1 // pred_region
      %s18 = ssub.s32 1024, 1024
      %19 = vsyncadd [#allocation6], %s18
      %s20 = sshll.u32 [#allocation5], 4
      %s21 = int_to_ptr.vmem [resolvable:$true] %s20
      %26 = dma.hbm_to_vmem [thread:$0]  %s0, 1024, %s21, [#allocation6], 64, 64, 4
    $region5: #{tpu_custom_call.1} parent=1 // pred_fallthru
      _
    // Predicated region
    $region6: #{tpu_custom_call.1} parent=1 // pred_check
      _
    $region7: #{tpu_custom_call.1} parent=1 // pred_check_branch
      %28 = sbr.rel (0) target = $region9
    $region8: #{tpu_custom_call.1} parent=1 // pred_region
      %s30 = ssub.s32 4096, 4096
      %31 = vsyncadd [#allocation9], %s30
      %s32 = sshll.u32 [#allocation8], 4
      %s33 = int_to_ptr.vmem [resolvable:$true] %s32
      %38 = dma.hbm_to_vmem [thread:$0]  %s1, 4096, %s33, [#allocation9], 256, 256, 16
    $region9: #{tpu_custom_call.1} parent=1 // pred_fallthru
      _
    // Predicated region
    $region10: #{tpu_custom_call.1} parent=1 // pred_check
      _
    $region11: #{tpu_custom_call.1} parent=1 // pred_check_branch
      %40 = sbr.rel (0) target = $region13
    $region12: #{tpu_custom_call.1} parent=1 // pred_region
      %s42 = ssub.s32 4096, 4096
      %43 = vsyncadd [#allocation9], %s42
      %s44 = sshll.u32 [#allocation10], 4
      %s45 = int_to_ptr.vmem [resolvable:$true] %s44
      %50 = dma.hbm_to_vmem [thread:$0]  %s2, 4096, %s45, [#allocation9], 256, 256, 16
    $region13: #{tpu_custom_call.1} parent=1 // pred_fallthru
      _
    // Predicated region
    $region14: #{tpu_custom_call.1} parent=1 // pred_check
      _
    $region15: #{tpu_custom_call.1} parent=1 // pred_check_branch
      %52 = sbr.rel (0) target = $region17
    $region16: #{tpu_custom_call.1} parent=1 // pred_region
      _
    $region17: #{tpu_custom_call.1} parent=1 // pred_fallthru
      _
    // Predicated region
    $region18: #{tpu_custom_call.1} parent=1 // pred_check
      _
    $region19: #{tpu_custom_call.1} parent=1 // pred_check_branch
      %54 = sbr.rel (0) target = $region21
    $region20: #{tpu_custom_call.1} parent=1 // pred_region
      %s56 = ssub.s32 1024, 1024
      %57 = vsyncadd [#allocation12], %s56
      %s58 = sshll.u32 [#allocation11], 4
      %s59 = int_to_ptr.vmem [resolvable:$true] %s58
      %64 = dma.hbm_to_vmem [thread:$0]  %s4, 1024, %s59, [#allocation12], 64, 64, 4
    $region21: #{tpu_custom_call.1} parent=1 // pred_fallthru
      _
    // Predicated region
    $region22: #{tpu_custom_call.1} parent=1 // pred_check
      _
    $region23: #{tpu_custom_call.1} parent=1 // pred_check_branch
      %66 = sbr.rel (0) target = $region25
    $region24: #{tpu_custom_call.1} parent=1 // pred_region
      _
    $region25: #{tpu_custom_call.1} parent=1 // pred_fallthru
      _
    // Predicated region
    $region26: #{tpu_custom_call.1} parent=1 // pred_check
      _
    $region27: #{tpu_custom_call.1} parent=1 // pred_check_branch
      %68 = sbr.rel (0) target = $region29
    $region28: #{tpu_custom_call.1} parent=1 // pred_region
      %69 = dma.done [#allocation6], 1024
    $region29: #{tpu_custom_call.1} parent=1 // pred_fallthru
      _
    // Predicated region
    $region30: #{tpu_custom_call.1} parent=1 // pred_check
      _
    $region31: #{tpu_custom_call.1} parent=1 // pred_check_branch
      %71 = sbr.rel (0) target = $region33
    $region32: #{tpu_custom_call.1} parent=1 // pred_region
      %72 = dma.done [#allocation9], 4096
    $region33: #{tpu_custom_call.1} parent=1 // pred_fallthru
      _
    // Predicated region
    $region34: #{tpu_custom_call.1} parent=1 // pred_check
      _
    $region35: #{tpu_custom_call.1} parent=1 // pred_check_branch
      %74 = sbr.rel (0) target = $region37
    $region36: #{tpu_custom_call.1} parent=1 // pred_region
      %75 = dma.done [#allocation9], 4096
    $region37: #{tpu_custom_call.1} parent=1 // pred_fallthru
      _
    // Predicated region
    $region38: #{tpu_custom_call.1} parent=1 // pred_check
      _
    $region39: #{tpu_custom_call.1} parent=1 // pred_check_branch
      %77 = sbr.rel (0) target = $region41
    $region40: #{tpu_custom_call.1} parent=1 // pred_region
      %78 = dma.done [#allocation12], 1024
    $region41: #{tpu_custom_call.1} parent=1 // pred_fallthru
      _
    %p80 = scmp.eq.s32.totalorder 0, 0
    // Predicated region
    $region42: #{tpu_custom_call.1} parent=1 // pred_check
      %p81 = pneg %p80
    $region43: #{tpu_custom_call.1} parent=1 // pred_check_branch
      %83 = sbr.rel (%p81) target = $region45
    $region44: #{tpu_custom_call.1} parent=1 // pred_region
      %84 = vst [vmem:[#allocation2] sm:$0xff] 0.0
      %85 = vst [vmem:[#allocation2 + $0x8] sm:$0xff] 0.0
      %86 = vst [vmem:[#allocation3] sm:$0xff] 0.0
      %87 = vst [vmem:[#allocation3 + $0x8] sm:$0xff] 0.0
    $region45: #{tpu_custom_call.1} parent=1 // pred_fallthru
      _
    %v88 = vld [vmem:[#allocation5] sm:$0xf]
    %v89 = vld [vmem:[#allocation5 + $0x4] sm:$0xf]
    %v90 = vld [vmem:[#allocation5 + $0x8] sm:$0xf]
    %v91 = vld [vmem:[#allocation5 + $0xc] sm:$0xf]
    %v92 = vld [vmem:[#allocation5 + $0x10] sm:$0xf]
    %v93 = vld [vmem:[#allocation5 + $0x14] sm:$0xf]
    %v94 = vld [vmem:[#allocation5 + $0x18] sm:$0xf]
    %v95 = vld [vmem:[#allocation5 + $0x1c] sm:$0xf]
    %v96 = vld [vmem:[#allocation5 + $0x20] sm:$0xf]
    %v97 = vld [vmem:[#allocation5 + $0x24] sm:$0xf]
    %v98 = vld [vmem:[#allocation5 + $0x28] sm:$0xf]
    %v99 = vld [vmem:[#allocation5 + $0x2c] sm:$0xf]
    %v100 = vld [vmem:[#allocation5 + $0x30] sm:$0xf]
    %v101 = vld [vmem:[#allocation5 + $0x34] sm:$0xf]
    %v102 = vld [vmem:[#allocation5 + $0x38] sm:$0xf]
    %v103 = vld [vmem:[#allocation5 + $0x3c] sm:$0xf]
    %v104 = vld [vmem:[#allocation8] sm:$0xff]
    %v105 = vld [vmem:[#allocation8 + $0x8] sm:$0xff]
    %v106 = vld [vmem:[#allocation8 + $0x10] sm:$0xff]
    %v107 = vld [vmem:[#allocation8 + $0x18] sm:$0xff]
    %v108 = vld [vmem:[#allocation8 + $0x20] sm:$0xff]
    %v109 = vld [vmem:[#allocation8 + $0x28] sm:$0xff]
    %v110 = vld [vmem:[#allocation8 + $0x30] sm:$0xff]
    %v111 = vld [vmem:[#allocation8 + $0x38] sm:$0xff]
    %v112 = vld [vmem:[#allocation8 + $0x40] sm:$0xff]
    %v113 = vld [vmem:[#allocation8 + $0x48] sm:$0xff]
    %v114 = vld [vmem:[#allocation8 + $0x50] sm:$0xff]
    %v115 = vld [vmem:[#allocation8 + $0x58] sm:$0xff]
    %v116 = vld [vmem:[#allocation8 + $0x60] sm:$0xff]
    %v117 = vld [vmem:[#allocation8 + $0x68] sm:$0xff]
    %v118 = vld [vmem:[#allocation8 + $0x70] sm:$0xff]
    %v119 = vld [vmem:[#allocation8 + $0x78] sm:$0xff]
    %v120 = vld [vmem:[#allocation8 + $0x80] sm:$0xff]
    %v121 = vld [vmem:[#allocation8 + $0x88] sm:$0xff]
    %v122 = vld [vmem:[#allocation8 + $0x90] sm:$0xff]
    %v123 = vld [vmem:[#allocation8 + $0x98] sm:$0xff]
    %v124 = vld [vmem:[#allocation8 + $0xa0] sm:$0xff]
    %v125 = vld [vmem:[#allocation8 + $0xa8] sm:$0xff]
    %v126 = vld [vmem:[#allocation8 + $0xb0] sm:$0xff]
    %v127 = vld [vmem:[#allocation8 + $0xb8] sm:$0xff]
    %v128 = vld [vmem:[#allocation8 + $0xc0] sm:$0xff]
    %v129 = vld [vmem:[#allocation8 + $0xc8] sm:$0xff]
    %v130 = vld [vmem:[#allocation8 + $0xd0] sm:$0xff]
    %v131 = vld [vmem:[#allocation8 + $0xd8] sm:$0xff]
    %v132 = vld [vmem:[#allocation8 + $0xe0] sm:$0xff]
    %v133 = vld [vmem:[#allocation8 + $0xe8] sm:$0xff]
    %v134 = vld [vmem:[#allocation8 + $0xf0] sm:$0xff]
    %v135 = vld [vmem:[#allocation8 + $0xf8] sm:$0xff]
    %v136 = vld [vmem:[%s3] sm:$0xf]
    %v138 = vlaneseq
    %v139 = vshrl.u32 %v138, 7
    %v140 = vsub.s32 0, %v139
    %v141 = vrot.slane %v136, %v140
    %v142 = vlaneseq
    %v143 = vshrl.u32 %v142, 7
    %v144 = vsub.s32 1, %v143
    %v145 = vrot.slane %v136, %v144
    %v146 = vlaneseq
    %v147 = vshrl.u32 %v146, 7
    %v148 = vsub.s32 2, %v147
    %v149 = vrot.slane %v136, %v148
    %v150 = vlaneseq
    %v151 = vshrl.u32 %v150, 7
    %v152 = vsub.s32 3, %v151
    %v153 = vrot.slane %v136, %v152
    %v174 = vunpack.c.l.b16 %v88
    %v175 = vunpack.c.l.b16 %v89
    %v176 = vunpack.c.l.b16 %v90
    %v177 = vunpack.c.l.b16 %v91
    %v178 = vunpack.c.l.b16 %v92
    %v179 = vunpack.c.l.b16 %v93
    %v180 = vunpack.c.l.b16 %v94
    %v181 = vunpack.c.l.b16 %v95
    %v182 = vunpack.c.l.b16 %v96
    %v183 = vunpack.c.l.b16 %v97
    %v184 = vunpack.c.l.b16 %v98
    %v185 = vunpack.c.l.b16 %v99
    %v186 = vunpack.c.l.b16 %v100
    %v187 = vunpack.c.l.b16 %v101
    %v188 = vunpack.c.l.b16 %v102
    %v189 = vunpack.c.l.b16 %v103
    %v190 = vpack.c.b16 %v175, %v174
    %v191 = vpack.c.b16 %v177, %v176
    %v192 = vpack.c.b16 %v179, %v178
    %v193 = vpack.c.b16 %v181, %v180
    %v194 = vpack.c.b16 %v183, %v182
    %v195 = vpack.c.b16 %v185, %v184
    %v196 = vpack.c.b16 %v187, %v186
    %v197 = vpack.c.b16 %v189, %v188
    %v238 = vunpack.c.l.b16 %v104
    %v239 = vunpack.c.h.b16 %v104
    %v240 = vunpack.c.l.b16 %v105
    %v241 = vunpack.c.h.b16 %v105
    %v242 = vunpack.c.l.b16 %v106
    %v243 = vunpack.c.h.b16 %v106
    %v244 = vunpack.c.l.b16 %v107
    %v245 = vunpack.c.h.b16 %v107
    %v246 = vunpack.c.l.b16 %v108
    %v247 = vunpack.c.h.b16 %v108
    %v248 = vunpack.c.l.b16 %v109
    %v249 = vunpack.c.h.b16 %v109
    %v250 = vunpack.c.l.b16 %v110
    %v251 = vunpack.c.h.b16 %v110
    %v252 = vunpack.c.l.b16 %v111
    %v253 = vunpack.c.h.b16 %v111
    %v254 = vunpack.c.l.b16 %v112
    %v255 = vunpack.c.h.b16 %v112
    %v256 = vunpack.c.l.b16 %v113
    %v257 = vunpack.c.h.b16 %v113
    %v258 = vunpack.c.l.b16 %v114
    %v259 = vunpack.c.h.b16 %v114
    %v260 = vunpack.c.l.b16 %v115
    %v261 = vunpack.c.h.b16 %v115
    %v262 = vunpack.c.l.b16 %v116
    %v263 = vunpack.c.h.b16 %v116
    %v264 = vunpack.c.l.b16 %v117
    %v265 = vunpack.c.h.b16 %v117
    %v266 = vunpack.c.l.b16 %v118
    %v267 = vunpack.c.h.b16 %v118
    %v268 = vunpack.c.l.b16 %v119
    %v269 = vunpack.c.h.b16 %v119
    %v270 = vunpack.c.l.b16 %v120
    %v271 = vunpack.c.h.b16 %v120
    %v272 = vunpack.c.l.b16 %v121
    %v273 = vunpack.c.h.b16 %v121
    %v274 = vunpack.c.l.b16 %v122
    %v275 = vunpack.c.h.b16 %v122
    %v276 = vunpack.c.l.b16 %v123
    %v277 = vunpack.c.h.b16 %v123
    %v278 = vunpack.c.l.b16 %v124
    %v279 = vunpack.c.h.b16 %v124
    %v280 = vunpack.c.l.b16 %v125
    %v281 = vunpack.c.h.b16 %v125
    %v282 = vunpack.c.l.b16 %v126
    %v283 = vunpack.c.h.b16 %v126
    %v284 = vunpack.c.l.b16 %v127
    %v285 = vunpack.c.h.b16 %v127
    %v286 = vunpack.c.l.b16 %v128
    %v287 = vunpack.c.h.b16 %v128
    %v288 = vunpack.c.l.b16 %v129
    %v289 = vunpack.c.h.b16 %v129
    %v290 = vunpack.c.l.b16 %v130
    %v291 = vunpack.c.h.b16 %v130
    %v292 = vunpack.c.l.b16 %v131
    %v293 = vunpack.c.h.b16 %v131
    %v294 = vunpack.c.l.b16 %v132
    %v295 = vunpack.c.h.b16 %v132
    %v296 = vunpack.c.l.b16 %v133
    %v297 = vunpack.c.h.b16 %v133
    %v298 = vunpack.c.l.b16 %v134
    %v299 = vunpack.c.h.b16 %v134
    %v300 = vunpack.c.l.b16 %v135
    %v301 = vunpack.c.h.b16 %v135
    %v302 = vpack.c.b16 %v242, %v238
    %v303 = vpack.c.b16 %v243, %v239
    %v304 = vpack.c.b16 %v244, %v240
    %v305 = vpack.c.b16 %v245, %v241
    %v306 = vpack.c.b16 %v250, %v246
    %v307 = vpack.c.b16 %v251, %v247
    %v308 = vpack.c.b16 %v252, %v248
    %v309 = vpack.c.b16 %v253, %v249
    %v310 = vpack.c.b16 %v258, %v254
    %v311 = vpack.c.b16 %v259, %v255
    %v312 = vpack.c.b16 %v260, %v256
    %v313 = vpack.c.b16 %v261, %v257
    %v314 = vpack.c.b16 %v266, %v262
    %v315 = vpack.c.b16 %v267, %v263
    %v316 = vpack.c.b16 %v268, %v264
    %v317 = vpack.c.b16 %v269, %v265
    %v318 = vpack.c.b16 %v274, %v270
    %v319 = vpack.c.b16 %v275, %v271
    %v320 = vpack.c.b16 %v276, %v272
    %v321 = vpack.c.b16 %v277, %v273
    %v322 = vpack.c.b16 %v282, %v278
    %v323 = vpack.c.b16 %v283, %v279
    %v324 = vpack.c.b16 %v284, %v280
    %v325 = vpack.c.b16 %v285, %v281
    %v326 = vpack.c.b16 %v290, %v286
    %v327 = vpack.c.b16 %v291, %v287
    %v328 = vpack.c.b16 %v292, %v288
    %v329 = vpack.c.b16 %v293, %v289
    %v330 = vpack.c.b16 %v298, %v294
    %v331 = vpack.c.b16 %v299, %v295
    %v332 = vpack.c.b16 %v300, %v296
    %v333 = vpack.c.b16 %v301, %v297
    %366 = vmatprep.subr.bf16.mxu0 %v303
    %367 = vmatpush1.bf16.msra.mxu0 %v302
    %368 = vmatprep.subr.bf16.mxu0 %v307
    %369 = vmatpush1.bf16.msra.mxu0 %v306
    %370 = vmatprep.subr.bf16.mxu0 %v311
    %371 = vmatpush1.bf16.msra.mxu0 %v310
    %372 = vmatprep.subr.bf16.mxu0 %v315
    %373 = vmatpush1.bf16.msra.mxu0 %v314
    %374 = vmatprep.subr.bf16.mxu0 %v319
    %375 = vmatpush1.bf16.msra.mxu0 %v318
    %376 = vmatprep.subr.bf16.mxu0 %v323
    %377 = vmatpush1.bf16.msra.mxu0 %v322
    %378 = vmatprep.subr.bf16.mxu0 %v327
    %379 = vmatpush1.bf16.msra.mxu0 %v326
    %380 = vmatprep.subr.bf16.mxu0 %v331
    %381 = vmatpush1.bf16.msra.mxu0 %v330
    %382 = vmatprep.subr.bf16.mxu0 0
    %383 = vmatpush1.bf16.msra.mxu0 0
    %384 = vmatprep.subr.bf16.mxu0 0
    %385 = vmatpush1.bf16.msra.mxu0 0
    %386 = vmatprep.subr.bf16.mxu0 0
    %387 = vmatpush1.bf16.msra.mxu0 0
    %388 = vmatprep.subr.bf16.mxu0 0
    %389 = vmatpush1.bf16.msra.mxu0 0
    %390 = vmatprep.subr.bf16.mxu0 0
    %391 = vmatpush1.bf16.msra.mxu0 0
    %392 = vmatprep.subr.bf16.mxu0 0
    %393 = vmatpush1.bf16.msra.mxu0 0
    %394 = vmatprep.subr.bf16.mxu0 0
    %395 = vmatpush1.bf16.msra.mxu0 0
    %396 = vmatprep.subr.bf16.mxu0 0
    %397 = vmatpush1.bf16.msra.mxu0 0
    %398 = vmatprep.mubr.bf16.mxu0 0
    %399 = vmatmul.mubr.bf16.gmra.mrb[0].mxu0 %v190
    %v400 = vpop.f32.mrb[0].mxu0
    %v401 = vadd.f32 %v141, %v400
    %v402 = vpop.f32.mrb[0].mxu0
    %v403 = vadd.f32 %v145, %v402
    %v404 = vpop.f32.mrb[0].mxu0
    %v405 = vadd.f32 %v141, %v404
    %v406 = vpop.f32.mrb[0].mxu0
    %v407 = vadd.f32 %v145, %v406
    %408 = vmatprep.mubr.bf16.mxu0 0
    %409 = vmatmul.mubr.bf16.gmra.mrb[0].mxu0 %v191
    %v410 = vpop.f32.mrb[0].mxu0
    %v411 = vadd.f32 %v141, %v410
    %v412 = vpop.f32.mrb[0].mxu0
    %v413 = vadd.f32 %v145, %v412
    %v414 = vpop.f32.mrb[0].mxu0
    %v415 = vadd.f32 %v141, %v414
    %v416 = vpop.f32.mrb[0].mxu0
    %v417 = vadd.f32 %v145, %v416
    %418 = vmatprep.mubr.bf16.mxu0 0
    %419 = vmatmul.mubr.bf16.gmra.mrb[0].mxu0 %v192
    %v420 = vpop.f32.mrb[0].mxu0
    %v421 = vadd.f32 %v141, %v420
    %v422 = vpop.f32.mrb[0].mxu0
    %v423 = vadd.f32 %v145, %v422
    %v424 = vpop.f32.mrb[0].mxu0
    %v425 = vadd.f32 %v141, %v424
    %v426 = vpop.f32.mrb[0].mxu0
    %v427 = vadd.f32 %v145, %v426
    %428 = vmatprep.mubr.bf16.mxu0 0
    %429 = vmatmul.mubr.bf16.gmra.mrb[0].mxu0 %v193
    %v430 = vpop.f32.mrb[0].mxu0
    %v431 = vadd.f32 %v141, %v430
    %v432 = vpop.f32.mrb[0].mxu0
    %v433 = vadd.f32 %v145, %v432
    %v434 = vpop.f32.mrb[0].mxu0
    %v435 = vadd.f32 %v141, %v434
    %v436 = vpop.f32.mrb[0].mxu0
    %v437 = vadd.f32 %v145, %v436
    %438 = vmatprep.mubr.bf16.mxu0 0
    %439 = vmatmul.mubr.bf16.gmra.mrb[0].mxu0 %v194
    %v440 = vpop.f32.mrb[0].mxu0
    %v441 = vadd.f32 %v141, %v440
    %v442 = vpop.f32.mrb[0].mxu0
    %v443 = vadd.f32 %v145, %v442
    %v444 = vpop.f32.mrb[0].mxu0
    %v445 = vadd.f32 %v141, %v444
    %v446 = vpop.f32.mrb[0].mxu0
    %v447 = vadd.f32 %v145, %v446
    %448 = vmatprep.mubr.bf16.mxu0 0
    %449 = vmatmul.mubr.bf16.gmra.mrb[0].mxu0 %v195
    %v450 = vpop.f32.mrb[0].mxu0
    %v451 = vadd.f32 %v141, %v450
    %v452 = vpop.f32.mrb[0].mxu0
    %v453 = vadd.f32 %v145, %v452
    %v454 = vpop.f32.mrb[0].mxu0
    %v455 = vadd.f32 %v141, %v454
    %v456 = vpop.f32.mrb[0].mxu0
    %v457 = vadd.f32 %v145, %v456
    %458 = vmatprep.mubr.bf16.mxu0 0
    %459 = vmatmul.mubr.bf16.gmra.mrb[0].mxu0 %v196
    %v460 = vpop.f32.mrb[0].mxu0
    %v461 = vadd.f32 %v141, %v460
    %v462 = vpop.f32.mrb[0].mxu0
    %v463 = vadd.f32 %v145, %v462
    %v464 = vpop.f32.mrb[0].mxu0
    %v465 = vadd.f32 %v141, %v464
    %v466 = vpop.f32.mrb[0].mxu0
    %v467 = vadd.f32 %v145, %v466
    %468 = vmatprep.mubr.bf16.mxu0 0
    %469 = vmatmul.mubr.bf16.gmra.mrb[0].mxu0 %v197
    %v470 = vpop.f32.mrb[0].mxu0
    %v471 = vadd.f32 %v141, %v470
    %v472 = vpop.f32.mrb[0].mxu0
    %v473 = vadd.f32 %v145, %v472
    %v474 = vpop.f32.mrb[0].mxu0
    %v475 = vadd.f32 %v141, %v474
    %v476 = vpop.f32.mrb[0].mxu0
    %v477 = vadd.f32 %v145, %v476
    %478 = vdwg.mxu0
    %479 = vmatprep.subr.bf16.mxu0 %v305
    %480 = vmatpush1.bf16.msra.mxu0 %v304
    %481 = vmatprep.subr.bf16.mxu0 %v309
    %482 = vmatpush1.bf16.msra.mxu0 %v308
    %483 = vmatprep.subr.bf16.mxu0 %v313
    %484 = vmatpush1.bf16.msra.mxu0 %v312
    %485 = vmatprep.subr.bf16.mxu0 %v317
    %486 = vmatpush1.bf16.msra.mxu0 %v316
    %487 = vmatprep.subr.bf16.mxu0 %v321
    %488 = vmatpush1.bf16.msra.mxu0 %v320
    %489 = vmatprep.subr.bf16.mxu0 %v325
    %490 = vmatpush1.bf16.msra.mxu0 %v324
    %491 = vmatprep.subr.bf16.mxu0 %v329
    %492 = vmatpush1.bf16.msra.mxu0 %v328
    %493 = vmatprep.subr.bf16.mxu0 %v333
    %494 = vmatpush1.bf16.msra.mxu0 %v332
    %495 = vmatprep.subr.bf16.mxu0 0
    %496 = vmatpush1.bf16.msra.mxu0 0
    %497 = vmatprep.subr.bf16.mxu0 0
    %498 = vmatpush1.bf16.msra.mxu0 0
    %499 = vmatprep.subr.bf16.mxu0 0
    %500 = vmatpush1.bf16.msra.mxu0 0
    %501 = vmatprep.subr.bf16.mxu0 0
    %502 = vmatpush1.bf16.msra.mxu0 0
    %503 = vmatprep.subr.bf16.mxu0 0
    %504 = vmatpush1.bf16.msra.mxu0 0
    %505 = vmatprep.subr.bf16.mxu0 0
    %506 = vmatpush1.bf16.msra.mxu0 0
    %507 = vmatprep.subr.bf16.mxu0 0
    %508 = vmatpush1.bf16.msra.mxu0 0
    %509 = vmatprep.subr.bf16.mxu0 0
    %510 = vmatpush1.bf16.msra.mxu0 0
    %511 = vmatprep.mubr.bf16.mxu0 0
    %512 = vmatmul.mubr.bf16.gmra.mrb[0].mxu0 %v190
    %v513 = vpop.f32.mrb[0].mxu0
    %v514 = vadd.f32 %v149, %v513
    %v515 = vpop.f32.mrb[0].mxu0
    %v516 = vadd.f32 %v153, %v515
    %v517 = vpop.f32.mrb[0].mxu0
    %v518 = vadd.f32 %v149, %v517
    %v519 = vpop.f32.mrb[0].mxu0
    %v520 = vadd.f32 %v153, %v519
    %521 = vmatprep.mubr.bf16.mxu0 0
    %522 = vmatmul.mubr.bf16.gmra.mrb[0].mxu0 %v191
    %v523 = vpop.f32.mrb[0].mxu0
    %v524 = vadd.f32 %v149, %v523
    %v525 = vpop.f32.mrb[0].mxu0
    %v526 = vadd.f32 %v153, %v525
    %v527 = vpop.f32.mrb[0].mxu0
    %v528 = vadd.f32 %v149, %v527
    %v529 = vpop.f32.mrb[0].mxu0
    %v530 = vadd.f32 %v153, %v529
    %531 = vmatprep.mubr.bf16.mxu0 0
    %532 = vmatmul.mubr.bf16.gmra.mrb[0].mxu0 %v192
    %v533 = vpop.f32.mrb[0].mxu0
    %v534 = vadd.f32 %v149, %v533
    %v535 = vpop.f32.mrb[0].mxu0
    %v536 = vadd.f32 %v153, %v535
    %v537 = vpop.f32.mrb[0].mxu0
    %v538 = vadd.f32 %v149, %v537
    %v539 = vpop.f32.mrb[0].mxu0
    %v540 = vadd.f32 %v153, %v539
    %541 = vmatprep.mubr.bf16.mxu0 0
    %542 = vmatmul.mubr.bf16.gmra.mrb[0].mxu0 %v193
    %v543 = vpop.f32.mrb[0].mxu0
    %v544 = vadd.f32 %v149, %v543
    %v545 = vpop.f32.mrb[0].mxu0
    %v546 = vadd.f32 %v153, %v545
    %v547 = vpop.f32.mrb[0].mxu0
    %v548 = vadd.f32 %v149, %v547
    %v549 = vpop.f32.mrb[0].mxu0
    %v550 = vadd.f32 %v153, %v549
    %551 = vmatprep.mubr.bf16.mxu0 0
    %552 = vmatmul.mubr.bf16.gmra.mrb[0].mxu0 %v194
    %v553 = vpop.f32.mrb[0].mxu0
    %v554 = vadd.f32 %v149, %v553
    %v555 = vpop.f32.mrb[0].mxu0
    %v556 = vadd.f32 %v153, %v555
    %v557 = vpop.f32.mrb[0].mxu0
    %v558 = vadd.f32 %v149, %v557
    %v559 = vpop.f32.mrb[0].mxu0
    %v560 = vadd.f32 %v153, %v559
    %561 = vmatprep.mubr.bf16.mxu0 0
    %562 = vmatmul.mubr.bf16.gmra.mrb[0].mxu0 %v195
    %v563 = vpop.f32.mrb[0].mxu0
    %v564 = vadd.f32 %v149, %v563
    %v565 = vpop.f32.mrb[0].mxu0
    %v566 = vadd.f32 %v153, %v565
    %v567 = vpop.f32.mrb[0].mxu0
    %v568 = vadd.f32 %v149, %v567
    %v569 = vpop.f32.mrb[0].mxu0
    %v570 = vadd.f32 %v153, %v569
    %571 = vmatprep.mubr.bf16.mxu0 0
    %572 = vmatmul.mubr.bf16.gmra.mrb[0].mxu0 %v196
    %v573 = vpop.f32.mrb[0].mxu0
    %v574 = vadd.f32 %v149, %v573
    %v575 = vpop.f32.mrb[0].mxu0
    %v576 = vadd.f32 %v153, %v575
    %v577 = vpop.f32.mrb[0].mxu0
    %v578 = vadd.f32 %v149, %v577
    %v579 = vpop.f32.mrb[0].mxu0
    %v580 = vadd.f32 %v153, %v579
    %581 = vmatprep.mubr.bf16.mxu0 0
    %582 = vmatmul.mubr.bf16.gmra.mrb[0].mxu0 %v197
    %v583 = vpop.f32.mrb[0].mxu0
    %v584 = vadd.f32 %v149, %v583
    %v585 = vpop.f32.mrb[0].mxu0
    %v586 = vadd.f32 %v153, %v585
    %v587 = vpop.f32.mrb[0].mxu0
    %v588 = vadd.f32 %v149, %v587
    %v589 = vpop.f32.mrb[0].mxu0
    %v590 = vadd.f32 %v153, %v589
    %591 = vdwg.mxu0
    %592 = vst [vmem:[#allocation4] sm:$0xff] %v401
    %593 = vst [vmem:[#allocation4 + $0x8] sm:$0xff] %v403
    %594 = vst [vmem:[#allocation4 + $0x10] sm:$0xff] %v514
    %595 = vst [vmem:[#allocation4 + $0x18] sm:$0xff] %v516
    %596 = vst [vmem:[#allocation4 + $0x20] sm:$0xff] %v405
    %597 = vst [vmem:[#allocation4 + $0x28] sm:$0xff] %v407
    %598 = vst [vmem:[#allocation4 + $0x30] sm:$0xff] %v518
    %599 = vst [vmem:[#allocation4 + $0x38] sm:$0xff] %v520
    %600 = vst [vmem:[#allocation4 + $0x40] sm:$0xff] %v411
    %601 = vst [vmem:[#allocation4 + $0x48] sm:$0xff] %v413
    %602 = vst [vmem:[#allocation4 + $0x50] sm:$0xff] %v524
    %603 = vst [vmem:[#allocation4 + $0x58] sm:$0xff] %v526
    %604 = vst [vmem:[#allocation4 + $0x60] sm:$0xff] %v415
    %605 = vst [vmem:[#allocation4 + $0x68] sm:$0xff] %v417
    %606 = vst [vmem:[#allocation4 + $0x70] sm:$0xff] %v528
    %607 = vst [vmem:[#allocation4 + $0x78] sm:$0xff] %v530
    %608 = vst [vmem:[#allocation4 + $0x80] sm:$0xff] %v421
    %609 = vst [vmem:[#allocation4 + $0x88] sm:$0xff] %v423
    %610 = vst [vmem:[#allocation4 + $0x90] sm:$0xff] %v534
    %611 = vst [vmem:[#allocation4 + $0x98] sm:$0xff] %v536
    %612 = vst [vmem:[#allocation4 + $0xa0] sm:$0xff] %v425
    %613 = vst [vmem:[#allocation4 + $0xa8] sm:$0xff] %v427
    %614 = vst [vmem:[#allocation4 + $0xb0] sm:$0xff] %v538
    %615 = vst [vmem:[#allocation4 + $0xb8] sm:$0xff] %v540
    %616 = vst [vmem:[#allocation4 + $0xc0] sm:$0xff] %v431
    %617 = vst [vmem:[#allocation4 + $0xc8] sm:$0xff] %v433
    %618 = vst [vmem:[#allocation4 + $0xd0] sm:$0xff] %v544
    %619 = vst [vmem:[#allocation4 + $0xd8] sm:$0xff] %v546
    %620 = vst [vmem:[#allocation4 + $0xe0] sm:$0xff] %v435
    %621 = vst [vmem:[#allocation4 + $0xe8] sm:$0xff] %v437
    %622 = vst [vmem:[#allocation4 + $0xf0] sm:$0xff] %v548
    %623 = vst [vmem:[#allocation4 + $0xf8] sm:$0xff] %v550
    %624 = vst [vmem:[#allocation4 + $0x100] sm:$0xff] %v441
    %625 = vst [vmem:[#allocation4 + $0x108] sm:$0xff] %v443
    %626 = vst [vmem:[#allocation4 + $0x110] sm:$0xff] %v554
    %627 = vst [vmem:[#allocation4 + $0x118] sm:$0xff] %v556
    %628 = vst [vmem:[#allocation4 + $0x120] sm:$0xff] %v445
    %629 = vst [vmem:[#allocation4 + $0x128] sm:$0xff] %v447
    %630 = vst [vmem:[#allocation4 + $0x130] sm:$0xff] %v558
    %631 = vst [vmem:[#allocation4 + $0x138] sm:$0xff] %v560
    %632 = vst [vmem:[#allocation4 + $0x140] sm:$0xff] %v451
    %633 = vst [vmem:[#allocation4 + $0x148] sm:$0xff] %v453
    %634 = vst [vmem:[#allocation4 + $0x150] sm:$0xff] %v564
    %635 = vst [vmem:[#allocation4 + $0x158] sm:$0xff] %v566
    %636 = vst [vmem:[#allocation4 + $0x160] sm:$0xff] %v455
    %637 = vst [vmem:[#allocation4 + $0x168] sm:$0xff] %v457
    %638 = vst [vmem:[#allocation4 + $0x170] sm:$0xff] %v568
    %639 = vst [vmem:[#allocation4 + $0x178] sm:$0xff] %v570
    %640 = vst [vmem:[#allocation4 + $0x180] sm:$0xff] %v461
    %641 = vst [vmem:[#allocation4 + $0x188] sm:$0xff] %v463
    %642 = vst [vmem:[#allocation4 + $0x190] sm:$0xff] %v574
    %643 = vst [vmem:[#allocation4 + $0x198] sm:$0xff] %v576
    %644 = vst [vmem:[#allocation4 + $0x1a0] sm:$0xff] %v465
    %645 = vst [vmem:[#allocation4 + $0x1a8] sm:$0xff] %v467
    %646 = vst [vmem:[#allocation4 + $0x1b0] sm:$0xff] %v578
    %647 = vst [vmem:[#allocation4 + $0x1b8] sm:$0xff] %v580
    %648 = vst [vmem:[#allocation4 + $0x1c0] sm:$0xff] %v471
    %649 = vst [vmem:[#allocation4 + $0x1c8] sm:$0xff] %v473
    %650 = vst [vmem:[#allocation4 + $0x1d0] sm:$0xff] %v584
    %651 = vst [vmem:[#allocation4 + $0x1d8] sm:$0xff] %v586
    %652 = vst [vmem:[#allocation4 + $0x1e0] sm:$0xff] %v475
    %653 = vst [vmem:[#allocation4 + $0x1e8] sm:$0xff] %v477
    %654 = vst [vmem:[#allocation4 + $0x1f0] sm:$0xff] %v588
    %655 = vst [vmem:[#allocation4 + $0x1f8] sm:$0xff] %v590
    %v656 = vld [vmem:[#allocation10] sm:$0xff]
    %v657 = vld [vmem:[#allocation10 + $0x8] sm:$0xff]
    %v658 = vld [vmem:[#allocation10 + $0x10] sm:$0xff]
    %v659 = vld [vmem:[#allocation10 + $0x18] sm:$0xff]
    %v660 = vld [vmem:[#allocation10 + $0x20] sm:$0xff]
    %v661 = vld [vmem:[#allocation10 + $0x28] sm:$0xff]
    %v662 = vld [vmem:[#allocation10 + $0x30] sm:$0xff]
    %v663 = vld [vmem:[#allocation10 + $0x38] sm:$0xff]
    %v664 = vld [vmem:[#allocation10 + $0x40] sm:$0xff]
    %v665 = vld [vmem:[#allocation10 + $0x48] sm:$0xff]
    %v666 = vld [vmem:[#allocation10 + $0x50] sm:$0xff]
    %v667 = vld [vmem:[#allocation10 + $0x58] sm:$0xff]
    %v668 = vld [vmem:[#allocation10 + $0x60] sm:$0xff]
    %v669 = vld [vmem:[#allocation10 + $0x68] sm:$0xff]
    %v670 = vld [vmem:[#allocation10 + $0x70] sm:$0xff]
    %v671 = vld [vmem:[#allocation10 + $0x78] sm:$0xff]
    %v672 = vld [vmem:[#allocation10 + $0x80] sm:$0xff]
    %v673 = vld [vmem:[#allocation10 + $0x88] sm:$0xff]
    %v674 = vld [vmem:[#allocation10 + $0x90] sm:$0xff]
    %v675 = vld [vmem:[#allocation10 + $0x98] sm:$0xff]
    %v676 = vld [vmem:[#allocation10 + $0xa0] sm:$0xff]
    %v677 = vld [vmem:[#allocation10 + $0xa8] sm:$0xff]
    %v678 = vld [vmem:[#allocation10 + $0xb0] sm:$0xff]
    %v679 = vld [vmem:[#allocation10 + $0xb8] sm:$0xff]
    %v680 = vld [vmem:[#allocation10 + $0xc0] sm:$0xff]
    %v681 = vld [vmem:[#allocation10 + $0xc8] sm:$0xff]
    %v682 = vld [vmem:[#allocation10 + $0xd0] sm:$0xff]
    %v683 = vld [vmem:[#allocation10 + $0xd8] sm:$0xff]
    %v684 = vld [vmem:[#allocation10 + $0xe0] sm:$0xff]
    %v685 = vld [vmem:[#allocation10 + $0xe8] sm:$0xff]
    %v686 = vld [vmem:[#allocation10 + $0xf0] sm:$0xff]
    %v687 = vld [vmem:[#allocation10 + $0xf8] sm:$0xff]
    %s688 = smul.u32 0, 8
    %v689 = vld [vmem:[#allocation2] sm:$0xff]
    %v690 = vld [vmem:[#allocation2 + $0x8] sm:$0xff]
    %v691 = vld [vmem:[#allocation3] sm:$0xff]
    %v692 = vld [vmem:[#allocation3 + $0x8] sm:$0xff]
    %s693 = smul.u32 0, 4
    %s694 = smul.addr %s693, 8
    %s695 = scalar_lea.vmem [#allocation4], %s694
    %v696 = vld [vmem:[%s695] sm:$0xff]
    %v697 = vld [vmem:[%s695 + $0x8] sm:$0xff]
    %v698 = vld [vmem:[%s695 + $0x10] sm:$0xff]
    %v699 = vld [vmem:[%s695 + $0x18] sm:$0xff]
    %v700 = vld [vmem:[%s695 + $0x20] sm:$0xff]
    %v701 = vld [vmem:[%s695 + $0x28] sm:$0xff]
    %v702 = vld [vmem:[%s695 + $0x30] sm:$0xff]
    %v703 = vld [vmem:[%s695 + $0x38] sm:$0xff]
    %v704 = vpack.c.bf16 %v690, %v689
    %v737 = vunpack.c.l.b16 %v656
    %v738 = vunpack.c.h.b16 %v656
    %v739 = vunpack.c.l.b16 %v657
    %v740 = vunpack.c.h.b16 %v657
    %v741 = vunpack.c.l.b16 %v658
    %v742 = vunpack.c.h.b16 %v658
    %v743 = vunpack.c.l.b16 %v659
    %v744 = vunpack.c.h.b16 %v659
    %v745 = vunpack.c.l.b16 %v660
    %v746 = vunpack.c.h.b16 %v660
    %v747 = vunpack.c.l.b16 %v661
    %v748 = vunpack.c.h.b16 %v661
    %v749 = vunpack.c.l.b16 %v662
    %v750 = vunpack.c.h.b16 %v662
    %v751 = vunpack.c.l.b16 %v663
    %v752 = vunpack.c.h.b16 %v663
    %v753 = vunpack.c.l.b16 %v664
    %v754 = vunpack.c.h.b16 %v664
    %v755 = vunpack.c.l.b16 %v665
    %v756 = vunpack.c.h.b16 %v665
    %v757 = vunpack.c.l.b16 %v666
    %v758 = vunpack.c.h.b16 %v666
    %v759 = vunpack.c.l.b16 %v667
    %v760 = vunpack.c.h.b16 %v667
    %v761 = vunpack.c.l.b16 %v668
    %v762 = vunpack.c.h.b16 %v668
    %v763 = vunpack.c.l.b16 %v669
    %v764 = vunpack.c.h.b16 %v669
    %v765 = vunpack.c.l.b16 %v670
    %v766 = vunpack.c.h.b16 %v670
    %v767 = vunpack.c.l.b16 %v671
    %v768 = vunpack.c.h.b16 %v671
    %v769 = vunpack.c.l.b16 %v672
    %v770 = vunpack.c.h.b16 %v672
    %v771 = vunpack.c.l.b16 %v673
    %v772 = vunpack.c.h.b16 %v673
    %v773 = vunpack.c.l.b16 %v674
    %v774 = vunpack.c.h.b16 %v674
    %v775 = vunpack.c.l.b16 %v675
    %v776 = vunpack.c.h.b16 %v675
    %v777 = vunpack.c.l.b16 %v676
    %v778 = vunpack.c.h.b16 %v676
    %v779 = vunpack.c.l.b16 %v677
    %v780 = vunpack.c.h.b16 %v677
    %v781 = vunpack.c.l.b16 %v678
    %v782 = vunpack.c.h.b16 %v678
    %v783 = vunpack.c.l.b16 %v679
    %v784 = vunpack.c.h.b16 %v679
    %v785 = vunpack.c.l.b16 %v680
    %v786 = vunpack.c.h.b16 %v680
    %v787 = vunpack.c.l.b16 %v681
    %v788 = vunpack.c.h.b16 %v681
    %v789 = vunpack.c.l.b16 %v682
    %v790 = vunpack.c.h.b16 %v682
    %v791 = vunpack.c.l.b16 %v683
    %v792 = vunpack.c.h.b16 %v683
    %v793 = vunpack.c.l.b16 %v684
    %v794 = vunpack.c.h.b16 %v684
    %v795 = vunpack.c.l.b16 %v685
    %v796 = vunpack.c.h.b16 %v685
    %v797 = vunpack.c.l.b16 %v686
    %v798 = vunpack.c.h.b16 %v686
    %v799 = vunpack.c.l.b16 %v687
    %v800 = vunpack.c.h.b16 %v687
    %v801 = vpack.c.b16 %v741, %v737
    %v802 = vpack.c.b16 %v742, %v738
    %v803 = vpack.c.b16 %v743, %v739
    %v804 = vpack.c.b16 %v744, %v740
    %v805 = vpack.c.b16 %v749, %v745
    %v806 = vpack.c.b16 %v750, %v746
    %v807 = vpack.c.b16 %v751, %v747
    %v808 = vpack.c.b16 %v752, %v748
    %v809 = vpack.c.b16 %v757, %v753
    %v810 = vpack.c.b16 %v758, %v754
    %v811 = vpack.c.b16 %v759, %v755
    %v812 = vpack.c.b16 %v760, %v756
    %v813 = vpack.c.b16 %v765, %v761
    %v814 = vpack.c.b16 %v766, %v762
    %v815 = vpack.c.b16 %v767, %v763
    %v816 = vpack.c.b16 %v768, %v764
    %v817 = vpack.c.b16 %v773, %v769
    %v818 = vpack.c.b16 %v774, %v770
    %v819 = vpack.c.b16 %v775, %v771
    %v820 = vpack.c.b16 %v776, %v772
    %v821 = vpack.c.b16 %v781, %v777
    %v822 = vpack.c.b16 %v782, %v778
    %v823 = vpack.c.b16 %v783, %v779
    %v824 = vpack.c.b16 %v784, %v780
    %v825 = vpack.c.b16 %v789, %v785
    %v826 = vpack.c.b16 %v790, %v786
    %v827 = vpack.c.b16 %v791, %v787
    %v828 = vpack.c.b16 %v792, %v788
    %v829 = vpack.c.b16 %v797, %v793
    %v830 = vpack.c.b16 %v798, %v794
    %v831 = vpack.c.b16 %v799, %v795
    %v832 = vpack.c.b16 %v800, %v796
    %865 = vmatprep.subr.bf16.mxu0 %v802
    %866 = vmatpush1.bf16.msra.mxu0 %v801
    %867 = vmatprep.subr.bf16.mxu0 %v806
    %868 = vmatpush1.bf16.msra.mxu0 %v805
    %869 = vmatprep.subr.bf16.mxu0 %v810
    %870 = vmatpush1.bf16.msra.mxu0 %v809
    %871 = vmatprep.subr.bf16.mxu0 %v814
    %872 = vmatpush1.bf16.msra.mxu0 %v813
    %873 = vmatprep.subr.bf16.mxu0 %v818
    %874 = vmatpush1.bf16.msra.mxu0 %v817
    %875 = vmatprep.subr.bf16.mxu0 %v822
    %876 = vmatpush1.bf16.msra.mxu0 %v821
    %877 = vmatprep.subr.bf16.mxu0 %v826
    %878 = vmatpush1.bf16.msra.mxu0 %v825
    %879 = vmatprep.subr.bf16.mxu0 %v830
    %880 = vmatpush1.bf16.msra.mxu0 %v829
    %881 = vmatprep.subr.bf16.mxu0 0
    %882 = vmatpush1.bf16.msra.mxu0 0
    %883 = vmatprep.subr.bf16.mxu0 0
    %884 = vmatpush1.bf16.msra.mxu0 0
    %885 = vmatprep.subr.bf16.mxu0 0
    %886 = vmatpush1.bf16.msra.mxu0 0
    %887 = vmatprep.subr.bf16.mxu0 0
    %888 = vmatpush1.bf16.msra.mxu0 0
    %889 = vmatprep.subr.bf16.mxu0 0
    %890 = vmatpush1.bf16.msra.mxu0 0
    %891 = vmatprep.subr.bf16.mxu0 0
    %892 = vmatpush1.bf16.msra.mxu0 0
    %893 = vmatprep.subr.bf16.mxu0 0
    %894 = vmatpush1.bf16.msra.mxu0 0
    %895 = vmatprep.subr.bf16.mxu0 0
    %896 = vmatpush1.bf16.msra.mxu0 0
    %897 = vmatprep.mubr.bf16.mxu0 0
    %898 = vmatmul.mubr.bf16.gmra.mrb[0].mxu0 %v704
    %v899 = vpop.f32.mrb[0].mxu0
    %v900 = vadd.f32 0.0, %v899
    %v901 = vpop.f32.mrb[0].mxu0
    %v902 = vadd.f32 0.0, %v901
    %v903 = vpop.f32.mrb[0].mxu0
    %v904 = vadd.f32 0.0, %v903
    %v905 = vpop.f32.mrb[0].mxu0
    %v906 = vadd.f32 0.0, %v905
    %907 = vdwg.mxu0
    %908 = vmatprep.subr.bf16.mxu0 %v804
    %909 = vmatpush1.bf16.msra.mxu0 %v803
    %910 = vmatprep.subr.bf16.mxu0 %v808
    %911 = vmatpush1.bf16.msra.mxu0 %v807
    %912 = vmatprep.subr.bf16.mxu0 %v812
    %913 = vmatpush1.bf16.msra.mxu0 %v811
    %914 = vmatprep.subr.bf16.mxu0 %v816
    %915 = vmatpush1.bf16.msra.mxu0 %v815
    %916 = vmatprep.subr.bf16.mxu0 %v820
    %917 = vmatpush1.bf16.msra.mxu0 %v819
    %918 = vmatprep.subr.bf16.mxu0 %v824
    %919 = vmatpush1.bf16.msra.mxu0 %v823
    %920 = vmatprep.subr.bf16.mxu0 %v828
    %921 = vmatpush1.bf16.msra.mxu0 %v827
    %922 = vmatprep.subr.bf16.mxu0 %v832
    %923 = vmatpush1.bf16.msra.mxu0 %v831
    %924 = vmatprep.subr.bf16.mxu0 0
    %925 = vmatpush1.bf16.msra.mxu0 0
    %926 = vmatprep.subr.bf16.mxu0 0
    %927 = vmatpush1.bf16.msra.mxu0 0
    %928 = vmatprep.subr.bf16.mxu0 0
    %929 = vmatpush1.bf16.msra.mxu0 0
    %930 = vmatprep.subr.bf16.mxu0 0
    %931 = vmatpush1.bf16.msra.mxu0 0
    %932 = vmatprep.subr.bf16.mxu0 0
    %933 = vmatpush1.bf16.msra.mxu0 0
    %934 = vmatprep.subr.bf16.mxu0 0
    %935 = vmatpush1.bf16.msra.mxu0 0
    %936 = vmatprep.subr.bf16.mxu0 0
    %937 = vmatpush1.bf16.msra.mxu0 0
    %938 = vmatprep.subr.bf16.mxu0 0
    %939 = vmatpush1.bf16.msra.mxu0 0
    %940 = vmatprep.mubr.bf16.mxu0 0
    %941 = vmatmul.mubr.bf16.gmra.mrb[0].mxu0 %v704
    %v942 = vpop.f32.mrb[0].mxu0
    %v943 = vadd.f32 0.0, %v942
    %v944 = vpop.f32.mrb[0].mxu0
    %v945 = vadd.f32 0.0, %v944
    %v946 = vpop.f32.mrb[0].mxu0
    %v947 = vadd.f32 0.0, %v946
    %v948 = vpop.f32.mrb[0].mxu0
    %v949 = vadd.f32 0.0, %v948
    %950 = vdwg.mxu0
    %v951 = vadd.f32 %v696, %v900
    %v952 = vadd.f32 %v697, %v902
    %v953 = vadd.f32 %v698, %v943
    %v954 = vadd.f32 %v699, %v945
    %v955 = vadd.f32 %v700, %v904
    %v956 = vadd.f32 %v701, %v906
    %v957 = vadd.f32 %v702, %v947
    %v958 = vadd.f32 %v703, %v949
    %v959 = vsub.f32 0.0, %v951
    %v960 = vsub.f32 0.0, %v955
    %v961 = vmul.f32 %v959, 1.442695
    %v962 = vpow.pop %v961
    %v963 = vmul.f32 %v960, 1.442695
    %v964 = vpow.pop %v963
    %v965 = vadd.f32 %v962, 1.0
    %v966 = vadd.f32 %v964, 1.0
    %v967 = vrcp.pop %v965
    %v968 = vrcp.pop %v966
    %v969 = vtanh.pop %v953
    %v970 = vtanh.pop %v957
    %v971 = vsub.f32 0.0, %v952
    %v972 = vsub.f32 0.0, %v956
    %v973 = vmul.f32 %v971, 1.442695
    %v974 = vpow.pop %v973
    %v975 = vmul.f32 %v972, 1.442695
    %v976 = vpow.pop %v975
    %v977 = vadd.f32 %v974, 1.0
    %v978 = vadd.f32 %v976, 1.0
    %v979 = vrcp.pop %v977
    %v980 = vrcp.pop %v978
    %v981 = vmul.f32 %v979, %v691
    %v982 = vmul.f32 %v980, %v692
    %v983 = vmul.f32 %v967, %v969
    %v984 = vmul.f32 %v968, %v970
    %v985 = vadd.f32 %v981, %v983
    %v986 = vadd.f32 %v982, %v984
    %v987 = vsub.f32 0.0, %v954
    %v988 = vsub.f32 0.0, %v958
    %v989 = vmul.f32 %v987, 1.442695
    %v990 = vpow.pop %v989
    %v991 = vmul.f32 %v988, 1.442695
    %v992 = vpow.pop %v991
    %v993 = vadd.f32 %v990, 1.0
    %v994 = vadd.f32 %v992, 1.0
    %v995 = vrcp.pop %v993
    %v996 = vrcp.pop %v994
    %v997 = vtanh.pop %v985
    %v998 = vtanh.pop %v986
    %v999 = vmul.f32 %v995, %v997
    %v1000 = vmul.f32 %v996, %v998
    %p1001 = scmp.lt.s32.totalorder %s688, 8
    %s1002 = scalar_select %p1001, 1, 0
    %v1003 = vstv %s1002
    %vm1004 = vcmp.eq.s32.totalorder %v1003, 1
    %v1005 = vsel %vm1004, %v999, %v689
    %v1006 = vsel %vm1004, %v1000, %v690
    %v1007 = vsel %vm1004, %v985, %v691
    %v1008 = vsel %vm1004, %v986, %v692
    %s1009 = smul.u32 2, 4
    %s1010 = smul.addr %s1009, 8
    %s1011 = scalar_lea.vmem [#allocation4], %s1010
    %v1012 = vld [vmem:[%s1011] sm:$0xff]
    %v1013 = vld [vmem:[%s1011 + $0x8] sm:$0xff]
    %v1014 = vld [vmem:[%s1011 + $0x10] sm:$0xff]
    %v1015 = vld [vmem:[%s1011 + $0x18] sm:$0xff]
    %v1016 = vld [vmem:[%s1011 + $0x20] sm:$0xff]
    %v1017 = vld [vmem:[%s1011 + $0x28] sm:$0xff]
    %v1018 = vld [vmem:[%s1011 + $0x30] sm:$0xff]
    %v1019 = vld [vmem:[%s1011 + $0x38] sm:$0xff]
    %v1020 = vpack.c.bf16 %v1006, %v1005
    %1021 = vmatprep.subr.bf16.mxu0 %v802
    %1022 = vmatpush1.bf16.msra.mxu0 %v801
    %1023 = vmatprep.subr.bf16.mxu0 %v806
    %1024 = vmatpush1.bf16.msra.mxu0 %v805
    %1025 = vmatprep.subr.bf16.mxu0 %v810
    %1026 = vmatpush1.bf16.msra.mxu0 %v809
    %1027 = vmatprep.subr.bf16.mxu0 %v814
    %1028 = vmatpush1.bf16.msra.mxu0 %v813
    %1029 = vmatprep.subr.bf16.mxu0 %v818
    %1030 = vmatpush1.bf16.msra.mxu0 %v817
    %1031 = vmatprep.subr.bf16.mxu0 %v822
    %1032 = vmatpush1.bf16.msra.mxu0 %v821
    %1033 = vmatprep.subr.bf16.mxu0 %v826
    %1034 = vmatpush1.bf16.msra.mxu0 %v825
    %1035 = vmatprep.subr.bf16.mxu0 %v830
    %1036 = vmatpush1.bf16.msra.mxu0 %v829
    %1037 = vmatprep.subr.bf16.mxu0 0
    %1038 = vmatpush1.bf16.msra.mxu0 0
    %1039 = vmatprep.subr.bf16.mxu0 0
    %1040 = vmatpush1.bf16.msra.mxu0 0
    %1041 = vmatprep.subr.bf16.mxu0 0
    %1042 = vmatpush1.bf16.msra.mxu0 0
    %1043 = vmatprep.subr.bf16.mxu0 0
    %1044 = vmatpush1.bf16.msra.mxu0 0
    %1045 = vmatprep.subr.bf16.mxu0 0
    %1046 = vmatpush1.bf16.msra.mxu0 0
    %1047 = vmatprep.subr.bf16.mxu0 0
    %1048 = vmatpush1.bf16.msra.mxu0 0
    %1049 = vmatprep.subr.bf16.mxu0 0
    %1050 = vmatpush1.bf16.msra.mxu0 0
    %1051 = vmatprep.subr.bf16.mxu0 0
    %1052 = vmatpush1.bf16.msra.mxu0 0
    %1053 = vmatprep.mubr.bf16.mxu0 0
    %1054 = vmatmul.mubr.bf16.gmra.mrb[0].mxu0 %v1020
    %v1055 = vpop.f32.mrb[0].mxu0
    %v1056 = vadd.f32 0.0, %v1055
    %v1057 = vpop.f32.mrb[0].mxu0
    %v1058 = vadd.f32 0.0, %v1057
    %v1059 = vpop.f32.mrb[0].mxu0
    %v1060 = vadd.f32 0.0, %v1059
    %v1061 = vpop.f32.mrb[0].mxu0
    %v1062 = vadd.f32 0.0, %v1061
    %1063 = vdwg.mxu0
    %1064 = vmatprep.subr.bf16.mxu0 %v804
    %1065 = vmatpush1.bf16.msra.mxu0 %v803
    %1066 = vmatprep.subr.bf16.mxu0 %v808
    %1067 = vmatpush1.bf16.msra.mxu0 %v807
    %1068 = vmatprep.subr.bf16.mxu0 %v812
    %1069 = vmatpush1.bf16.msra.mxu0 %v811
    %1070 = vmatprep.subr.bf16.mxu0 %v816
    %1071 = vmatpush1.bf16.msra.mxu0 %v815
    %1072 = vmatprep.subr.bf16.mxu0 %v820
    %1073 = vmatpush1.bf16.msra.mxu0 %v819
    %1074 = vmatprep.subr.bf16.mxu0 %v824
    %1075 = vmatpush1.bf16.msra.mxu0 %v823
    %1076 = vmatprep.subr.bf16.mxu0 %v828
    %1077 = vmatpush1.bf16.msra.mxu0 %v827
    %1078 = vmatprep.subr.bf16.mxu0 %v832
    %1079 = vmatpush1.bf16.msra.mxu0 %v831
    %1080 = vmatprep.subr.bf16.mxu0 0
    %1081 = vmatpush1.bf16.msra.mxu0 0
    %1082 = vmatprep.subr.bf16.mxu0 0
    %1083 = vmatpush1.bf16.msra.mxu0 0
    %1084 = vmatprep.subr.bf16.mxu0 0
    %1085 = vmatpush1.bf16.msra.mxu0 0
    %1086 = vmatprep.subr.bf16.mxu0 0
    %1087 = vmatpush1.bf16.msra.mxu0 0
    %1088 = vmatprep.subr.bf16.mxu0 0
    %1089 = vmatpush1.bf16.msra.mxu0 0
    %1090 = vmatprep.subr.bf16.mxu0 0
    %1091 = vmatpush1.bf16.msra.mxu0 0
    %1092 = vmatprep.subr.bf16.mxu0 0
    %1093 = vmatpush1.bf16.msra.mxu0 0
    %1094 = vmatprep.subr.bf16.mxu0 0
    %1095 = vmatpush1.bf16.msra.mxu0 0
    %1096 = vmatprep.mubr.bf16.mxu0 0
    %1097 = vmatmul.mubr.bf16.gmra.mrb[0].mxu0 %v1020
    %v1098 = vpop.f32.mrb[0].mxu0
    %v1099 = vadd.f32 0.0, %v1098
    %v1100 = vpop.f32.mrb[0].mxu0
    %v1101 = vadd.f32 0.0, %v1100
    %v1102 = vpop.f32.mrb[0].mxu0
    %v1103 = vadd.f32 0.0, %v1102
    %v1104 = vpop.f32.mrb[0].mxu0
    %v1105 = vadd.f32 0.0, %v1104
    %1106 = vdwg.mxu0
    %v1107 = vadd.f32 %v1012, %v1056
    %v1108 = vadd.f32 %v1013, %v1058
    %v1109 = vadd.f32 %v1014, %v1099
    %v1110 = vadd.f32 %v1015, %v1101
    %v1111 = vadd.f32 %v1016, %v1060
    %v1112 = vadd.f32 %v1017, %v1062
    %v1113 = vadd.f32 %v1018, %v1103
    %v1114 = vadd.f32 %v1019, %v1105
    %v1115 = vsub.f32 0.0, %v1107
    %v1116 = vsub.f32 0.0, %v1111
    %v1117 = vmul.f32 %v1115, 1.442695
    %v1118 = vpow.pop %v1117
    %v1119 = vmul.f32 %v1116, 1.442695
    %v1120 = vpow.pop %v1119
    %v1121 = vadd.f32 %v1118, 1.0
    %v1122 = vadd.f32 %v1120, 1.0
    %v1123 = vrcp.pop %v1121
    %v1124 = vrcp.pop %v1122
    %v1125 = vtanh.pop %v1109
    %v1126 = vtanh.pop %v1113
    %v1127 = vsub.f32 0.0, %v1108
    %v1128 = vsub.f32 0.0, %v1112
    %v1129 = vmul.f32 %v1127, 1.442695
    %v1130 = vpow.pop %v1129
    %v1131 = vmul.f32 %v1128, 1.442695
    %v1132 = vpow.pop %v1131
    %v1133 = vadd.f32 %v1130, 1.0
    %v1134 = vadd.f32 %v1132, 1.0
    %v1135 = vrcp.pop %v1133
    %v1136 = vrcp.pop %v1134
    %v1137 = vmul.f32 %v1135, %v1007
    %v1138 = vmul.f32 %v1136, %v1008
    %v1139 = vmul.f32 %v1123, %v1125
    %v1140 = vmul.f32 %v1124, %v1126
    %v1141 = vadd.f32 %v1137, %v1139
    %v1142 = vadd.f32 %v1138, %v1140
    %v1143 = vsub.f32 0.0, %v1110
    %v1144 = vsub.f32 0.0, %v1114
    %v1145 = vmul.f32 %v1143, 1.442695
    %v1146 = vpow.pop %v1145
    %v1147 = vmul.f32 %v1144, 1.442695
    %v1148 = vpow.pop %v1147
    %v1149 = vadd.f32 %v1146, 1.0
    %v1150 = vadd.f32 %v1148, 1.0
    %v1151 = vrcp.pop %v1149
    %v1152 = vrcp.pop %v1150
    %v1153 = vtanh.pop %v1141
    %v1154 = vtanh.pop %v1142
    %v1155 = vmul.f32 %v1151, %v1153
    %v1156 = vmul.f32 %v1152, %v1154
    %s1157 = sadd.s32 %s688, 1
    %p1158 = scmp.lt.s32.totalorder %s1157, 8
    %s1159 = scalar_select %p1158, 1, 0
    %v1160 = vstv %s1159
    %vm1161 = vcmp.eq.s32.totalorder %v1160, 1
    %v1162 = vsel %vm1161, %v1155, %v1005
    %v1163 = vsel %vm1161, %v1156, %v1006
    %v1164 = vsel %vm1161, %v1141, %v1007
    %v1165 = vsel %vm1161, %v1142, %v1008
    %s1166 = smul.u32 4, 4
    %s1167 = smul.addr %s1166, 8
    %s1168 = scalar_lea.vmem [#allocation4], %s1167
    %v1169 = vld [vmem:[%s1168] sm:$0xff]
    %v1170 = vld [vmem:[%s1168 + $0x8] sm:$0xff]
    %v1171 = vld [vmem:[%s1168 + $0x10] sm:$0xff]
    %v1172 = vld [vmem:[%s1168 + $0x18] sm:$0xff]
    %v1173 = vld [vmem:[%s1168 + $0x20] sm:$0xff]
    %v1174 = vld [vmem:[%s1168 + $0x28] sm:$0xff]
    %v1175 = vld [vmem:[%s1168 + $0x30] sm:$0xff]
    %v1176 = vld [vmem:[%s1168 + $0x38] sm:$0xff]
    %v1177 = vpack.c.bf16 %v1163, %v1162
    %1178 = vmatprep.subr.bf16.mxu0 %v802
    %1179 = vmatpush1.bf16.msra.mxu0 %v801
    %1180 = vmatprep.subr.bf16.mxu0 %v806
    %1181 = vmatpush1.bf16.msra.mxu0 %v805
    %1182 = vmatprep.subr.bf16.mxu0 %v810
    %1183 = vmatpush1.bf16.msra.mxu0 %v809
    %1184 = vmatprep.subr.bf16.mxu0 %v814
    %1185 = vmatpush1.bf16.msra.mxu0 %v813
    %1186 = vmatprep.subr.bf16.mxu0 %v818
    %1187 = vmatpush1.bf16.msra.mxu0 %v817
    %1188 = vmatprep.subr.bf16.mxu0 %v822
    %1189 = vmatpush1.bf16.msra.mxu0 %v821
    %1190 = vmatprep.subr.bf16.mxu0 %v826
    %1191 = vmatpush1.bf16.msra.mxu0 %v825
    %1192 = vmatprep.subr.bf16.mxu0 %v830
    %1193 = vmatpush1.bf16.msra.mxu0 %v829
    %1194 = vmatprep.subr.bf16.mxu0 0
    %1195 = vmatpush1.bf16.msra.mxu0 0
    %1196 = vmatprep.subr.bf16.mxu0 0
    %1197 = vmatpush1.bf16.msra.mxu0 0
    %1198 = vmatprep.subr.bf16.mxu0 0
    %1199 = vmatpush1.bf16.msra.mxu0 0
    %1200 = vmatprep.subr.bf16.mxu0 0
    %1201 = vmatpush1.bf16.msra.mxu0 0
    %1202 = vmatprep.subr.bf16.mxu0 0
    %1203 = vmatpush1.bf16.msra.mxu0 0
    %1204 = vmatprep.subr.bf16.mxu0 0
    %1205 = vmatpush1.bf16.msra.mxu0 0
    %1206 = vmatprep.subr.bf16.mxu0 0
    %1207 = vmatpush1.bf16.msra.mxu0 0
    %1208 = vmatprep.subr.bf16.mxu0 0
    %1209 = vmatpush1.bf16.msra.mxu0 0
    %1210 = vmatprep.mubr.bf16.mxu0 0
    %1211 = vmatmul.mubr.bf16.gmra.mrb[0].mxu0 %v1177
    %v1212 = vpop.f32.mrb[0].mxu0
    %v1213 = vadd.f32 0.0, %v1212
    %v1214 = vpop.f32.mrb[0].mxu0
    %v1215 = vadd.f32 0.0, %v1214
    %v1216 = vpop.f32.mrb[0].mxu0
    %v1217 = vadd.f32 0.0, %v1216
    %v1218 = vpop.f32.mrb[0].mxu0
    %v1219 = vadd.f32 0.0, %v1218
    %1220 = vdwg.mxu0
    %1221 = vmatprep.subr.bf16.mxu0 %v804
    %1222 = vmatpush1.bf16.msra.mxu0 %v803
    %1223 = vmatprep.subr.bf16.mxu0 %v808
    %1224 = vmatpush1.bf16.msra.mxu0 %v807
    %1225 = vmatprep.subr.bf16.mxu0 %v812
    %1226 = vmatpush1.bf16.msra.mxu0 %v811
    %1227 = vmatprep.subr.bf16.mxu0 %v816
    %1228 = vmatpush1.bf16.msra.mxu0 %v815
    %1229 = vmatprep.subr.bf16.mxu0 %v820
    %1230 = vmatpush1.bf16.msra.mxu0 %v819
    %1231 = vmatprep.subr.bf16.mxu0 %v824
    %1232 = vmatpush1.bf16.msra.mxu0 %v823
    %1233 = vmatprep.subr.bf16.mxu0 %v828
    %1234 = vmatpush1.bf16.msra.mxu0 %v827
    %1235 = vmatprep.subr.bf16.mxu0 %v832
    %1236 = vmatpush1.bf16.msra.mxu0 %v831
    %1237 = vmatprep.subr.bf16.mxu0 0
    %1238 = vmatpush1.bf16.msra.mxu0 0
    %1239 = vmatprep.subr.bf16.mxu0 0
    %1240 = vmatpush1.bf16.msra.mxu0 0
    %1241 = vmatprep.subr.bf16.mxu0 0
    %1242 = vmatpush1.bf16.msra.mxu0 0
    %1243 = vmatprep.subr.bf16.mxu0 0
    %1244 = vmatpush1.bf16.msra.mxu0 0
    %1245 = vmatprep.subr.bf16.mxu0 0
    %1246 = vmatpush1.bf16.msra.mxu0 0
    %1247 = vmatprep.subr.bf16.mxu0 0
    %1248 = vmatpush1.bf16.msra.mxu0 0
    %1249 = vmatprep.subr.bf16.mxu0 0
    %1250 = vmatpush1.bf16.msra.mxu0 0
    %1251 = vmatprep.subr.bf16.mxu0 0
    %1252 = vmatpush1.bf16.msra.mxu0 0
    %1253 = vmatprep.mubr.bf16.mxu0 0
    %1254 = vmatmul.mubr.bf16.gmra.mrb[0].mxu0 %v1177
    %v1255 = vpop.f32.mrb[0].mxu0
    %v1256 = vadd.f32 0.0, %v1255
    %v1257 = vpop.f32.mrb[0].mxu0
    %v1258 = vadd.f32 0.0, %v1257
    %v1259 = vpop.f32.mrb[0].mxu0
    %v1260 = vadd.f32 0.0, %v1259
    %v1261 = vpop.f32.mrb[0].mxu0
    %v1262 = vadd.f32 0.0, %v1261
    %1263 = vdwg.mxu0
    %v1264 = vadd.f32 %v1169, %v1213
    %v1265 = vadd.f32 %v1170, %v1215
    %v1266 = vadd.f32 %v1171, %v1256
    %v1267 = vadd.f32 %v1172, %v1258
    %v1268 = vadd.f32 %v1173, %v1217
    %v1269 = vadd.f32 %v1174, %v1219
    %v1270 = vadd.f32 %v1175, %v1260
    %v1271 = vadd.f32 %v1176, %v1262
    %v1272 = vsub.f32 0.0, %v1264
    %v1273 = vsub.f32 0.0, %v1268
    %v1274 = vmul.f32 %v1272, 1.442695
    %v1275 = vpow.pop %v1274
    %v1276 = vmul.f32 %v1273, 1.442695
    %v1277 = vpow.pop %v1276
    %v1278 = vadd.f32 %v1275, 1.0
    %v1279 = vadd.f32 %v1277, 1.0
    %v1280 = vrcp.pop %v1278
    %v1281 = vrcp.pop %v1279
    %v1282 = vtanh.pop %v1266
    %v1283 = vtanh.pop %v1270
    %v1284 = vsub.f32 0.0, %v1265
    %v1285 = vsub.f32 0.0, %v1269
    %v1286 = vmul.f32 %v1284, 1.442695
    %v1287 = vpow.pop %v1286
    %v1288 = vmul.f32 %v1285, 1.442695
    %v1289 = vpow.pop %v1288
    %v1290 = vadd.f32 %v1287, 1.0
    %v1291 = vadd.f32 %v1289, 1.0
    %v1292 = vrcp.pop %v1290
    %v1293 = vrcp.pop %v1291
    %v1294 = vmul.f32 %v1292, %v1164
    %v1295 = vmul.f32 %v1293, %v1165
    %v1296 = vmul.f32 %v1280, %v1282
    %v1297 = vmul.f32 %v1281, %v1283
    %v1298 = vadd.f32 %v1294, %v1296
    %v1299 = vadd.f32 %v1295, %v1297
    %v1300 = vsub.f32 0.0, %v1267
    %v1301 = vsub.f32 0.0, %v1271
    %v1302 = vmul.f32 %v1300, 1.442695
    %v1303 = vpow.pop %v1302
    %v1304 = vmul.f32 %v1301, 1.442695
    %v1305 = vpow.pop %v1304
    %v1306 = vadd.f32 %v1303, 1.0
    %v1307 = vadd.f32 %v1305, 1.0
    %v1308 = vrcp.pop %v1306
    %v1309 = vrcp.pop %v1307
    %v1310 = vtanh.pop %v1298
    %v1311 = vtanh.pop %v1299
    %v1312 = vmul.f32 %v1308, %v1310
    %v1313 = vmul.f32 %v1309, %v1311
    %s1314 = sadd.s32 %s688, 2
    %p1315 = scmp.lt.s32.totalorder %s1314, 8
    %s1316 = scalar_select %p1315, 1, 0
    %v1317 = vstv %s1316
    %vm1318 = vcmp.eq.s32.totalorder %v1317, 1
    %v1319 = vsel %vm1318, %v1312, %v1162
    %v1320 = vsel %vm1318, %v1313, %v1163
    %v1321 = vsel %vm1318, %v1298, %v1164
    %v1322 = vsel %vm1318, %v1299, %v1165
    %s1323 = smul.u32 6, 4
    %s1324 = smul.addr %s1323, 8
    %s1325 = scalar_lea.vmem [#allocation4], %s1324
    %v1326 = vld [vmem:[%s1325] sm:$0xff]
    %v1327 = vld [vmem:[%s1325 + $0x8] sm:$0xff]
    %v1328 = vld [vmem:[%s1325 + $0x10] sm:$0xff]
    %v1329 = vld [vmem:[%s1325 + $0x18] sm:$0xff]
    %v1330 = vld [vmem:[%s1325 + $0x20] sm:$0xff]
    %v1331 = vld [vmem:[%s1325 + $0x28] sm:$0xff]
    %v1332 = vld [vmem:[%s1325 + $0x30] sm:$0xff]
    %v1333 = vld [vmem:[%s1325 + $0x38] sm:$0xff]
    %v1334 = vpack.c.bf16 %v1320, %v1319
    %1335 = vmatprep.subr.bf16.mxu0 %v802
    %1336 = vmatpush1.bf16.msra.mxu0 %v801
    %1337 = vmatprep.subr.bf16.mxu0 %v806
    %1338 = vmatpush1.bf16.msra.mxu0 %v805
    %1339 = vmatprep.subr.bf16.mxu0 %v810
    %1340 = vmatpush1.bf16.msra.mxu0 %v809
    %1341 = vmatprep.subr.bf16.mxu0 %v814
    %1342 = vmatpush1.bf16.msra.mxu0 %v813
    %1343 = vmatprep.subr.bf16.mxu0 %v818
    %1344 = vmatpush1.bf16.msra.mxu0 %v817
    %1345 = vmatprep.subr.bf16.mxu0 %v822
    %1346 = vmatpush1.bf16.msra.mxu0 %v821
    %1347 = vmatprep.subr.bf16.mxu0 %v826
    %1348 = vmatpush1.bf16.msra.mxu0 %v825
    %1349 = vmatprep.subr.bf16.mxu0 %v830
    %1350 = vmatpush1.bf16.msra.mxu0 %v829
    %1351 = vmatprep.subr.bf16.mxu0 0
    %1352 = vmatpush1.bf16.msra.mxu0 0
    %1353 = vmatprep.subr.bf16.mxu0 0
    %1354 = vmatpush1.bf16.msra.mxu0 0
    %1355 = vmatprep.subr.bf16.mxu0 0
    %1356 = vmatpush1.bf16.msra.mxu0 0
    %1357 = vmatprep.subr.bf16.mxu0 0
    %1358 = vmatpush1.bf16.msra.mxu0 0
    %1359 = vmatprep.subr.bf16.mxu0 0
    %1360 = vmatpush1.bf16.msra.mxu0 0
    %1361 = vmatprep.subr.bf16.mxu0 0
    %1362 = vmatpush1.bf16.msra.mxu0 0
    %1363 = vmatprep.subr.bf16.mxu0 0
    %1364 = vmatpush1.bf16.msra.mxu0 0
    %1365 = vmatprep.subr.bf16.mxu0 0
    %1366 = vmatpush1.bf16.msra.mxu0 0
    %1367 = vmatprep.mubr.bf16.mxu0 0
    %1368 = vmatmul.mubr.bf16.gmra.mrb[0].mxu0 %v1334
    %v1369 = vpop.f32.mrb[0].mxu0
    %v1370 = vadd.f32 0.0, %v1369
    %v1371 = vpop.f32.mrb[0].mxu0
    %v1372 = vadd.f32 0.0, %v1371
    %v1373 = vpop.f32.mrb[0].mxu0
    %v1374 = vadd.f32 0.0, %v1373
    %v1375 = vpop.f32.mrb[0].mxu0
    %v1376 = vadd.f32 0.0, %v1375
    %1377 = vdwg.mxu0
    %1378 = vmatprep.subr.bf16.mxu0 %v804
    %1379 = vmatpush1.bf16.msra.mxu0 %v803
    %1380 = vmatprep.subr.bf16.mxu0 %v808
    %1381 = vmatpush1.bf16.msra.mxu0 %v807
    %1382 = vmatprep.subr.bf16.mxu0 %v812
    %1383 = vmatpush1.bf16.msra.mxu0 %v811
    %1384 = vmatprep.subr.bf16.mxu0 %v816
    %1385 = vmatpush1.bf16.msra.mxu0 %v815
    %1386 = vmatprep.subr.bf16.mxu0 %v820
    %1387 = vmatpush1.bf16.msra.mxu0 %v819
    %1388 = vmatprep.subr.bf16.mxu0 %v824
    %1389 = vmatpush1.bf16.msra.mxu0 %v823
    %1390 = vmatprep.subr.bf16.mxu0 %v828
    %1391 = vmatpush1.bf16.msra.mxu0 %v827
    %1392 = vmatprep.subr.bf16.mxu0 %v832
    %1393 = vmatpush1.bf16.msra.mxu0 %v831
    %1394 = vmatprep.subr.bf16.mxu0 0
    %1395 = vmatpush1.bf16.msra.mxu0 0
    %1396 = vmatprep.subr.bf16.mxu0 0
    %1397 = vmatpush1.bf16.msra.mxu0 0
    %1398 = vmatprep.subr.bf16.mxu0 0
    %1399 = vmatpush1.bf16.msra.mxu0 0
    %1400 = vmatprep.subr.bf16.mxu0 0
    %1401 = vmatpush1.bf16.msra.mxu0 0
    %1402 = vmatprep.subr.bf16.mxu0 0
    %1403 = vmatpush1.bf16.msra.mxu0 0
    %1404 = vmatprep.subr.bf16.mxu0 0
    %1405 = vmatpush1.bf16.msra.mxu0 0
    %1406 = vmatprep.subr.bf16.mxu0 0
    %1407 = vmatpush1.bf16.msra.mxu0 0
    %1408 = vmatprep.subr.bf16.mxu0 0
    %1409 = vmatpush1.bf16.msra.mxu0 0
    %1410 = vmatprep.mubr.bf16.mxu0 0
    %1411 = vmatmul.mubr.bf16.gmra.mrb[0].mxu0 %v1334
    %v1412 = vpop.f32.mrb[0].mxu0
    %v1413 = vadd.f32 0.0, %v1412
    %v1414 = vpop.f32.mrb[0].mxu0
    %v1415 = vadd.f32 0.0, %v1414
    %v1416 = vpop.f32.mrb[0].mxu0
    %v1417 = vadd.f32 0.0, %v1416
    %v1418 = vpop.f32.mrb[0].mxu0
    %v1419 = vadd.f32 0.0, %v1418
    %1420 = vdwg.mxu0
    %v1421 = vadd.f32 %v1326, %v1370
    %v1422 = vadd.f32 %v1327, %v1372
    %v1423 = vadd.f32 %v1328, %v1413
    %v1424 = vadd.f32 %v1329, %v1415
    %v1425 = vadd.f32 %v1330, %v1374
    %v1426 = vadd.f32 %v1331, %v1376
    %v1427 = vadd.f32 %v1332, %v1417
    %v1428 = vadd.f32 %v1333, %v1419
    %v1429 = vsub.f32 0.0, %v1421
    %v1430 = vsub.f32 0.0, %v1425
    %v1431 = vmul.f32 %v1429, 1.442695
    %v1432 = vpow.pop %v1431
    %v1433 = vmul.f32 %v1430, 1.442695
    %v1434 = vpow.pop %v1433
    %v1435 = vadd.f32 %v1432, 1.0
    %v1436 = vadd.f32 %v1434, 1.0
    %v1437 = vrcp.pop %v1435
    %v1438 = vrcp.pop %v1436
    %v1439 = vtanh.pop %v1423
    %v1440 = vtanh.pop %v1427
    %v1441 = vsub.f32 0.0, %v1422
    %v1442 = vsub.f32 0.0, %v1426
    %v1443 = vmul.f32 %v1441, 1.442695
    %v1444 = vpow.pop %v1443
    %v1445 = vmul.f32 %v1442, 1.442695
    %v1446 = vpow.pop %v1445
    %v1447 = vadd.f32 %v1444, 1.0
    %v1448 = vadd.f32 %v1446, 1.0
    %v1449 = vrcp.pop %v1447
    %v1450 = vrcp.pop %v1448
    %v1451 = vmul.f32 %v1449, %v1321
    %v1452 = vmul.f32 %v1450, %v1322
    %v1453 = vmul.f32 %v1437, %v1439
    %v1454 = vmul.f32 %v1438, %v1440
    %v1455 = vadd.f32 %v1451, %v1453
    %v1456 = vadd.f32 %v1452, %v1454
    %v1457 = vsub.f32 0.0, %v1424
    %v1458 = vsub.f32 0.0, %v1428
    %v1459 = vmul.f32 %v1457, 1.442695
    %v1460 = vpow.pop %v1459
    %v1461 = vmul.f32 %v1458, 1.442695
    %v1462 = vpow.pop %v1461
    %v1463 = vadd.f32 %v1460, 1.0
    %v1464 = vadd.f32 %v1462, 1.0
    %v1465 = vrcp.pop %v1463
    %v1466 = vrcp.pop %v1464
    %v1467 = vtanh.pop %v1455
    %v1468 = vtanh.pop %v1456
    %v1469 = vmul.f32 %v1465, %v1467
    %v1470 = vmul.f32 %v1466, %v1468
    %s1471 = sadd.s32 %s688, 3
    %p1472 = scmp.lt.s32.totalorder %s1471, 8
    %s1473 = scalar_select %p1472, 1, 0
    %v1474 = vstv %s1473
    %vm1475 = vcmp.eq.s32.totalorder %v1474, 1
    %v1476 = vsel %vm1475, %v1469, %v1319
    %v1477 = vsel %vm1475, %v1470, %v1320
    %v1478 = vsel %vm1475, %v1455, %v1321
    %v1479 = vsel %vm1475, %v1456, %v1322
    %s1480 = smul.u32 8, 4
    %s1481 = smul.addr %s1480, 8
    %s1482 = scalar_lea.vmem [#allocation4], %s1481
    %v1483 = vld [vmem:[%s1482] sm:$0xff]
    %v1484 = vld [vmem:[%s1482 + $0x8] sm:$0xff]
    %v1485 = vld [vmem:[%s1482 + $0x10] sm:$0xff]
    %v1486 = vld [vmem:[%s1482 + $0x18] sm:$0xff]
    %v1487 = vld [vmem:[%s1482 + $0x20] sm:$0xff]
    %v1488 = vld [vmem:[%s1482 + $0x28] sm:$0xff]
    %v1489 = vld [vmem:[%s1482 + $0x30] sm:$0xff]
    %v1490 = vld [vmem:[%s1482 + $0x38] sm:$0xff]
    %v1491 = vpack.c.bf16 %v1477, %v1476
    %1492 = vmatprep.subr.bf16.mxu0 %v802
    %1493 = vmatpush1.bf16.msra.mxu0 %v801
    %1494 = vmatprep.subr.bf16.mxu0 %v806
    %1495 = vmatpush1.bf16.msra.mxu0 %v805
    %1496 = vmatprep.subr.bf16.mxu0 %v810
    %1497 = vmatpush1.bf16.msra.mxu0 %v809
    %1498 = vmatprep.subr.bf16.mxu0 %v814
    %1499 = vmatpush1.bf16.msra.mxu0 %v813
    %1500 = vmatprep.subr.bf16.mxu0 %v818
    %1501 = vmatpush1.bf16.msra.mxu0 %v817
    %1502 = vmatprep.subr.bf16.mxu0 %v822
    %1503 = vmatpush1.bf16.msra.mxu0 %v821
    %1504 = vmatprep.subr.bf16.mxu0 %v826
    %1505 = vmatpush1.bf16.msra.mxu0 %v825
    %1506 = vmatprep.subr.bf16.mxu0 %v830
    %1507 = vmatpush1.bf16.msra.mxu0 %v829
    %1508 = vmatprep.subr.bf16.mxu0 0
    %1509 = vmatpush1.bf16.msra.mxu0 0
    %1510 = vmatprep.subr.bf16.mxu0 0
    %1511 = vmatpush1.bf16.msra.mxu0 0
    %1512 = vmatprep.subr.bf16.mxu0 0
    %1513 = vmatpush1.bf16.msra.mxu0 0
    %1514 = vmatprep.subr.bf16.mxu0 0
    %1515 = vmatpush1.bf16.msra.mxu0 0
    %1516 = vmatprep.subr.bf16.mxu0 0
    %1517 = vmatpush1.bf16.msra.mxu0 0
    %1518 = vmatprep.subr.bf16.mxu0 0
    %1519 = vmatpush1.bf16.msra.mxu0 0
    %1520 = vmatprep.subr.bf16.mxu0 0
    %1521 = vmatpush1.bf16.msra.mxu0 0
    %1522 = vmatprep.subr.bf16.mxu0 0
    %1523 = vmatpush1.bf16.msra.mxu0 0
    %1524 = vmatprep.mubr.bf16.mxu0 0
    %1525 = vmatmul.mubr.bf16.gmra.mrb[0].mxu0 %v1491
    %v1526 = vpop.f32.mrb[0].mxu0
    %v1527 = vadd.f32 0.0, %v1526
    %v1528 = vpop.f32.mrb[0].mxu0
    %v1529 = vadd.f32 0.0, %v1528
    %v1530 = vpop.f32.mrb[0].mxu0
    %v1531 = vadd.f32 0.0, %v1530
    %v1532 = vpop.f32.mrb[0].mxu0
    %v1533 = vadd.f32 0.0, %v1532
    %1534 = vdwg.mxu0
    %1535 = vmatprep.subr.bf16.mxu0 %v804
    %1536 = vmatpush1.bf16.msra.mxu0 %v803
    %1537 = vmatprep.subr.bf16.mxu0 %v808
    %1538 = vmatpush1.bf16.msra.mxu0 %v807
    %1539 = vmatprep.subr.bf16.mxu0 %v812
    %1540 = vmatpush1.bf16.msra.mxu0 %v811
    %1541 = vmatprep.subr.bf16.mxu0 %v816
    %1542 = vmatpush1.bf16.msra.mxu0 %v815
    %1543 = vmatprep.subr.bf16.mxu0 %v820
    %1544 = vmatpush1.bf16.msra.mxu0 %v819
    %1545 = vmatprep.subr.bf16.mxu0 %v824
    %1546 = vmatpush1.bf16.msra.mxu0 %v823
    %1547 = vmatprep.subr.bf16.mxu0 %v828
    %1548 = vmatpush1.bf16.msra.mxu0 %v827
    %1549 = vmatprep.subr.bf16.mxu0 %v832
    %1550 = vmatpush1.bf16.msra.mxu0 %v831
    %1551 = vmatprep.subr.bf16.mxu0 0
    %1552 = vmatpush1.bf16.msra.mxu0 0
    %1553 = vmatprep.subr.bf16.mxu0 0
    %1554 = vmatpush1.bf16.msra.mxu0 0
    %1555 = vmatprep.subr.bf16.mxu0 0
    %1556 = vmatpush1.bf16.msra.mxu0 0
    %1557 = vmatprep.subr.bf16.mxu0 0
    %1558 = vmatpush1.bf16.msra.mxu0 0
    %1559 = vmatprep.subr.bf16.mxu0 0
    %1560 = vmatpush1.bf16.msra.mxu0 0
    %1561 = vmatprep.subr.bf16.mxu0 0
    %1562 = vmatpush1.bf16.msra.mxu0 0
    %1563 = vmatprep.subr.bf16.mxu0 0
    %1564 = vmatpush1.bf16.msra.mxu0 0
    %1565 = vmatprep.subr.bf16.mxu0 0
    %1566 = vmatpush1.bf16.msra.mxu0 0
    %1567 = vmatprep.mubr.bf16.mxu0 0
    %1568 = vmatmul.mubr.bf16.gmra.mrb[0].mxu0 %v1491
    %v1569 = vpop.f32.mrb[0].mxu0
    %v1570 = vadd.f32 0.0, %v1569
    %v1571 = vpop.f32.mrb[0].mxu0
    %v1572 = vadd.f32 0.0, %v1571
    %v1573 = vpop.f32.mrb[0].mxu0
    %v1574 = vadd.f32 0.0, %v1573
    %v1575 = vpop.f32.mrb[0].mxu0
    %v1576 = vadd.f32 0.0, %v1575
    %1577 = vdwg.mxu0
    %v1578 = vadd.f32 %v1483, %v1527
    %v1579 = vadd.f32 %v1484, %v1529
    %v1580 = vadd.f32 %v1485, %v1570
    %v1581 = vadd.f32 %v1486, %v1572
    %v1582 = vadd.f32 %v1487, %v1531
    %v1583 = vadd.f32 %v1488, %v1533
    %v1584 = vadd.f32 %v1489, %v1574
    %v1585 = vadd.f32 %v1490, %v1576
    %v1586 = vsub.f32 0.0, %v1578
    %v1587 = vsub.f32 0.0, %v1582
    %v1588 = vmul.f32 %v1586, 1.442695
    %v1589 = vpow.pop %v1588
    %v1590 = vmul.f32 %v1587, 1.442695
    %v1591 = vpow.pop %v1590
    %v1592 = vadd.f32 %v1589, 1.0
    %v1593 = vadd.f32 %v1591, 1.0
    %v1594 = vrcp.pop %v1592
    %v1595 = vrcp.pop %v1593
    %v1596 = vtanh.pop %v1580
    %v1597 = vtanh.pop %v1584
    %v1598 = vsub.f32 0.0, %v1579
    %v1599 = vsub.f32 0.0, %v1583
    %v1600 = vmul.f32 %v1598, 1.442695
    %v1601 = vpow.pop %v1600
    %v1602 = vmul.f32 %v1599, 1.442695
    %v1603 = vpow.pop %v1602
    %v1604 = vadd.f32 %v1601, 1.0
    %v1605 = vadd.f32 %v1603, 1.0
    %v1606 = vrcp.pop %v1604
    %v1607 = vrcp.pop %v1605
    %v1608 = vmul.f32 %v1606, %v1478
    %v1609 = vmul.f32 %v1607, %v1479
    %v1610 = vmul.f32 %v1594, %v1596
    %v1611 = vmul.f32 %v1595, %v1597
    %v1612 = vadd.f32 %v1608, %v1610
    %v1613 = vadd.f32 %v1609, %v1611
    %v1614 = vsub.f32 0.0, %v1581
    %v1615 = vsub.f32 0.0, %v1585
    %v1616 = vmul.f32 %v1614, 1.442695
    %v1617 = vpow.pop %v1616
    %v1618 = vmul.f32 %v1615, 1.442695
    %v1619 = vpow.pop %v1618
    %v1620 = vadd.f32 %v1617, 1.0
    %v1621 = vadd.f32 %v1619, 1.0
    %v1622 = vrcp.pop %v1620
    %v1623 = vrcp.pop %v1621
    %v1624 = vtanh.pop %v1612
    %v1625 = vtanh.pop %v1613
    %v1626 = vmul.f32 %v1622, %v1624
    %v1627 = vmul.f32 %v1623, %v1625
    %s1628 = sadd.s32 %s688, 4
    %p1629 = scmp.lt.s32.totalorder %s1628, 8
    %s1630 = scalar_select %p1629, 1, 0
    %v1631 = vstv %s1630
    %vm1632 = vcmp.eq.s32.totalorder %v1631, 1
    %v1633 = vsel %vm1632, %v1626, %v1476
    %v1634 = vsel %vm1632, %v1627, %v1477
    %v1635 = vsel %vm1632, %v1612, %v1478
    %v1636 = vsel %vm1632, %v1613, %v1479
    %s1637 = smul.u32 10, 4
    %s1638 = smul.addr %s1637, 8
    %s1639 = scalar_lea.vmem [#allocation4], %s1638
    %v1640 = vld [vmem:[%s1639] sm:$0xff]
    %v1641 = vld [vmem:[%s1639 + $0x8] sm:$0xff]
    %v1642 = vld [vmem:[%s1639 + $0x10] sm:$0xff]
    %v1643 = vld [vmem:[%s1639 + $0x18] sm:$0xff]
    %v1644 = vld [vmem:[%s1639 + $0x20] sm:$0xff]
    %v1645 = vld [vmem:[%s1639 + $0x28] sm:$0xff]
    %v1646 = vld [vmem:[%s1639 + $0x30] sm:$0xff]
    %v1647 = vld [vmem:[%s1639 + $0x38] sm:$0xff]
    %v1648 = vpack.c.bf16 %v1634, %v1633
    %1649 = vmatprep.subr.bf16.mxu0 %v802
    %1650 = vmatpush1.bf16.msra.mxu0 %v801
    %1651 = vmatprep.subr.bf16.mxu0 %v806
    %1652 = vmatpush1.bf16.msra.mxu0 %v805
    %1653 = vmatprep.subr.bf16.mxu0 %v810
    %1654 = vmatpush1.bf16.msra.mxu0 %v809
    %1655 = vmatprep.subr.bf16.mxu0 %v814
    %1656 = vmatpush1.bf16.msra.mxu0 %v813
    %1657 = vmatprep.subr.bf16.mxu0 %v818
    %1658 = vmatpush1.bf16.msra.mxu0 %v817
    %1659 = vmatprep.subr.bf16.mxu0 %v822
    %1660 = vmatpush1.bf16.msra.mxu0 %v821
    %1661 = vmatprep.subr.bf16.mxu0 %v826
    %1662 = vmatpush1.bf16.msra.mxu0 %v825
    %1663 = vmatprep.subr.bf16.mxu0 %v830
    %1664 = vmatpush1.bf16.msra.mxu0 %v829
    %1665 = vmatprep.subr.bf16.mxu0 0
    %1666 = vmatpush1.bf16.msra.mxu0 0
    %1667 = vmatprep.subr.bf16.mxu0 0
    %1668 = vmatpush1.bf16.msra.mxu0 0
    %1669 = vmatprep.subr.bf16.mxu0 0
    %1670 = vmatpush1.bf16.msra.mxu0 0
    %1671 = vmatprep.subr.bf16.mxu0 0
    %1672 = vmatpush1.bf16.msra.mxu0 0
    %1673 = vmatprep.subr.bf16.mxu0 0
    %1674 = vmatpush1.bf16.msra.mxu0 0
    %1675 = vmatprep.subr.bf16.mxu0 0
    %1676 = vmatpush1.bf16.msra.mxu0 0
    %1677 = vmatprep.subr.bf16.mxu0 0
    %1678 = vmatpush1.bf16.msra.mxu0 0
    %1679 = vmatprep.subr.bf16.mxu0 0
    %1680 = vmatpush1.bf16.msra.mxu0 0
    %1681 = vmatprep.mubr.bf16.mxu0 0
    %1682 = vmatmul.mubr.bf16.gmra.mrb[0].mxu0 %v1648
    %v1683 = vpop.f32.mrb[0].mxu0
    %v1684 = vadd.f32 0.0, %v1683
    %v1685 = vpop.f32.mrb[0].mxu0
    %v1686 = vadd.f32 0.0, %v1685
    %v1687 = vpop.f32.mrb[0].mxu0
    %v1688 = vadd.f32 0.0, %v1687
    %v1689 = vpop.f32.mrb[0].mxu0
    %v1690 = vadd.f32 0.0, %v1689
    %1691 = vdwg.mxu0
    %1692 = vmatprep.subr.bf16.mxu0 %v804
    %1693 = vmatpush1.bf16.msra.mxu0 %v803
    %1694 = vmatprep.subr.bf16.mxu0 %v808
    %1695 = vmatpush1.bf16.msra.mxu0 %v807
    %1696 = vmatprep.subr.bf16.mxu0 %v812
    %1697 = vmatpush1.bf16.msra.mxu0 %v811
    %1698 = vmatprep.subr.bf16.mxu0 %v816
    %1699 = vmatpush1.bf16.msra.mxu0 %v815
    %1700 = vmatprep.subr.bf16.mxu0 %v820
    %1701 = vmatpush1.bf16.msra.mxu0 %v819
    %1702 = vmatprep.subr.bf16.mxu0 %v824
    %1703 = vmatpush1.bf16.msra.mxu0 %v823
    %1704 = vmatprep.subr.bf16.mxu0 %v828
    %1705 = vmatpush1.bf16.msra.mxu0 %v827
    %1706 = vmatprep.subr.bf16.mxu0 %v832
    %1707 = vmatpush1.bf16.msra.mxu0 %v831
    %1708 = vmatprep.subr.bf16.mxu0 0
    %1709 = vmatpush1.bf16.msra.mxu0 0
    %1710 = vmatprep.subr.bf16.mxu0 0
    %1711 = vmatpush1.bf16.msra.mxu0 0
    %1712 = vmatprep.subr.bf16.mxu0 0
    %1713 = vmatpush1.bf16.msra.mxu0 0
    %1714 = vmatprep.subr.bf16.mxu0 0
    %1715 = vmatpush1.bf16.msra.mxu0 0
    %1716 = vmatprep.subr.bf16.mxu0 0
    %1717 = vmatpush1.bf16.msra.mxu0 0
    %1718 = vmatprep.subr.bf16.mxu0 0
    %1719 = vmatpush1.bf16.msra.mxu0 0
    %1720 = vmatprep.subr.bf16.mxu0 0
    %1721 = vmatpush1.bf16.msra.mxu0 0
    %1722 = vmatprep.subr.bf16.mxu0 0
    %1723 = vmatpush1.bf16.msra.mxu0 0
    %1724 = vmatprep.mubr.bf16.mxu0 0
    %1725 = vmatmul.mubr.bf16.gmra.mrb[0].mxu0 %v1648
    %v1726 = vpop.f32.mrb[0].mxu0
    %v1727 = vadd.f32 0.0, %v1726
    %v1728 = vpop.f32.mrb[0].mxu0
    %v1729 = vadd.f32 0.0, %v1728
    %v1730 = vpop.f32.mrb[0].mxu0
    %v1731 = vadd.f32 0.0, %v1730
    %v1732 = vpop.f32.mrb[0].mxu0
    %v1733 = vadd.f32 0.0, %v1732
    %1734 = vdwg.mxu0
    %v1735 = vadd.f32 %v1640, %v1684
    %v1736 = vadd.f32 %v1641, %v1686
    %v1737 = vadd.f32 %v1642, %v1727
    %v1738 = vadd.f32 %v1643, %v1729
    %v1739 = vadd.f32 %v1644, %v1688
    %v1740 = vadd.f32 %v1645, %v1690
    %v1741 = vadd.f32 %v1646, %v1731
    %v1742 = vadd.f32 %v1647, %v1733
    %v1743 = vsub.f32 0.0, %v1735
    %v1744 = vsub.f32 0.0, %v1739
    %v1745 = vmul.f32 %v1743, 1.442695
    %v1746 = vpow.pop %v1745
    %v1747 = vmul.f32 %v1744, 1.442695
    %v1748 = vpow.pop %v1747
    %v1749 = vadd.f32 %v1746, 1.0
    %v1750 = vadd.f32 %v1748, 1.0
    %v1751 = vrcp.pop %v1749
    %v1752 = vrcp.pop %v1750
    %v1753 = vtanh.pop %v1737
    %v1754 = vtanh.pop %v1741
    %v1755 = vsub.f32 0.0, %v1736
    %v1756 = vsub.f32 0.0, %v1740
    %v1757 = vmul.f32 %v1755, 1.442695
    %v1758 = vpow.pop %v1757
    %v1759 = vmul.f32 %v1756, 1.442695
    %v1760 = vpow.pop %v1759
    %v1761 = vadd.f32 %v1758, 1.0
    %v1762 = vadd.f32 %v1760, 1.0
    %v1763 = vrcp.pop %v1761
    %v1764 = vrcp.pop %v1762
    %v1765 = vmul.f32 %v1763, %v1635
    %v1766 = vmul.f32 %v1764, %v1636
    %v1767 = vmul.f32 %v1751, %v1753
    %v1768 = vmul.f32 %v1752, %v1754
    %v1769 = vadd.f32 %v1765, %v1767
    %v1770 = vadd.f32 %v1766, %v1768
    %v1771 = vsub.f32 0.0, %v1738
    %v1772 = vsub.f32 0.0, %v1742
    %v1773 = vmul.f32 %v1771, 1.442695
    %v1774 = vpow.pop %v1773
    %v1775 = vmul.f32 %v1772, 1.442695
    %v1776 = vpow.pop %v1775
    %v1777 = vadd.f32 %v1774, 1.0
    %v1778 = vadd.f32 %v1776, 1.0
    %v1779 = vrcp.pop %v1777
    %v1780 = vrcp.pop %v1778
    %v1781 = vtanh.pop %v1769
    %v1782 = vtanh.pop %v1770
    %v1783 = vmul.f32 %v1779, %v1781
    %v1784 = vmul.f32 %v1780, %v1782
    %s1785 = sadd.s32 %s688, 5
    %p1786 = scmp.lt.s32.totalorder %s1785, 8
    %s1787 = scalar_select %p1786, 1, 0
    %v1788 = vstv %s1787
    %vm1789 = vcmp.eq.s32.totalorder %v1788, 1
    %v1790 = vsel %vm1789, %v1783, %v1633
    %v1791 = vsel %vm1789, %v1784, %v1634
    %v1792 = vsel %vm1789, %v1769, %v1635
    %v1793 = vsel %vm1789, %v1770, %v1636
    %s1794 = smul.u32 12, 4
    %s1795 = smul.addr %s1794, 8
    %s1796 = scalar_lea.vmem [#allocation4], %s1795
    %v1797 = vld [vmem:[%s1796] sm:$0xff]
    %v1798 = vld [vmem:[%s1796 + $0x8] sm:$0xff]
    %v1799 = vld [vmem:[%s1796 + $0x10] sm:$0xff]
    %v1800 = vld [vmem:[%s1796 + $0x18] sm:$0xff]
    %v1801 = vld [vmem:[%s1796 + $0x20] sm:$0xff]
    %v1802 = vld [vmem:[%s1796 + $0x28] sm:$0xff]
    %v1803 = vld [vmem:[%s1796 + $0x30] sm:$0xff]
    %v1804 = vld [vmem:[%s1796 + $0x38] sm:$0xff]
    %v1805 = vpack.c.bf16 %v1791, %v1790
    %1806 = vmatprep.subr.bf16.mxu0 %v802
    %1807 = vmatpush1.bf16.msra.mxu0 %v801
    %1808 = vmatprep.subr.bf16.mxu0 %v806
    %1809 = vmatpush1.bf16.msra.mxu0 %v805
    %1810 = vmatprep.subr.bf16.mxu0 %v810
    %1811 = vmatpush1.bf16.msra.mxu0 %v809
    %1812 = vmatprep.subr.bf16.mxu0 %v814
    %1813 = vmatpush1.bf16.msra.mxu0 %v813
    %1814 = vmatprep.subr.bf16.mxu0 %v818
    %1815 = vmatpush1.bf16.msra.mxu0 %v817
    %1816 = vmatprep.subr.bf16.mxu0 %v822
    %1817 = vmatpush1.bf16.msra.mxu0 %v821
    %1818 = vmatprep.subr.bf16.mxu0 %v826
    %1819 = vmatpush1.bf16.msra.mxu0 %v825
    %1820 = vmatprep.subr.bf16.mxu0 %v830
    %1821 = vmatpush1.bf16.msra.mxu0 %v829
    %1822 = vmatprep.subr.bf16.mxu0 0
    %1823 = vmatpush1.bf16.msra.mxu0 0
    %1824 = vmatprep.subr.bf16.mxu0 0
    %1825 = vmatpush1.bf16.msra.mxu0 0
    %1826 = vmatprep.subr.bf16.mxu0 0
    %1827 = vmatpush1.bf16.msra.mxu0 0
    %1828 = vmatprep.subr.bf16.mxu0 0
    %1829 = vmatpush1.bf16.msra.mxu0 0
    %1830 = vmatprep.subr.bf16.mxu0 0
    %1831 = vmatpush1.bf16.msra.mxu0 0
    %1832 = vmatprep.subr.bf16.mxu0 0
    %1833 = vmatpush1.bf16.msra.mxu0 0
    %1834 = vmatprep.subr.bf16.mxu0 0
    %1835 = vmatpush1.bf16.msra.mxu0 0
    %1836 = vmatprep.subr.bf16.mxu0 0
    %1837 = vmatpush1.bf16.msra.mxu0 0
    %1838 = vmatprep.mubr.bf16.mxu0 0
    %1839 = vmatmul.mubr.bf16.gmra.mrb[0].mxu0 %v1805
    %v1840 = vpop.f32.mrb[0].mxu0
    %v1841 = vadd.f32 0.0, %v1840
    %v1842 = vpop.f32.mrb[0].mxu0
    %v1843 = vadd.f32 0.0, %v1842
    %v1844 = vpop.f32.mrb[0].mxu0
    %v1845 = vadd.f32 0.0, %v1844
    %v1846 = vpop.f32.mrb[0].mxu0
    %v1847 = vadd.f32 0.0, %v1846
    %1848 = vdwg.mxu0
    %1849 = vmatprep.subr.bf16.mxu0 %v804
    %1850 = vmatpush1.bf16.msra.mxu0 %v803
    %1851 = vmatprep.subr.bf16.mxu0 %v808
    %1852 = vmatpush1.bf16.msra.mxu0 %v807
    %1853 = vmatprep.subr.bf16.mxu0 %v812
    %1854 = vmatpush1.bf16.msra.mxu0 %v811
    %1855 = vmatprep.subr.bf16.mxu0 %v816
    %1856 = vmatpush1.bf16.msra.mxu0 %v815
    %1857 = vmatprep.subr.bf16.mxu0 %v820
    %1858 = vmatpush1.bf16.msra.mxu0 %v819
    %1859 = vmatprep.subr.bf16.mxu0 %v824
    %1860 = vmatpush1.bf16.msra.mxu0 %v823
    %1861 = vmatprep.subr.bf16.mxu0 %v828
    %1862 = vmatpush1.bf16.msra.mxu0 %v827
    %1863 = vmatprep.subr.bf16.mxu0 %v832
    %1864 = vmatpush1.bf16.msra.mxu0 %v831
    %1865 = vmatprep.subr.bf16.mxu0 0
    %1866 = vmatpush1.bf16.msra.mxu0 0
    %1867 = vmatprep.subr.bf16.mxu0 0
    %1868 = vmatpush1.bf16.msra.mxu0 0
    %1869 = vmatprep.subr.bf16.mxu0 0
    %1870 = vmatpush1.bf16.msra.mxu0 0
    %1871 = vmatprep.subr.bf16.mxu0 0
    %1872 = vmatpush1.bf16.msra.mxu0 0
    %1873 = vmatprep.subr.bf16.mxu0 0
    %1874 = vmatpush1.bf16.msra.mxu0 0
    %1875 = vmatprep.subr.bf16.mxu0 0
    %1876 = vmatpush1.bf16.msra.mxu0 0
    %1877 = vmatprep.subr.bf16.mxu0 0
    %1878 = vmatpush1.bf16.msra.mxu0 0
    %1879 = vmatprep.subr.bf16.mxu0 0
    %1880 = vmatpush1.bf16.msra.mxu0 0
    %1881 = vmatprep.mubr.bf16.mxu0 0
    %1882 = vmatmul.mubr.bf16.gmra.mrb[0].mxu0 %v1805
    %v1883 = vpop.f32.mrb[0].mxu0
    %v1884 = vadd.f32 0.0, %v1883
    %v1885 = vpop.f32.mrb[0].mxu0
    %v1886 = vadd.f32 0.0, %v1885
    %v1887 = vpop.f32.mrb[0].mxu0
    %v1888 = vadd.f32 0.0, %v1887
    %v1889 = vpop.f32.mrb[0].mxu0
    %v1890 = vadd.f32 0.0, %v1889
    %1891 = vdwg.mxu0
    %v1892 = vadd.f32 %v1797, %v1841
    %v1893 = vadd.f32 %v1798, %v1843
    %v1894 = vadd.f32 %v1799, %v1884
    %v1895 = vadd.f32 %v1800, %v1886
    %v1896 = vadd.f32 %v1801, %v1845
    %v1897 = vadd.f32 %v1802, %v1847
    %v1898 = vadd.f32 %v1803, %v1888
    %v1899 = vadd.f32 %v1804, %v1890
    %v1900 = vsub.f32 0.0, %v1892
    %v1901 = vsub.f32 0.0, %v1896
    %v1902 = vmul.f32 %v1900, 1.442695
    %v1903 = vpow.pop %v1902
    %v1904 = vmul.f32 %v1901, 1.442695
    %v1905 = vpow.pop %v1904
    %v1906 = vadd.f32 %v1903, 1.0
    %v1907 = vadd.f32 %v1905, 1.0
    %v1908 = vrcp.pop %v1906
    %v1909 = vrcp.pop %v1907
    %v1910 = vtanh.pop %v1894
    %v1911 = vtanh.pop %v1898
    %v1912 = vsub.f32 0.0, %v1893
    %v1913 = vsub.f32 0.0, %v1897
    %v1914 = vmul.f32 %v1912, 1.442695
    %v1915 = vpow.pop %v1914
    %v1916 = vmul.f32 %v1913, 1.442695
    %v1917 = vpow.pop %v1916
    %v1918 = vadd.f32 %v1915, 1.0
    %v1919 = vadd.f32 %v1917, 1.0
    %v1920 = vrcp.pop %v1918
    %v1921 = vrcp.pop %v1919
    %v1922 = vmul.f32 %v1920, %v1792
    %v1923 = vmul.f32 %v1921, %v1793
    %v1924 = vmul.f32 %v1908, %v1910
    %v1925 = vmul.f32 %v1909, %v1911
    %v1926 = vadd.f32 %v1922, %v1924
    %v1927 = vadd.f32 %v1923, %v1925
    %v1928 = vsub.f32 0.0, %v1895
    %v1929 = vsub.f32 0.0, %v1899
    %v1930 = vmul.f32 %v1928, 1.442695
    %v1931 = vpow.pop %v1930
    %v1932 = vmul.f32 %v1929, 1.442695
    %v1933 = vpow.pop %v1932
    %v1934 = vadd.f32 %v1931, 1.0
    %v1935 = vadd.f32 %v1933, 1.0
    %v1936 = vrcp.pop %v1934
    %v1937 = vrcp.pop %v1935
    %v1938 = vtanh.pop %v1926
    %v1939 = vtanh.pop %v1927
    %v1940 = vmul.f32 %v1936, %v1938
    %v1941 = vmul.f32 %v1937, %v1939
    %s1942 = sadd.s32 %s688, 6
    %p1943 = scmp.lt.s32.totalorder %s1942, 8
    %s1944 = scalar_select %p1943, 1, 0
    %v1945 = vstv %s1944
    %vm1946 = vcmp.eq.s32.totalorder %v1945, 1
    %v1947 = vsel %vm1946, %v1940, %v1790
    %v1948 = vsel %vm1946, %v1941, %v1791
    %v1949 = vsel %vm1946, %v1926, %v1792
    %v1950 = vsel %vm1946, %v1927, %v1793
    %s1951 = smul.u32 14, 4
    %s1952 = smul.addr %s1951, 8
    %s1953 = scalar_lea.vmem [#allocation4], %s1952
    %v1954 = vld [vmem:[%s1953] sm:$0xff]
    %v1955 = vld [vmem:[%s1953 + $0x8] sm:$0xff]
    %v1956 = vld [vmem:[%s1953 + $0x10] sm:$0xff]
    %v1957 = vld [vmem:[%s1953 + $0x18] sm:$0xff]
    %v1958 = vld [vmem:[%s1953 + $0x20] sm:$0xff]
    %v1959 = vld [vmem:[%s1953 + $0x28] sm:$0xff]
    %v1960 = vld [vmem:[%s1953 + $0x30] sm:$0xff]
    %v1961 = vld [vmem:[%s1953 + $0x38] sm:$0xff]
    %v1962 = vpack.c.bf16 %v1948, %v1947
    %1963 = vmatprep.subr.bf16.mxu0 %v802
    %1964 = vmatpush1.bf16.msra.mxu0 %v801
    %1965 = vmatprep.subr.bf16.mxu0 %v806
    %1966 = vmatpush1.bf16.msra.mxu0 %v805
    %1967 = vmatprep.subr.bf16.mxu0 %v810
    %1968 = vmatpush1.bf16.msra.mxu0 %v809
    %1969 = vmatprep.subr.bf16.mxu0 %v814
    %1970 = vmatpush1.bf16.msra.mxu0 %v813
    %1971 = vmatprep.subr.bf16.mxu0 %v818
    %1972 = vmatpush1.bf16.msra.mxu0 %v817
    %1973 = vmatprep.subr.bf16.mxu0 %v822
    %1974 = vmatpush1.bf16.msra.mxu0 %v821
    %1975 = vmatprep.subr.bf16.mxu0 %v826
    %1976 = vmatpush1.bf16.msra.mxu0 %v825
    %1977 = vmatprep.subr.bf16.mxu0 %v830
    %1978 = vmatpush1.bf16.msra.mxu0 %v829
    %1979 = vmatprep.subr.bf16.mxu0 0
    %1980 = vmatpush1.bf16.msra.mxu0 0
    %1981 = vmatprep.subr.bf16.mxu0 0
    %1982 = vmatpush1.bf16.msra.mxu0 0
    %1983 = vmatprep.subr.bf16.mxu0 0
    %1984 = vmatpush1.bf16.msra.mxu0 0
    %1985 = vmatprep.subr.bf16.mxu0 0
    %1986 = vmatpush1.bf16.msra.mxu0 0
    %1987 = vmatprep.subr.bf16.mxu0 0
    %1988 = vmatpush1.bf16.msra.mxu0 0
    %1989 = vmatprep.subr.bf16.mxu0 0
    %1990 = vmatpush1.bf16.msra.mxu0 0
    %1991 = vmatprep.subr.bf16.mxu0 0
    %1992 = vmatpush1.bf16.msra.mxu0 0
    %1993 = vmatprep.subr.bf16.mxu0 0
    %1994 = vmatpush1.bf16.msra.mxu0 0
    %1995 = vmatprep.mubr.bf16.mxu0 0
    %1996 = vmatmul.mubr.bf16.gmra.mrb[0].mxu0 %v1962
    %v1997 = vpop.f32.mrb[0].mxu0
    %v1998 = vadd.f32 0.0, %v1997
    %v1999 = vpop.f32.mrb[0].mxu0
    %v2000 = vadd.f32 0.0, %v1999
    %v2001 = vpop.f32.mrb[0].mxu0
    %v2002 = vadd.f32 0.0, %v2001
    %v2003 = vpop.f32.mrb[0].mxu0
    %v2004 = vadd.f32 0.0, %v2003
    %2005 = vdwg.mxu0
    %2006 = vmatprep.subr.bf16.mxu0 %v804
    %2007 = vmatpush1.bf16.msra.mxu0 %v803
    %2008 = vmatprep.subr.bf16.mxu0 %v808
    %2009 = vmatpush1.bf16.msra.mxu0 %v807
    %2010 = vmatprep.subr.bf16.mxu0 %v812
    %2011 = vmatpush1.bf16.msra.mxu0 %v811
    %2012 = vmatprep.subr.bf16.mxu0 %v816
    %2013 = vmatpush1.bf16.msra.mxu0 %v815
    %2014 = vmatprep.subr.bf16.mxu0 %v820
    %2015 = vmatpush1.bf16.msra.mxu0 %v819
    %2016 = vmatprep.subr.bf16.mxu0 %v824
    %2017 = vmatpush1.bf16.msra.mxu0 %v823
    %2018 = vmatprep.subr.bf16.mxu0 %v828
    %2019 = vmatpush1.bf16.msra.mxu0 %v827
    %2020 = vmatprep.subr.bf16.mxu0 %v832
    %2021 = vmatpush1.bf16.msra.mxu0 %v831
    %2022 = vmatprep.subr.bf16.mxu0 0
    %2023 = vmatpush1.bf16.msra.mxu0 0
    %2024 = vmatprep.subr.bf16.mxu0 0
    %2025 = vmatpush1.bf16.msra.mxu0 0
    %2026 = vmatprep.subr.bf16.mxu0 0
    %2027 = vmatpush1.bf16.msra.mxu0 0
    %2028 = vmatprep.subr.bf16.mxu0 0
    %2029 = vmatpush1.bf16.msra.mxu0 0
    %2030 = vmatprep.subr.bf16.mxu0 0
    %2031 = vmatpush1.bf16.msra.mxu0 0
    %2032 = vmatprep.subr.bf16.mxu0 0
    %2033 = vmatpush1.bf16.msra.mxu0 0
    %2034 = vmatprep.subr.bf16.mxu0 0
    %2035 = vmatpush1.bf16.msra.mxu0 0
    %2036 = vmatprep.subr.bf16.mxu0 0
    %2037 = vmatpush1.bf16.msra.mxu0 0
    %2038 = vmatprep.mubr.bf16.mxu0 0
    %2039 = vmatmul.mubr.bf16.gmra.mrb[0].mxu0 %v1962
    %v2040 = vpop.f32.mrb[0].mxu0
    %v2041 = vadd.f32 0.0, %v2040
    %v2042 = vpop.f32.mrb[0].mxu0
    %v2043 = vadd.f32 0.0, %v2042
    %v2044 = vpop.f32.mrb[0].mxu0
    %v2045 = vadd.f32 0.0, %v2044
    %v2046 = vpop.f32.mrb[0].mxu0
    %v2047 = vadd.f32 0.0, %v2046
    %2048 = vdwg.mxu0
    %v2049 = vadd.f32 %v1954, %v1998
    %v2050 = vadd.f32 %v1955, %v2000
    %v2051 = vadd.f32 %v1956, %v2041
    %v2052 = vadd.f32 %v1957, %v2043
    %v2053 = vadd.f32 %v1958, %v2002
    %v2054 = vadd.f32 %v1959, %v2004
    %v2055 = vadd.f32 %v1960, %v2045
    %v2056 = vadd.f32 %v1961, %v2047
    %v2057 = vsub.f32 0.0, %v2049
    %v2058 = vsub.f32 0.0, %v2053
    %v2059 = vmul.f32 %v2057, 1.442695
    %v2060 = vpow.pop %v2059
    %v2061 = vmul.f32 %v2058, 1.442695
    %v2062 = vpow.pop %v2061
    %v2063 = vadd.f32 %v2060, 1.0
    %v2064 = vadd.f32 %v2062, 1.0
    %v2065 = vrcp.pop %v2063
    %v2066 = vrcp.pop %v2064
    %v2067 = vtanh.pop %v2051
    %v2068 = vtanh.pop %v2055
    %v2069 = vsub.f32 0.0, %v2050
    %v2070 = vsub.f32 0.0, %v2054
    %v2071 = vmul.f32 %v2069, 1.442695
    %v2072 = vpow.pop %v2071
    %v2073 = vmul.f32 %v2070, 1.442695
    %v2074 = vpow.pop %v2073
    %v2075 = vadd.f32 %v2072, 1.0
    %v2076 = vadd.f32 %v2074, 1.0
    %v2077 = vrcp.pop %v2075
    %v2078 = vrcp.pop %v2076
    %v2079 = vmul.f32 %v2077, %v1949
    %v2080 = vmul.f32 %v2078, %v1950
    %v2081 = vmul.f32 %v2065, %v2067
    %v2082 = vmul.f32 %v2066, %v2068
    %v2083 = vadd.f32 %v2079, %v2081
    %v2084 = vadd.f32 %v2080, %v2082
    %v2085 = vsub.f32 0.0, %v2052
    %v2086 = vsub.f32 0.0, %v2056
    %v2087 = vmul.f32 %v2085, 1.442695
    %v2088 = vpow.pop %v2087
    %v2089 = vmul.f32 %v2086, 1.442695
    %v2090 = vpow.pop %v2089
    %v2091 = vadd.f32 %v2088, 1.0
    %v2092 = vadd.f32 %v2090, 1.0
    %v2093 = vrcp.pop %v2091
    %v2094 = vrcp.pop %v2092
    %v2095 = vtanh.pop %v2083
    %v2096 = vtanh.pop %v2084
    %v2097 = vmul.f32 %v2093, %v2095
    %v2098 = vmul.f32 %v2094, %v2096
    %s2099 = sadd.s32 %s688, 7
    %p2100 = scmp.lt.s32.totalorder %s2099, 8
    %s2101 = scalar_select %p2100, 1, 0
    %v2102 = vstv %s2101
    %vm2103 = vcmp.eq.s32.totalorder %v2102, 1
    %v2104 = vsel %vm2103, %v2097, %v1947
    %v2105 = vsel %vm2103, %v2098, %v1948
    %v2106 = vsel %vm2103, %v2083, %v1949
    %v2107 = vsel %vm2103, %v2084, %v1950
    %2108 = vst [vmem:[#allocation2] sm:$0xff] %v2104
    %2109 = vst [vmem:[#allocation2 + $0x8] sm:$0xff] %v2105
    %2110 = vst [vmem:[#allocation3] sm:$0xff] %v2106
    %2111 = vst [vmem:[#allocation3 + $0x8] sm:$0xff] %v2107
    // Predicated region
    $region46: #{tpu_custom_call.1} parent=1 // pred_check
      %p2112 = pneg %p80
    $region47: #{tpu_custom_call.1} parent=1 // pred_check_branch
      %2114 = sbr.rel (%p2112) target = $region49
    $region48: #{tpu_custom_call.1} parent=1 // pred_region
      %v2115 = vpack.c.bf16 %v2105, %v2104
      %v2116 = vld [vmem:[#allocation11] sm:$0xf]
      %v2117 = vld [vmem:[#allocation11 + $0x4] sm:$0xf]
      %v2118 = vld [vmem:[#allocation11 + $0x8] sm:$0xf]
      %v2119 = vld [vmem:[#allocation11 + $0xc] sm:$0xf]
      %v2120 = vld [vmem:[#allocation11 + $0x10] sm:$0xf]
      %v2121 = vld [vmem:[#allocation11 + $0x14] sm:$0xf]
      %v2122 = vld [vmem:[#allocation11 + $0x18] sm:$0xf]
      %v2123 = vld [vmem:[#allocation11 + $0x1c] sm:$0xf]
      %v2124 = vld [vmem:[#allocation11 + $0x20] sm:$0xf]
      %v2125 = vld [vmem:[#allocation11 + $0x24] sm:$0xf]
      %v2126 = vld [vmem:[#allocation11 + $0x28] sm:$0xf]
      %v2127 = vld [vmem:[#allocation11 + $0x2c] sm:$0xf]
      %v2128 = vld [vmem:[#allocation11 + $0x30] sm:$0xf]
      %v2129 = vld [vmem:[#allocation11 + $0x34] sm:$0xf]
      %v2130 = vld [vmem:[#allocation11 + $0x38] sm:$0xf]
      %v2131 = vld [vmem:[#allocation11 + $0x3c] sm:$0xf]
      %v2132 = vld [vmem:[%s5] sm:$0x1]
      %v2134 = vlaneseq
      %v2135 = vshrl.u32 %v2134, 7
      %v2136 = vsub.s32 0, %v2135
      %v2137 = vrot.slane %v2132, %v2136
      %v2155 = vunpack.c.l.b16 %v2116
      %v2156 = vunpack.c.l.b16 %v2117
      %v2157 = vunpack.c.l.b16 %v2118
      %v2158 = vunpack.c.l.b16 %v2119
      %v2159 = vunpack.c.l.b16 %v2120
      %v2160 = vunpack.c.l.b16 %v2121
      %v2161 = vunpack.c.l.b16 %v2122
      %v2162 = vunpack.c.l.b16 %v2123
      %v2163 = vunpack.c.l.b16 %v2124
      %v2164 = vunpack.c.l.b16 %v2125
      %v2165 = vunpack.c.l.b16 %v2126
      %v2166 = vunpack.c.l.b16 %v2127
      %v2167 = vunpack.c.l.b16 %v2128
      %v2168 = vunpack.c.l.b16 %v2129
      %v2169 = vunpack.c.l.b16 %v2130
      %v2170 = vunpack.c.l.b16 %v2131
      %v2171 = vpack.c.b16 %v2156, %v2155
      %v2172 = vpack.c.b16 %v2158, %v2157
      %v2173 = vpack.c.b16 %v2160, %v2159
      %v2174 = vpack.c.b16 %v2162, %v2161
      %v2175 = vpack.c.b16 %v2164, %v2163
      %v2176 = vpack.c.b16 %v2166, %v2165
      %v2177 = vpack.c.b16 %v2168, %v2167
      %v2178 = vpack.c.b16 %v2170, %v2169
      %2187 = vmatprep.subr.bf16.mxu0 0
      %2188 = vmatpush1.bf16.msra.mxu0 %v2171
      %2189 = vmatprep.subr.bf16.mxu0 0
      %2190 = vmatpush1.bf16.msra.mxu0 %v2172
      %2191 = vmatprep.subr.bf16.mxu0 0
      %2192 = vmatpush1.bf16.msra.mxu0 %v2173
      %2193 = vmatprep.subr.bf16.mxu0 0
      %2194 = vmatpush1.bf16.msra.mxu0 %v2174
      %2195 = vmatprep.subr.bf16.mxu0 0
      %2196 = vmatpush1.bf16.msra.mxu0 %v2175
      %2197 = vmatprep.subr.bf16.mxu0 0
      %2198 = vmatpush1.bf16.msra.mxu0 %v2176
      %2199 = vmatprep.subr.bf16.mxu0 0
      %2200 = vmatpush1.bf16.msra.mxu0 %v2177
      %2201 = vmatprep.subr.bf16.mxu0 0
      %2202 = vmatpush1.bf16.msra.mxu0 %v2178
      %2203 = vmatprep.subr.bf16.mxu0 0
      %2204 = vmatpush1.bf16.msra.mxu0 0
      %2205 = vmatprep.subr.bf16.mxu0 0
      %2206 = vmatpush1.bf16.msra.mxu0 0
      %2207 = vmatprep.subr.bf16.mxu0 0
      %2208 = vmatpush1.bf16.msra.mxu0 0
      %2209 = vmatprep.subr.bf16.mxu0 0
      %2210 = vmatpush1.bf16.msra.mxu0 0
      %2211 = vmatprep.subr.bf16.mxu0 0
      %2212 = vmatpush1.bf16.msra.mxu0 0
      %2213 = vmatprep.subr.bf16.mxu0 0
      %2214 = vmatpush1.bf16.msra.mxu0 0
      %2215 = vmatprep.subr.bf16.mxu0 0
      %2216 = vmatpush1.bf16.msra.mxu0 0
      %2217 = vmatprep.subr.bf16.mxu0 0
      %2218 = vmatpush1.bf16.msra.mxu0 0
      %2219 = vmatprep.mubr.bf16.mxu0 0
      %2220 = vmatmul.mubr.bf16.gmra.mrb[0].mxu0 %v2115
      %v2221 = vpop.f32.mrb[0].mxu0
      %v2222 = vadd.f32 %v2137, %v2221
      %v2223 = vpop.f32.mrb[0].mxu0
      %v2224 = vpop.f32.mrb[0].mxu0
      %v2225 = vadd.f32 %v2137, %v2224
      %v2226 = vpop.f32.mrb[0].mxu0
      %2227 = vdwg.mxu0
      %v2228 = vsub.f32 0.0, %v2222
      %v2229 = vsub.f32 0.0, %v2225
      %v2230 = vmul.f32 %v2228, 1.442695
      %v2231 = vpow.pop %v2230
      %v2232 = vmul.f32 %v2229, 1.442695
      %v2233 = vpow.pop %v2232
      %v2234 = vadd.f32 %v2231, 1.0
      %v2235 = vadd.f32 %v2233, 1.0
      %v2236 = vrcp.pop %v2234
      %v2237 = vmul.f32 1.0, %v2236
      %v2238 = vrcp.pop %v2235
      %v2239 = vmul.f32 1.0, %v2238
      %2240 = vst [vmem:[#allocation13] sm:$0xff] %v2237
      %2241 = vst [vmem:[#allocation13 + $0x8] sm:$0xff] %v2239
    $region49: #{tpu_custom_call.1} parent=1 // pred_fallthru
      _
    // Predicated region
    $region50: #{tpu_custom_call.1} parent=1 // pred_check
      _
    $region51: #{tpu_custom_call.1} parent=1 // pred_check_branch
      %2243 = sbr.rel (0) target = $region53
    $region52: #{tpu_custom_call.1} parent=1 // pred_region
      %s2245 = ssub.s32 256, 256
      %2246 = vsyncadd [#allocation7], %s2245
      %s2247 = sshll.u32 [#allocation13], 4
      %s2248 = int_to_ptr.vmem [resolvable:$true] %s2247
      %2253 = dma.vmem_to_hbm [thread:$0]  %s2248, 256, %s6, [#allocation7], 128, 128, 8
    $region53: #{tpu_custom_call.1} parent=1 // pred_fallthru
      _
    // Predicated region
    $region54: #{tpu_custom_call.1} parent=1 // pred_check
      _
    $region55: #{tpu_custom_call.1} parent=1 // pred_check_branch
      %2255 = sbr.rel (0) target = $region57
    $region56: #{tpu_custom_call.1} parent=1 // pred_region
      %2256 = dma.done [#allocation7], 256
    $region57: #{tpu_custom_call.1} parent=1 // pred_fallthru
      _
    %2257 = vsyncpa [#allocation6], 1
    %2258 = vsyncpa [#allocation9], 1
    %2259 = vsyncpa [#allocation12], 1
    %2260 = vsyncpa [#allocation7], 1

</llo_original>
